<compile_context>
chip_gen: v5e
topology: v5e:2x2
jax: 0.10.0
libtpu: 0.0.40
codegen_flags: <defaults>
</compile_context>

<pallas_src>
import functools
import math

import jax
import jax.numpy as jnp
import numpy as np
from jax.experimental import pallas as pl
from jax.experimental.pallas import tpu as pltpu

INV_SQRT2 = 1.0 / math.sqrt(2.0)
GN_EPS = 1e-5
VMEM_LIMIT_BYTES = 32 * 1024 * 1024  # safe on v5e/v6e/v7x at these tile sizes


# ----------------------------------------------------------------------------
# in-kernel helpers
# ----------------------------------------------------------------------------
def _group_norm(x, gamma, beta, pg, cg, eps, do_swish):
    """GroupNorm (+ optional Swish) on a channel-last (HW, C) f32 tile.

    pg is the (C, C) block-diagonal 0/1 "same group" projector.  Row 0 of the
    stats operand holds per-channel sums, row 1 per-channel sums of squares;
    one small MXU matmul group-reduces and broadcasts both at once.
    Statistics stay in f32 on every generation.
    """
    hw, c = x.shape
    inv_n = 1.0 / (hw * cg)
    csum = jnp.sum(x, axis=0, keepdims=True)                         # (1, C)
    csq = jnp.sum(x * x, axis=0, keepdims=True)                      # (1, C)
    stats = jnp.concatenate([csum, csq], axis=0)                     # (2, C)
    g = jnp.dot(stats, pg, preferred_element_type=jnp.float32) * inv_n
    mean = g[0:1, :]                                                 # (1, C)
    var = g[1:2, :] - mean * mean
    y = (x - mean) * jax.lax.rsqrt(var + eps)
    y = y * gamma + beta
    if do_swish:
        y = y * jax.nn.sigmoid(y)
    return y


def _conv3x3(pad_ref, h, w_ref, W, off, compute_dtype):
    """3x3 'same' conv of a flattened (H*W, Cin) tile as ONE K=9*Cin matmul.

    h is cast to compute_dtype and written into the zero-halo VMEM scratch;
    the nine shifted row-windows (vertical out-of-range taps read the zeroed
    halo, horizontal wrap is removed with an iota column mask) are
    concatenated along lanes into an (HW, 9*Cin) patch and multiplied against
    the (9*Cin, Cout) weight.  Accumulation is f32.
    """
    HW, Cin = h.shape
    pad_rows = pad_ref.shape[0]
    # Zero only the halo rows, every step (cheap; correct for either TC under
    # megacore sharding — no reliance on program_id==0 priming).
    pad_ref[pl.ds(0, off), :] = jnp.zeros((off, Cin), pad_ref.dtype)
    pad_ref[pl.ds(off + HW, pad_rows - off - HW), :] = jnp.zeros(
        (pad_rows - off - HW, Cin), pad_ref.dtype)
    pad_ref[pl.ds(off, HW), :] = h.astype(pad_ref.dtype)

    col = jax.lax.broadcasted_iota(jnp.int32, (HW, 1), 0) % W
    zero = jnp.zeros((), pad_ref.dtype)
    taps = []
    for dh in range(3):
        for dw in range(3):
            start = off + (dh - 1) * W + (dw - 1)                    # static
            win = pad_ref[pl.ds(start, HW), :]
            if dw == 0:                                              # left neighbour
                win = jnp.where(col == 0, zero, win)
            elif dw == 2:                                            # right neighbour
                win = jnp.where(col == W - 1, zero, win)
            taps.append(win)
    patch = jnp.concatenate(taps, axis=-1)                           # (HW, 9*Cin)
    return jnp.dot(patch, w_ref[...].astype(compute_dtype),
                   preferred_element_type=jnp.float32)               # (HW, Cout)


# ----------------------------------------------------------------------------
# fused kernel: one grid step == one batch element, full ResBlock + Attention
# ----------------------------------------------------------------------------
def _resblock_attn_kernel(x_ref, te_ref,
                          g1_ref, b1_ref, pgin_ref, w1_ref, cb1_ref,
                          g2_ref, b2_ref, pgout_ref, w2_ref, cb2_ref,
                          sw_ref, sb_ref,
                          ga_ref, ba_ref, qkvw_ref, qkvb_ref, ow_ref, ob_ref,
                          o_ref, pad1_ref, pad2_ref, *,
                          W, off, cg_in, cg_out, n_head, scale, eps,
                          use_skip_matmul, compute_dtype):
    cd = compute_dtype
    x = x_ref[0].astype(jnp.float32)                                 # (HW, Cin)

    # ---- ResBlock part 1: GN1 + Swish + conv1(3x3) + bias + time-emb add ----
    h = _group_norm(x, g1_ref[...], b1_ref[...], pgin_ref[...], cg_in, eps, True)
    h1 = (_conv3x3(pad1_ref, h, w1_ref, W, off, cd)
          + cb1_ref[...] + te_ref[0].astype(jnp.float32))            # (HW, Cout)

    # ---- ResBlock part 2: GN2 + Swish + (dropout=id) + conv2 + bias + skip ----
    h2 = _group_norm(h1, g2_ref[...], b2_ref[...], pgout_ref[...], cg_out, eps, True)
    acc2 = _conv3x3(pad2_ref, h2, w2_ref, W, off, cd)                # (HW, Cout)
    if use_skip_matmul:
        skip = jnp.dot(x.astype(cd), sw_ref[...].astype(cd),
                       preferred_element_type=jnp.float32) + sb_ref[...]
    else:
        skip = x                                                     # nn.Identity
    res = (acc2 + cb2_ref[...] + skip) * INV_SQRT2                   # (HW, Cout) f32

    # ---- SelfAttention: GN + fused QKV + per-head softmax + fused out-proj ----
    C = ow_ref.shape[0]
    D = C // n_head
    n = _group_norm(res, ga_ref[...], ba_ref[...], pgout_ref[...], cg_out, eps, False)
    qkv = jnp.dot(n.astype(cd), qkvw_ref[...].astype(cd),
                  preferred_element_type=jnp.float32) + qkvb_ref[...]  # (HW, 3C)
    heads = []
    for hd in range(n_head):
        base = hd * 3 * D                                            # torch channel order
        q = qkv[:, base:base + D]
        k = qkv[:, base + D:base + 2 * D]
        v = qkv[:, base + 2 * D:base + 3 * D]
        qs = (q * scale).astype(cd)                                  # fold 1/sqrt(C) into q
        s = jax.lax.dot_general(qs, k.astype(cd), (((1,), (1,)), ((), ())),
                                preferred_element_type=jnp.float32)  # (HW, HW)
        m = jnp.max(s, axis=-1, keepdims=True)
        p = jnp.exp(s - m)
        p = p * pl.reciprocal(jnp.sum(p, axis=-1, keepdims=True), approx=True)
        heads.append(jnp.dot(p.astype(cd), v.astype(cd),
                             preferred_element_type=jnp.float32))    # (HW, D)
    o_cat = jnp.concatenate(heads, axis=-1).astype(cd)               # (HW, C) head-major
    proj = jnp.dot(o_cat, ow_ref[...].astype(cd),
                   preferred_element_type=jnp.float32)               # (HW, C)
    o_ref[0] = ((proj + ob_ref[...] + res) * INV_SQRT2).astype(o_ref.dtype)


# ----------------------------------------------------------------------------
# pallas_call wrapper
# ----------------------------------------------------------------------------
def _group_projector(C, groups):
    gid = np.arange(C) // (C // groups)
    return jnp.asarray((gid[:, None] == gid[None, :]).astype(np.float32))  # (C, C)


def fused_res_block_with_attention(x_flat, temb, params, *, H, W, n_head,
                                   groups, compute_dtype):
    B, HW, Cin = x_flat.shape
    Cout = params["conv1_b"].shape[0]
    C = Cout
    off = ((W + 1 + 7) // 8) * 8            # sublane-aligned top halo (>= W+1)
    bot = ((W + 1 + 7) // 8) * 8
    pad_rows = off + HW + bot
    cg_in, cg_out = Cin // groups, Cout // groups
    pg_in = _group_projector(Cin, groups)
    pg_out = _group_projector(Cout, groups)
    use_skip_matmul = (Cin != Cout)

    # weights pre-cast to the matmul operand dtype (halves their DMA bytes)
    w1 = params["conv1_w"].reshape(9 * Cin, Cout).astype(compute_dtype)
    w2 = params["conv2_w"].reshape(9 * Cout, Cout).astype(compute_dtype)
    sw = params["skip_w"].astype(compute_dtype)
    qkvw = params["qkv_w"].astype(compute_dtype)
    ow = params["out_w"].astype(compute_dtype)

    kern = functools.partial(
        _resblock_attn_kernel, W=W, off=off, cg_in=cg_in, cg_out=cg_out,
        n_head=n_head, scale=1.0 / math.sqrt(C), eps=GN_EPS,
        use_skip_matmul=use_skip_matmul, compute_dtype=compute_dtype)

    const = lambda b: (0, 0)
    return pl.pallas_call(
        kern,
        out_shape=jax.ShapeDtypeStruct((B, HW, Cout), x_flat.dtype),
        grid=(B,),
        in_specs=[
            pl.BlockSpec((1, HW, Cin), lambda b: (b, 0, 0)),     # x
            pl.BlockSpec((1, 1, Cout), lambda b: (b, 0, 0)),     # time embedding
            pl.BlockSpec((1, Cin), const),                       # gn1 gamma
            pl.BlockSpec((1, Cin), const),                       # gn1 beta
            pl.BlockSpec((Cin, Cin), const),                     # pg_in
            pl.BlockSpec((9 * Cin, Cout), const),                # conv1 w
            pl.BlockSpec((1, Cout), const),                      # conv1 b
            pl.BlockSpec((1, Cout), const),                      # gn2 gamma
            pl.BlockSpec((1, Cout), const),                      # gn2 beta
            pl.BlockSpec((Cout, Cout), const),                   # pg_out
            pl.BlockSpec((9 * Cout, Cout), const),               # conv2 w
            pl.BlockSpec((1, Cout), const),                      # conv2 b
            pl.BlockSpec((Cin, Cout), const),                    # skip w
            pl.BlockSpec((1, Cout), const),                      # skip b
            pl.BlockSpec((1, Cout), const),                      # attn gn gamma
            pl.BlockSpec((1, Cout), const),                      # attn gn beta
            pl.BlockSpec((Cout, 3 * Cout), const),               # qkv w
            pl.BlockSpec((1, 3 * Cout), const),                  # qkv b
            pl.BlockSpec((Cout, Cout), const),                   # out w
            pl.BlockSpec((1, Cout), const),                      # out b
        ],
        out_specs=pl.BlockSpec((1, HW, Cout), lambda b: (b, 0, 0)),
        scratch_shapes=[pltpu.VMEM((pad_rows, Cin), compute_dtype),
                        pltpu.VMEM((pad_rows, Cout), compute_dtype)],
        compiler_params=pltpu.CompilerParams(
            dimension_semantics=("parallel",),
            vmem_limit_bytes=VMEM_LIMIT_BYTES),
    )(x_flat, temb,
      params["gn1_gamma"].reshape(1, Cin), params["gn1_beta"].reshape(1, Cin),
      pg_in, w1, params["conv1_b"].reshape(1, Cout),
      params["gn2_gamma"].reshape(1, Cout), params["gn2_beta"].reshape(1, Cout),
      pg_out, w2, params["conv2_b"].reshape(1, Cout),
      sw, params["skip_b"].reshape(1, Cout),
      params["attn_gn_gamma"].reshape(1, Cout), params["attn_gn_beta"].reshape(1, Cout),
      qkvw, params["qkv_b"].reshape(1, 3 * Cout),
      ow, params["out_b"].reshape(1, Cout))


# ----------------------------------------------------------------------------
# JAX glue
# ----------------------------------------------------------------------------
def _swish(x):
    return x * jax.nn.sigmoid(x)


def res_block_with_attention(params, x_nchw, time, *, n_head, groups=32,
                             compute_dtype=jnp.bfloat16):
    # compute_dtype controls matmul operands only; accumulation and GN/softmax
    # statistics stay f32 (pass jnp.float32 for bit-conservative runs).
    B, Cin, H, W = x_nchw.shape
    Cout = params["conv1_b"].shape[0]
    S = H * W

    # single boundary transpose to channel-last [B, H*W, C]
    x_flat = jnp.transpose(x_nchw, (0, 2, 3, 1)).reshape(B, S, Cin)

    # time MLP (Swish + Linear) is a tiny [B, time_dim] op -> JAX glue; only
    # the big broadcast-add over the activation is fused into the kernel.
    temb = (jnp.dot(_swish(time), params["time_w"]) + params["time_b"]).reshape(B, 1, Cout)

    out = fused_res_block_with_attention(
        x_flat, temb, params, H=H, W=W, n_head=n_head, groups=groups,
        compute_dtype=compute_dtype)

    return jnp.transpose(out.reshape(B, H, W, Cout), (0, 3, 1, 2))   # back to NCHW


# ----------------------------------------------------------------------------
# Parameters (deterministic, mimics variance_scaling_init_ fan_avg/uniform)
# ----------------------------------------------------------------------------
def vs_uniform(key, shape, fan_in, fan_out, scale=1.0):
    s = scale / ((fan_in + fan_out) / 2.0)
    bound = math.sqrt(3.0 * s)
    return jax.random.uniform(key, shape, jnp.float32, -bound, bound)


def make_params(key, in_channel, out_channel, time_dim, n_head):
    ks = jax.random.split(key, 6)
    Cin, Cout, C = in_channel, out_channel, out_channel
    p = {}
    # ResBlock
    p["gn1_gamma"] = jnp.ones((Cin,), jnp.float32)
    p["gn1_beta"] = jnp.zeros((Cin,), jnp.float32)
    p["conv1_w"] = vs_uniform(ks[0], (3, 3, Cin, Cout), Cin * 9, Cout * 9)
    p["conv1_b"] = jnp.zeros((Cout,), jnp.float32)
    p["time_w"] = vs_uniform(ks[1], (time_dim, Cout), time_dim, Cout, scale=1.0)
    p["time_b"] = jnp.zeros((Cout,), jnp.float32)
    p["gn2_gamma"] = jnp.ones((Cout,), jnp.float32)
    p["gn2_beta"] = jnp.zeros((Cout,), jnp.float32)
    p["conv2_w"] = vs_uniform(ks[2], (3, 3, Cout, Cout), Cout * 9, Cout * 9, scale=1e-10)
    p["conv2_b"] = jnp.zeros((Cout,), jnp.float32)
    if Cin != Cout:
        p["skip_w"] = vs_uniform(ks[3], (Cin, Cout), Cin, Cout)      # 1x1 skip conv
    else:
        p["skip_w"] = jnp.eye(Cout, dtype=jnp.float32)               # nn.Identity skip
    p["skip_b"] = jnp.zeros((Cout,), jnp.float32)
    # SelfAttention (qkv columns in torch (head, q/k/v, dim) order)
    p["attn_gn_gamma"] = jnp.ones((C,), jnp.float32)
    p["attn_gn_beta"] = jnp.zeros((C,), jnp.float32)
    p["qkv_w"] = vs_uniform(ks[4], (C, 3 * C), C, 3 * C)
    p["qkv_b"] = jnp.zeros((3 * C,), jnp.float32)
    p["out_w"] = vs_uniform(ks[5], (C, C), C, C, scale=1e-10)
    p["out_b"] = jnp.zeros((C,), jnp.float32)
    return p


# ----------------------------------------------------------------------------
if __name__ == "__main__":
    B, Cin, Cout, H, W = 2, 32, 64, 8, 8
    time_dim, n_head = 16, 2

    key = jax.random.PRNGKey(0)
    kx, kt, kp = jax.random.split(key, 3)
    x = jax.random.normal(kx, (B, Cin, H, W), jnp.float32)           # NCHW, like PyTorch
    time = jax.random.normal(kt, (B, time_dim), jnp.float32)

    params = make_params(kp, Cin, Cout, time_dim, n_head)

    fwd = jax.jit(functools.partial(res_block_with_attention, n_head=n_head))
    out = jax.block_until_ready(fwd(params, x, time))

    assert out.shape == (B, Cout, H, W)
    assert bool(jnp.all(jnp.isfinite(out)))
    print("KERNEL_OK")
</pallas_src>

<mosaic_0001>
module attributes {stable_mosaic.version = 11 : i64} {
  func.func @_resblock_attn_kernel(%arg0: i32, %arg1: memref<1x64x32xf32, #tpu.memory_space<vmem>>, %arg2: memref<1x1x64xf32, #tpu.memory_space<vmem>>, %arg3: memref<1x32xf32, #tpu.memory_space<vmem>>, %arg4: memref<1x32xf32, #tpu.memory_space<vmem>>, %arg5: memref<32x32xf32, #tpu.memory_space<vmem>>, %arg6: memref<288x64xbf16, #tpu.memory_space<vmem>>, %arg7: memref<1x64xf32, #tpu.memory_space<vmem>>, %arg8: memref<1x64xf32, #tpu.memory_space<vmem>>, %arg9: memref<1x64xf32, #tpu.memory_space<vmem>>, %arg10: memref<64x64xf32, #tpu.memory_space<vmem>>, %arg11: memref<576x64xbf16, #tpu.memory_space<vmem>>, %arg12: memref<1x64xf32, #tpu.memory_space<vmem>>, %arg13: memref<32x64xbf16, #tpu.memory_space<vmem>>, %arg14: memref<1x64xf32, #tpu.memory_space<vmem>>, %arg15: memref<1x64xf32, #tpu.memory_space<vmem>>, %arg16: memref<1x64xf32, #tpu.memory_space<vmem>>, %arg17: memref<64x192xbf16, #tpu.memory_space<vmem>>, %arg18: memref<1x192xf32, #tpu.memory_space<vmem>>, %arg19: memref<64x64xbf16, #tpu.memory_space<vmem>>, %arg20: memref<1x64xf32, #tpu.memory_space<vmem>>, %arg21: memref<1x64x64xf32, #tpu.memory_space<vmem>>, %arg22: memref<96x32xbf16, #tpu.memory_space<vmem>>, %arg23: memref<96x64xbf16, #tpu.memory_space<vmem>>) attributes {dimension_semantics = [#tpu.dimension_semantics<parallel>], iteration_bounds = array<i64: 2>, scalar_prefetch = 0 : i64, scratch_operands = 2 : i64, tpu.core_type = #tpu.core_type<tc>, window_params = [{transform_indices = @transform_0, window_bounds = array<i64: 1, 64, 32>}, {transform_indices = @transform_1, window_bounds = array<i64: 1, 1, 64>}, {pipeline_mode = #tpu.pipeline_mode<synchronous>, transform_indices = @transform_2, window_bounds = array<i64: 1, 32>}, {pipeline_mode = #tpu.pipeline_mode<synchronous>, transform_indices = @transform_3, window_bounds = array<i64: 1, 32>}, {pipeline_mode = #tpu.pipeline_mode<synchronous>, transform_indices = @transform_4, window_bounds = array<i64: 32, 32>}, {pipeline_mode = #tpu.pipeline_mode<synchronous>, transform_indices = @transform_5, window_bounds = array<i64: 288, 64>}, {pipeline_mode = #tpu.pipeline_mode<synchronous>, transform_indices = @transform_6, window_bounds = array<i64: 1, 64>}, {pipeline_mode = #tpu.pipeline_mode<synchronous>, transform_indices = @transform_7, window_bounds = array<i64: 1, 64>}, {pipeline_mode = #tpu.pipeline_mode<synchronous>, transform_indices = @transform_8, window_bounds = array<i64: 1, 64>}, {pipeline_mode = #tpu.pipeline_mode<synchronous>, transform_indices = @transform_9, window_bounds = array<i64: 64, 64>}, {pipeline_mode = #tpu.pipeline_mode<synchronous>, transform_indices = @transform_10, window_bounds = array<i64: 576, 64>}, {pipeline_mode = #tpu.pipeline_mode<synchronous>, transform_indices = @transform_11, window_bounds = array<i64: 1, 64>}, {pipeline_mode = #tpu.pipeline_mode<synchronous>, transform_indices = @transform_12, window_bounds = array<i64: 32, 64>}, {pipeline_mode = #tpu.pipeline_mode<synchronous>, transform_indices = @transform_13, window_bounds = array<i64: 1, 64>}, {pipeline_mode = #tpu.pipeline_mode<synchronous>, transform_indices = @transform_14, window_bounds = array<i64: 1, 64>}, {pipeline_mode = #tpu.pipeline_mode<synchronous>, transform_indices = @transform_15, window_bounds = array<i64: 1, 64>}, {pipeline_mode = #tpu.pipeline_mode<synchronous>, transform_indices = @transform_16, window_bounds = array<i64: 64, 192>}, {pipeline_mode = #tpu.pipeline_mode<synchronous>, transform_indices = @transform_17, window_bounds = array<i64: 1, 192>}, {pipeline_mode = #tpu.pipeline_mode<synchronous>, transform_indices = @transform_18, window_bounds = array<i64: 64, 64>}, {pipeline_mode = #tpu.pipeline_mode<synchronous>, transform_indices = @transform_19, window_bounds = array<i64: 1, 64>}, {transform_indices = @transform_20, window_bounds = array<i64: 1, 64, 64>}]} {
    %c0 = arith.constant 0 : index
    %c0_0 = arith.constant 0 : index
    %c0_1 = arith.constant 0 : index
    %0 = vector.load %arg1[%c0, %c0_0, %c0_1] : memref<1x64x32xf32, #tpu.memory_space<vmem>>, vector<1x64x32xf32>
    %1 = vector.shape_cast %0 : vector<1x64x32xf32> to vector<64x32xf32>
    %c0_2 = arith.constant 0 : index
    %c0_3 = arith.constant 0 : index
    %2 = vector.load %arg3[%c0_2, %c0_3] : memref<1x32xf32, #tpu.memory_space<vmem>>, vector<1x32xf32>
    %c0_4 = arith.constant 0 : index
    %c0_5 = arith.constant 0 : index
    %3 = vector.load %arg4[%c0_4, %c0_5] : memref<1x32xf32, #tpu.memory_space<vmem>>, vector<1x32xf32>
    %c0_6 = arith.constant 0 : index
    %c0_7 = arith.constant 0 : index
    %4 = vector.load %arg5[%c0_6, %c0_7] : memref<32x32xf32, #tpu.memory_space<vmem>>, vector<32x32xf32>
    %cst = arith.constant dense<0.000000e+00> : vector<32xf32>
    %5 = vector.multi_reduction <add>, %1, %cst [0] : vector<64x32xf32> to vector<32xf32>
    %6 = vector.shape_cast %5 : vector<32xf32> to vector<1x32xf32>
    %7 = arith.mulf %1, %1 : vector<64x32xf32>
    %cst_8 = arith.constant dense<0.000000e+00> : vector<32xf32>
    %8 = vector.multi_reduction <add>, %7, %cst_8 [0] : vector<64x32xf32> to vector<32xf32>
    %9 = vector.shape_cast %8 : vector<32xf32> to vector<1x32xf32>
    %10 = tpu.concatenate %6, %9 in 0 : vector<1x32xf32>, vector<1x32xf32> -> vector<2x32xf32>
    %cst_9 = arith.constant dense<0.000000e+00> : vector<2x32xf32>
    %11 = tpu.matmul %10, %4, %cst_9 {dimension_numbers = #tpu.dot_dimension_numbers<[1], [0], [0], [1], [0, 0, 1, 1], [], []>} : vector<2x32xf32>, vector<32x32xf32>, vector<2x32xf32> -> vector<2x32xf32>
    %cst_10 = arith.constant 1.562500e-02 : f32
    %12 = vector.broadcast %cst_10 : f32 to vector<2x32xf32>
    %13 = arith.mulf %11, %12 : vector<2x32xf32>
    %14 = vector.extract_strided_slice %13 {offsets = [0, 0], sizes = [1, 32], strides = [1, 1]} : vector<2x32xf32> to vector<1x32xf32>
    %15 = vector.extract_strided_slice %13 {offsets = [1, 0], sizes = [1, 32], strides = [1, 1]} : vector<2x32xf32> to vector<1x32xf32>
    %16 = arith.mulf %14, %14 : vector<1x32xf32>
    %17 = arith.subf %15, %16 : vector<1x32xf32>
    %18 = vector.broadcast %14 : vector<1x32xf32> to vector<64x32xf32>
    %19 = arith.subf %1, %18 : vector<64x32xf32>
    %cst_11 = arith.constant 9.99999974E-6 : f32
    %20 = vector.broadcast %cst_11 : f32 to vector<1x32xf32>
    %21 = arith.addf %17, %20 : vector<1x32xf32>
    %22 = math.rsqrt %21 : vector<1x32xf32>
    %23 = vector.broadcast %22 : vector<1x32xf32> to vector<64x32xf32>
    %24 = arith.mulf %19, %23 : vector<64x32xf32>
    %25 = vector.broadcast %2 : vector<1x32xf32> to vector<64x32xf32>
    %26 = arith.mulf %24, %25 : vector<64x32xf32>
    %27 = vector.broadcast %3 : vector<1x32xf32> to vector<64x32xf32>
    %28 = arith.addf %26, %27 : vector<64x32xf32>
    %29 = arith.negf %28 : vector<64x32xf32>
    %30 = math.exp %29 : vector<64x32xf32>
    %cst_12 = arith.constant 1.000000e+00 : f32
    %31 = vector.broadcast %cst_12 : f32 to vector<64x32xf32>
    %32 = arith.addf %31, %30 : vector<64x32xf32>
    %33 = arith.divf %31, %32 : vector<64x32xf32>
    %34 = arith.mulf %28, %33 : vector<64x32xf32>
    %cst_13 = arith.constant 0.000000e+00 : bf16
    %35 = vector.broadcast %cst_13 : bf16 to vector<16x32xbf16>
    %c0_14 = arith.constant 0 : index
    %c0_15 = arith.constant 0 : index
    %36 = vector.load %arg22[%c0_14, %c0_15] : memref<96x32xbf16, #tpu.memory_space<vmem>>, vector<16x32xbf16>
    tpu.vector_store %arg22[%c0_14, %c0_15], %35 {strides = array<i32>} : memref<96x32xbf16, #tpu.memory_space<vmem>>, vector<16x32xbf16>,
    %cst_16 = arith.constant 0.000000e+00 : bf16
    %37 = vector.broadcast %cst_16 : bf16 to vector<16x32xbf16>
    %c80 = arith.constant 80 : index
    %c0_17 = arith.constant 0 : index
    %38 = vector.load %arg22[%c80, %c0_17] : memref<96x32xbf16, #tpu.memory_space<vmem>>, vector<16x32xbf16>
    tpu.vector_store %arg22[%c80, %c0_17], %37 {strides = array<i32>} : memref<96x32xbf16, #tpu.memory_space<vmem>>, vector<16x32xbf16>,
    %39 = arith.truncf %34 : vector<64x32xf32> to vector<64x32xbf16>
    %c16 = arith.constant 16 : index
    %c0_18 = arith.constant 0 : index
    %40 = vector.load %arg22[%c16, %c0_18] : memref<96x32xbf16, #tpu.memory_space<vmem>>, vector<64x32xbf16>
    tpu.vector_store %arg22[%c16, %c0_18], %39 {strides = array<i32>} : memref<96x32xbf16, #tpu.memory_space<vmem>>, vector<64x32xbf16>,
    %41 = tpu.iota {dimensions = array<i32: 0>} : vector<64x1xi32>
    %c8_i32 = arith.constant 8 : i32
    %c0_i32 = arith.constant 0 : i32
    %42 = arith.cmpi eq, %c8_i32, %c0_i32 : i32
    %c1_i32 = arith.constant 1 : i32
    %43 = arith.select %42, %c1_i32, %c8_i32 : i32
    %44 = vector.broadcast %43 : i32 to vector<64x1xi32>
    %45 = arith.remsi %41, %44 : vector<64x1xi32>
    %c0_i32_19 = arith.constant 0 : i32
    %46 = vector.broadcast %c0_i32_19 : i32 to vector<64x1xi32>
    %47 = arith.cmpi ne, %45, %46 : vector<64x1xi32>
    %c0_i32_20 = arith.constant 0 : i32
    %48 = vector.broadcast %c0_i32_20 : i32 to vector<64x1xi32>
    %49 = arith.cmpi slt, %45, %48 : vector<64x1xi32>
    %c0_i32_21 = arith.constant 0 : i32
    %50 = arith.cmpi slt, %43, %c0_i32_21 : i32
    %51 = vector.broadcast %50 : i1 to vector<64x1xi1>
    %52 = vector.broadcast %51 : vector<64x1xi1> to vector<64x1xi1>
    %53 = arith.xori %49, %52 : vector<64x1xi1>
    %54 = arith.andi %53, %47 : vector<64x1xi1>
    %55 = vector.broadcast %43 : i32 to vector<64x1xi32>
    %56 = arith.addi %45, %55 : vector<64x1xi32>
    %57 = arith.select %54, %56, %45 : vector<64x1xi1>, vector<64x1xi32>
    %c7 = arith.constant 7 : index
    %c0_22 = arith.constant 0 : index
    %58 = vector.load %arg22[%c7, %c0_22] : memref<96x32xbf16, #tpu.memory_space<vmem>>, vector<64x32xbf16>
    %c0_i32_23 = arith.constant 0 : i32
    %59 = vector.broadcast %c0_i32_23 : i32 to vector<64x1xi32>
    %60 = arith.cmpi eq, %57, %59 : vector<64x1xi32>
    %cst_24 = arith.constant 0.000000e+00 : bf16
    %61 = vector.shape_cast %60 : vector<64x1xi1> to vector<64x1xi1>
    %62 = vector.broadcast %61 : vector<64x1xi1> to vector<64x32xi1>
    %63 = vector.broadcast %cst_24 : bf16 to vector<64x32xbf16>
    %64 = arith.select %62, %63, %58 : vector<64x32xi1>, vector<64x32xbf16>
    %c8 = arith.constant 8 : index
    %c0_25 = arith.constant 0 : index
    %65 = vector.load %arg22[%c8, %c0_25] : memref<96x32xbf16, #tpu.memory_space<vmem>>, vector<64x32xbf16>
    %c9 = arith.constant 9 : index
    %c0_26 = arith.constant 0 : index
    %66 = vector.load %arg22[%c9, %c0_26] : memref<96x32xbf16, #tpu.memory_space<vmem>>, vector<64x32xbf16>
    %c7_i32 = arith.constant 7 : i32
    %67 = vector.broadcast %c7_i32 : i32 to vector<64x1xi32>
    %68 = arith.cmpi eq, %57, %67 : vector<64x1xi32>
    %cst_27 = arith.constant 0.000000e+00 : bf16
    %69 = vector.shape_cast %68 : vector<64x1xi1> to vector<64x1xi1>
    %70 = vector.broadcast %69 : vector<64x1xi1> to vector<64x32xi1>
    %71 = vector.broadcast %cst_27 : bf16 to vector<64x32xbf16>
    %72 = arith.select %70, %71, %66 : vector<64x32xi1>, vector<64x32xbf16>
    %c15 = arith.constant 15 : index
    %c0_28 = arith.constant 0 : index
    %73 = vector.load %arg22[%c15, %c0_28] : memref<96x32xbf16, #tpu.memory_space<vmem>>, vector<64x32xbf16>
    %c0_i32_29 = arith.constant 0 : i32
    %74 = vector.broadcast %c0_i32_29 : i32 to vector<64x1xi32>
    %75 = arith.cmpi eq, %57, %74 : vector<64x1xi32>
    %cst_30 = arith.constant 0.000000e+00 : bf16
    %76 = vector.shape_cast %75 : vector<64x1xi1> to vector<64x1xi1>
    %77 = vector.broadcast %76 : vector<64x1xi1> to vector<64x32xi1>
    %78 = vector.broadcast %cst_30 : bf16 to vector<64x32xbf16>
    %79 = arith.select %77, %78, %73 : vector<64x32xi1>, vector<64x32xbf16>
    %c16_31 = arith.constant 16 : index
    %c0_32 = arith.constant 0 : index
    %80 = vector.load %arg22[%c16_31, %c0_32] : memref<96x32xbf16, #tpu.memory_space<vmem>>, vector<64x32xbf16>
    %c17 = arith.constant 17 : index
    %c0_33 = arith.constant 0 : index
    %81 = vector.load %arg22[%c17, %c0_33] : memref<96x32xbf16, #tpu.memory_space<vmem>>, vector<64x32xbf16>
    %c7_i32_34 = arith.constant 7 : i32
    %82 = vector.broadcast %c7_i32_34 : i32 to vector<64x1xi32>
    %83 = arith.cmpi eq, %57, %82 : vector<64x1xi32>
    %cst_35 = arith.constant 0.000000e+00 : bf16
    %84 = vector.shape_cast %83 : vector<64x1xi1> to vector<64x1xi1>
    %85 = vector.broadcast %84 : vector<64x1xi1> to vector<64x32xi1>
    %86 = vector.broadcast %cst_35 : bf16 to vector<64x32xbf16>
    %87 = arith.select %85, %86, %81 : vector<64x32xi1>, vector<64x32xbf16>
    %c23 = arith.constant 23 : index
    %c0_36 = arith.constant 0 : index
    %88 = vector.load %arg22[%c23, %c0_36] : memref<96x32xbf16, #tpu.memory_space<vmem>>, vector<64x32xbf16>
    %c0_i32_37 = arith.constant 0 : i32
    %89 = vector.broadcast %c0_i32_37 : i32 to vector<64x1xi32>
    %90 = arith.cmpi eq, %57, %89 : vector<64x1xi32>
    %cst_38 = arith.constant 0.000000e+00 : bf16
    %91 = vector.shape_cast %90 : vector<64x1xi1> to vector<64x1xi1>
    %92 = vector.broadcast %91 : vector<64x1xi1> to vector<64x32xi1>
    %93 = vector.broadcast %cst_38 : bf16 to vector<64x32xbf16>
    %94 = arith.select %92, %93, %88 : vector<64x32xi1>, vector<64x32xbf16>
    %c24 = arith.constant 24 : index
    %c0_39 = arith.constant 0 : index
    %95 = vector.load %arg22[%c24, %c0_39] : memref<96x32xbf16, #tpu.memory_space<vmem>>, vector<64x32xbf16>
    %c25 = arith.constant 25 : index
    %c0_40 = arith.constant 0 : index
    %96 = vector.load %arg22[%c25, %c0_40] : memref<96x32xbf16, #tpu.memory_space<vmem>>, vector<64x32xbf16>
    %c7_i32_41 = arith.constant 7 : i32
    %97 = vector.broadcast %c7_i32_41 : i32 to vector<64x1xi32>
    %98 = arith.cmpi eq, %57, %97 : vector<64x1xi32>
    %cst_42 = arith.constant 0.000000e+00 : bf16
    %99 = vector.shape_cast %98 : vector<64x1xi1> to vector<64x1xi1>
    %100 = vector.broadcast %99 : vector<64x1xi1> to vector<64x32xi1>
    %101 = vector.broadcast %cst_42 : bf16 to vector<64x32xbf16>
    %102 = arith.select %100, %101, %96 : vector<64x32xi1>, vector<64x32xbf16>
    %103 = tpu.concatenate %64, %65, %72, %79, %80, %87, %94, %95, %102 in 1 : vector<64x32xbf16>, vector<64x32xbf16>, vector<64x32xbf16>, vector<64x32xbf16>, vector<64x32xbf16>, vector<64x32xbf16>, vector<64x32xbf16>, vector<64x32xbf16>, vector<64x32xbf16> -> vector<64x288xbf16>
    %c0_43 = arith.constant 0 : index
    %c0_44 = arith.constant 0 : index
    %104 = vector.load %arg6[%c0_43, %c0_44] : memref<288x64xbf16, #tpu.memory_space<vmem>>, vector<288x64xbf16>
    %cst_45 = arith.constant dense<0.000000e+00> : vector<64x64xf32>
    %105 = tpu.matmul %103, %104, %cst_45 {dimension_numbers = #tpu.dot_dimension_numbers<[1], [0], [0], [1], [0, 0, 1, 1], [], []>} : vector<64x288xbf16>, vector<288x64xbf16>, vector<64x64xf32> -> vector<64x64xf32>
    %c0_46 = arith.constant 0 : index
    %c0_47 = arith.constant 0 : index
    %106 = vector.load %arg7[%c0_46, %c0_47] : memref<1x64xf32, #tpu.memory_space<vmem>>, vector<1x64xf32>
    %107 = vector.broadcast %106 : vector<1x64xf32> to vector<64x64xf32>
    %108 = arith.addf %105, %107 : vector<64x64xf32>
    %c0_48 = arith.constant 0 : index
    %c0_49 = arith.constant 0 : index
    %c0_50 = arith.constant 0 : index
    %109 = vector.load %arg2[%c0_48, %c0_49, %c0_50] : memref<1x1x64xf32, #tpu.memory_space<vmem>>, vector<1x1x64xf32>
    %110 = vector.shape_cast %109 : vector<1x1x64xf32> to vector<1x64xf32>
    %111 = vector.broadcast %110 : vector<1x64xf32> to vector<64x64xf32>
    %112 = arith.addf %108, %111 : vector<64x64xf32>
    %c0_51 = arith.constant 0 : index
    %c0_52 = arith.constant 0 : index
    %113 = vector.load %arg8[%c0_51, %c0_52] : memref<1x64xf32, #tpu.memory_space<vmem>>, vector<1x64xf32>
    %c0_53 = arith.constant 0 : index
    %c0_54 = arith.constant 0 : index
    %114 = vector.load %arg9[%c0_53, %c0_54] : memref<1x64xf32, #tpu.memory_space<vmem>>, vector<1x64xf32>
    %c0_55 = arith.constant 0 : index
    %c0_56 = arith.constant 0 : index
    %115 = vector.load %arg10[%c0_55, %c0_56] : memref<64x64xf32, #tpu.memory_space<vmem>>, vector<64x64xf32>
    %cst_57 = arith.constant dense<0.000000e+00> : vector<64xf32>
    %116 = vector.multi_reduction <add>, %112, %cst_57 [0] : vector<64x64xf32> to vector<64xf32>
    %117 = vector.shape_cast %116 : vector<64xf32> to vector<1x64xf32>
    %118 = arith.mulf %112, %112 : vector<64x64xf32>
    %cst_58 = arith.constant dense<0.000000e+00> : vector<64xf32>
    %119 = vector.multi_reduction <add>, %118, %cst_58 [0] : vector<64x64xf32> to vector<64xf32>
    %120 = vector.shape_cast %119 : vector<64xf32> to vector<1x64xf32>
    %121 = tpu.concatenate %117, %120 in 0 : vector<1x64xf32>, vector<1x64xf32> -> vector<2x64xf32>
    %cst_59 = arith.constant dense<0.000000e+00> : vector<2x64xf32>
    %122 = tpu.matmul %121, %115, %cst_59 {dimension_numbers = #tpu.dot_dimension_numbers<[1], [0], [0], [1], [0, 0, 1, 1], [], []>} : vector<2x64xf32>, vector<64x64xf32>, vector<2x64xf32> -> vector<2x64xf32>
    %cst_60 = arith.constant 7.812500e-03 : f32
    %123 = vector.broadcast %cst_60 : f32 to vector<2x64xf32>
    %124 = arith.mulf %122, %123 : vector<2x64xf32>
    %125 = vector.extract_strided_slice %124 {offsets = [0, 0], sizes = [1, 64], strides = [1, 1]} : vector<2x64xf32> to vector<1x64xf32>
    %126 = vector.extract_strided_slice %124 {offsets = [1, 0], sizes = [1, 64], strides = [1, 1]} : vector<2x64xf32> to vector<1x64xf32>
    %127 = arith.mulf %125, %125 : vector<1x64xf32>
    %128 = arith.subf %126, %127 : vector<1x64xf32>
    %129 = vector.broadcast %125 : vector<1x64xf32> to vector<64x64xf32>
    %130 = arith.subf %112, %129 : vector<64x64xf32>
    %cst_61 = arith.constant 9.99999974E-6 : f32
    %131 = vector.broadcast %cst_61 : f32 to vector<1x64xf32>
    %132 = arith.addf %128, %131 : vector<1x64xf32>
    %133 = math.rsqrt %132 : vector<1x64xf32>
    %134 = vector.broadcast %133 : vector<1x64xf32> to vector<64x64xf32>
    %135 = arith.mulf %130, %134 : vector<64x64xf32>
    %136 = vector.broadcast %113 : vector<1x64xf32> to vector<64x64xf32>
    %137 = arith.mulf %135, %136 : vector<64x64xf32>
    %138 = vector.broadcast %114 : vector<1x64xf32> to vector<64x64xf32>
    %139 = arith.addf %137, %138 : vector<64x64xf32>
    %140 = arith.negf %139 : vector<64x64xf32>
    %141 = math.exp %140 : vector<64x64xf32>
    %cst_62 = arith.constant 1.000000e+00 : f32
    %142 = vector.broadcast %cst_62 : f32 to vector<64x64xf32>
    %143 = arith.addf %142, %141 : vector<64x64xf32>
    %144 = arith.divf %142, %143 : vector<64x64xf32>
    %145 = arith.mulf %139, %144 : vector<64x64xf32>
    %cst_63 = arith.constant 0.000000e+00 : bf16
    %146 = vector.broadcast %cst_63 : bf16 to vector<16x64xbf16>
    %c0_64 = arith.constant 0 : index
    %c0_65 = arith.constant 0 : index
    %147 = vector.load %arg23[%c0_64, %c0_65] : memref<96x64xbf16, #tpu.memory_space<vmem>>, vector<16x64xbf16>
    tpu.vector_store %arg23[%c0_64, %c0_65], %146 {strides = array<i32>} : memref<96x64xbf16, #tpu.memory_space<vmem>>, vector<16x64xbf16>,
    %cst_66 = arith.constant 0.000000e+00 : bf16
    %148 = vector.broadcast %cst_66 : bf16 to vector<16x64xbf16>
    %c80_67 = arith.constant 80 : index
    %c0_68 = arith.constant 0 : index
    %149 = vector.load %arg23[%c80_67, %c0_68] : memref<96x64xbf16, #tpu.memory_space<vmem>>, vector<16x64xbf16>
    tpu.vector_store %arg23[%c80_67, %c0_68], %148 {strides = array<i32>} : memref<96x64xbf16, #tpu.memory_space<vmem>>, vector<16x64xbf16>,
    %150 = arith.truncf %145 : vector<64x64xf32> to vector<64x64xbf16>
    %c16_69 = arith.constant 16 : index
    %c0_70 = arith.constant 0 : index
    %151 = vector.load %arg23[%c16_69, %c0_70] : memref<96x64xbf16, #tpu.memory_space<vmem>>, vector<64x64xbf16>
    tpu.vector_store %arg23[%c16_69, %c0_70], %150 {strides = array<i32>} : memref<96x64xbf16, #tpu.memory_space<vmem>>, vector<64x64xbf16>,
    %152 = tpu.iota {dimensions = array<i32: 0>} : vector<64x1xi32>
    %c8_i32_71 = arith.constant 8 : i32
    %c0_i32_72 = arith.constant 0 : i32
    %153 = arith.cmpi eq, %c8_i32_71, %c0_i32_72 : i32
    %c1_i32_73 = arith.constant 1 : i32
    %154 = arith.select %153, %c1_i32_73, %c8_i32_71 : i32
    %155 = vector.broadcast %154 : i32 to vector<64x1xi32>
    %156 = arith.remsi %152, %155 : vector<64x1xi32>
    %c0_i32_74 = arith.constant 0 : i32
    %157 = vector.broadcast %c0_i32_74 : i32 to vector<64x1xi32>
    %158 = arith.cmpi ne, %156, %157 : vector<64x1xi32>
    %c0_i32_75 = arith.constant 0 : i32
    %159 = vector.broadcast %c0_i32_75 : i32 to vector<64x1xi32>
    %160 = arith.cmpi slt, %156, %159 : vector<64x1xi32>
    %c0_i32_76 = arith.constant 0 : i32
    %161 = arith.cmpi slt, %154, %c0_i32_76 : i32
    %162 = vector.broadcast %161 : i1 to vector<64x1xi1>
    %163 = vector.broadcast %162 : vector<64x1xi1> to vector<64x1xi1>
    %164 = arith.xori %160, %163 : vector<64x1xi1>
    %165 = arith.andi %164, %158 : vector<64x1xi1>
    %166 = vector.broadcast %154 : i32 to vector<64x1xi32>
    %167 = arith.addi %156, %166 : vector<64x1xi32>
    %168 = arith.select %165, %167, %156 : vector<64x1xi1>, vector<64x1xi32>
    %c7_77 = arith.constant 7 : index
    %c0_78 = arith.constant 0 : index
    %169 = vector.load %arg23[%c7_77, %c0_78] : memref<96x64xbf16, #tpu.memory_space<vmem>>, vector<64x64xbf16>
    %c0_i32_79 = arith.constant 0 : i32
    %170 = vector.broadcast %c0_i32_79 : i32 to vector<64x1xi32>
    %171 = arith.cmpi eq, %168, %170 : vector<64x1xi32>
    %cst_80 = arith.constant 0.000000e+00 : bf16
    %172 = vector.shape_cast %171 : vector<64x1xi1> to vector<64x1xi1>
    %173 = vector.broadcast %172 : vector<64x1xi1> to vector<64x64xi1>
    %174 = vector.broadcast %cst_80 : bf16 to vector<64x64xbf16>
    %175 = arith.select %173, %174, %169 : vector<64x64xi1>, vector<64x64xbf16>
    %c8_81 = arith.constant 8 : index
    %c0_82 = arith.constant 0 : index
    %176 = vector.load %arg23[%c8_81, %c0_82] : memref<96x64xbf16, #tpu.memory_space<vmem>>, vector<64x64xbf16>
    %c9_83 = arith.constant 9 : index
    %c0_84 = arith.constant 0 : index
    %177 = vector.load %arg23[%c9_83, %c0_84] : memref<96x64xbf16, #tpu.memory_space<vmem>>, vector<64x64xbf16>
    %c7_i32_85 = arith.constant 7 : i32
    %178 = vector.broadcast %c7_i32_85 : i32 to vector<64x1xi32>
    %179 = arith.cmpi eq, %168, %178 : vector<64x1xi32>
    %cst_86 = arith.constant 0.000000e+00 : bf16
    %180 = vector.shape_cast %179 : vector<64x1xi1> to vector<64x1xi1>
    %181 = vector.broadcast %180 : vector<64x1xi1> to vector<64x64xi1>
    %182 = vector.broadcast %cst_86 : bf16 to vector<64x64xbf16>
    %183 = arith.select %181, %182, %177 : vector<64x64xi1>, vector<64x64xbf16>
    %c15_87 = arith.constant 15 : index
    %c0_88 = arith.constant 0 : index
    %184 = vector.load %arg23[%c15_87, %c0_88] : memref<96x64xbf16, #tpu.memory_space<vmem>>, vector<64x64xbf16>
    %c0_i32_89 = arith.constant 0 : i32
    %185 = vector.broadcast %c0_i32_89 : i32 to vector<64x1xi32>
    %186 = arith.cmpi eq, %168, %185 : vector<64x1xi32>
    %cst_90 = arith.constant 0.000000e+00 : bf16
    %187 = vector.shape_cast %186 : vector<64x1xi1> to vector<64x1xi1>
    %188 = vector.broadcast %187 : vector<64x1xi1> to vector<64x64xi1>
    %189 = vector.broadcast %cst_90 : bf16 to vector<64x64xbf16>
    %190 = arith.select %188, %189, %184 : vector<64x64xi1>, vector<64x64xbf16>
    %c16_91 = arith.constant 16 : index
    %c0_92 = arith.constant 0 : index
    %191 = vector.load %arg23[%c16_91, %c0_92] : memref<96x64xbf16, #tpu.memory_space<vmem>>, vector<64x64xbf16>
    %c17_93 = arith.constant 17 : index
    %c0_94 = arith.constant 0 : index
    %192 = vector.load %arg23[%c17_93, %c0_94] : memref<96x64xbf16, #tpu.memory_space<vmem>>, vector<64x64xbf16>
    %c7_i32_95 = arith.constant 7 : i32
    %193 = vector.broadcast %c7_i32_95 : i32 to vector<64x1xi32>
    %194 = arith.cmpi eq, %168, %193 : vector<64x1xi32>
    %cst_96 = arith.constant 0.000000e+00 : bf16
    %195 = vector.shape_cast %194 : vector<64x1xi1> to vector<64x1xi1>
    %196 = vector.broadcast %195 : vector<64x1xi1> to vector<64x64xi1>
    %197 = vector.broadcast %cst_96 : bf16 to vector<64x64xbf16>
    %198 = arith.select %196, %197, %192 : vector<64x64xi1>, vector<64x64xbf16>
    %c23_97 = arith.constant 23 : index
    %c0_98 = arith.constant 0 : index
    %199 = vector.load %arg23[%c23_97, %c0_98] : memref<96x64xbf16, #tpu.memory_space<vmem>>, vector<64x64xbf16>
    %c0_i32_99 = arith.constant 0 : i32
    %200 = vector.broadcast %c0_i32_99 : i32 to vector<64x1xi32>
    %201 = arith.cmpi eq, %168, %200 : vector<64x1xi32>
    %cst_100 = arith.constant 0.000000e+00 : bf16
    %202 = vector.shape_cast %201 : vector<64x1xi1> to vector<64x1xi1>
    %203 = vector.broadcast %202 : vector<64x1xi1> to vector<64x64xi1>
    %204 = vector.broadcast %cst_100 : bf16 to vector<64x64xbf16>
    %205 = arith.select %203, %204, %199 : vector<64x64xi1>, vector<64x64xbf16>
    %c24_101 = arith.constant 24 : index
    %c0_102 = arith.constant 0 : index
    %206 = vector.load %arg23[%c24_101, %c0_102] : memref<96x64xbf16, #tpu.memory_space<vmem>>, vector<64x64xbf16>
    %c25_103 = arith.constant 25 : index
    %c0_104 = arith.constant 0 : index
    %207 = vector.load %arg23[%c25_103, %c0_104] : memref<96x64xbf16, #tpu.memory_space<vmem>>, vector<64x64xbf16>
    %c7_i32_105 = arith.constant 7 : i32
    %208 = vector.broadcast %c7_i32_105 : i32 to vector<64x1xi32>
    %209 = arith.cmpi eq, %168, %208 : vector<64x1xi32>
    %cst_106 = arith.constant 0.000000e+00 : bf16
    %210 = vector.shape_cast %209 : vector<64x1xi1> to vector<64x1xi1>
    %211 = vector.broadcast %210 : vector<64x1xi1> to vector<64x64xi1>
    %212 = vector.broadcast %cst_106 : bf16 to vector<64x64xbf16>
    %213 = arith.select %211, %212, %207 : vector<64x64xi1>, vector<64x64xbf16>
    %214 = tpu.concatenate %175, %176, %183, %190, %191, %198, %205, %206, %213 in 1 : vector<64x64xbf16>, vector<64x64xbf16>, vector<64x64xbf16>, vector<64x64xbf16>, vector<64x64xbf16>, vector<64x64xbf16>, vector<64x64xbf16>, vector<64x64xbf16>, vector<64x64xbf16> -> vector<64x576xbf16>
    %c0_107 = arith.constant 0 : index
    %c0_108 = arith.constant 0 : index
    %215 = vector.load %arg11[%c0_107, %c0_108] : memref<576x64xbf16, #tpu.memory_space<vmem>>, vector<576x64xbf16>
    %cst_109 = arith.constant dense<0.000000e+00> : vector<64x64xf32>
    %216 = tpu.matmul %214, %215, %cst_109 {dimension_numbers = #tpu.dot_dimension_numbers<[1], [0], [0], [1], [0, 0, 1, 1], [], []>} : vector<64x576xbf16>, vector<576x64xbf16>, vector<64x64xf32> -> vector<64x64xf32>
    %217 = arith.truncf %1 : vector<64x32xf32> to vector<64x32xbf16>
    %c0_110 = arith.constant 0 : index
    %c0_111 = arith.constant 0 : index
    %218 = vector.load %arg13[%c0_110, %c0_111] : memref<32x64xbf16, #tpu.memory_space<vmem>>, vector<32x64xbf16>
    %cst_112 = arith.constant dense<0.000000e+00> : vector<64x64xf32>
    %219 = tpu.matmul %217, %218, %cst_112 {dimension_numbers = #tpu.dot_dimension_numbers<[1], [0], [0], [1], [0, 0, 1, 1], [], []>} : vector<64x32xbf16>, vector<32x64xbf16>, vector<64x64xf32> -> vector<64x64xf32>
    %c0_113 = arith.constant 0 : index
    %c0_114 = arith.constant 0 : index
    %220 = vector.load %arg14[%c0_113, %c0_114] : memref<1x64xf32, #tpu.memory_space<vmem>>, vector<1x64xf32>
    %221 = vector.broadcast %220 : vector<1x64xf32> to vector<64x64xf32>
    %222 = arith.addf %219, %221 : vector<64x64xf32>
    %c0_115 = arith.constant 0 : index
    %c0_116 = arith.constant 0 : index
    %223 = vector.load %arg12[%c0_115, %c0_116] : memref<1x64xf32, #tpu.memory_space<vmem>>, vector<1x64xf32>
    %224 = vector.broadcast %223 : vector<1x64xf32> to vector<64x64xf32>
    %225 = arith.addf %216, %224 : vector<64x64xf32>
    %226 = arith.addf %225, %222 : vector<64x64xf32>
    %cst_117 = arith.constant 0.707106769 : f32
    %227 = vector.broadcast %cst_117 : f32 to vector<64x64xf32>
    %228 = arith.mulf %226, %227 : vector<64x64xf32>
    %c0_118 = arith.constant 0 : index
    %c0_119 = arith.constant 0 : index
    %229 = vector.load %arg15[%c0_118, %c0_119] : memref<1x64xf32, #tpu.memory_space<vmem>>, vector<1x64xf32>
    %c0_120 = arith.constant 0 : index
    %c0_121 = arith.constant 0 : index
    %230 = vector.load %arg16[%c0_120, %c0_121] : memref<1x64xf32, #tpu.memory_space<vmem>>, vector<1x64xf32>
    %c0_122 = arith.constant 0 : index
    %c0_123 = arith.constant 0 : index
    %231 = vector.load %arg10[%c0_122, %c0_123] : memref<64x64xf32, #tpu.memory_space<vmem>>, vector<64x64xf32>
    %cst_124 = arith.constant dense<0.000000e+00> : vector<64xf32>
    %232 = vector.multi_reduction <add>, %228, %cst_124 [0] : vector<64x64xf32> to vector<64xf32>
    %233 = vector.shape_cast %232 : vector<64xf32> to vector<1x64xf32>
    %234 = arith.mulf %228, %228 : vector<64x64xf32>
    %cst_125 = arith.constant dense<0.000000e+00> : vector<64xf32>
    %235 = vector.multi_reduction <add>, %234, %cst_125 [0] : vector<64x64xf32> to vector<64xf32>
    %236 = vector.shape_cast %235 : vector<64xf32> to vector<1x64xf32>
    %237 = tpu.concatenate %233, %236 in 0 : vector<1x64xf32>, vector<1x64xf32> -> vector<2x64xf32>
    %cst_126 = arith.constant dense<0.000000e+00> : vector<2x64xf32>
    %238 = tpu.matmul %237, %231, %cst_126 {dimension_numbers = #tpu.dot_dimension_numbers<[1], [0], [0], [1], [0, 0, 1, 1], [], []>} : vector<2x64xf32>, vector<64x64xf32>, vector<2x64xf32> -> vector<2x64xf32>
    %cst_127 = arith.constant 7.812500e-03 : f32
    %239 = vector.broadcast %cst_127 : f32 to vector<2x64xf32>
    %240 = arith.mulf %238, %239 : vector<2x64xf32>
    %241 = vector.extract_strided_slice %240 {offsets = [0, 0], sizes = [1, 64], strides = [1, 1]} : vector<2x64xf32> to vector<1x64xf32>
    %242 = vector.extract_strided_slice %240 {offsets = [1, 0], sizes = [1, 64], strides = [1, 1]} : vector<2x64xf32> to vector<1x64xf32>
    %243 = arith.mulf %241, %241 : vector<1x64xf32>
    %244 = arith.subf %242, %243 : vector<1x64xf32>
    %245 = vector.broadcast %241 : vector<1x64xf32> to vector<64x64xf32>
    %246 = arith.subf %228, %245 : vector<64x64xf32>
    %cst_128 = arith.constant 9.99999974E-6 : f32
    %247 = vector.broadcast %cst_128 : f32 to vector<1x64xf32>
    %248 = arith.addf %244, %247 : vector<1x64xf32>
    %249 = math.rsqrt %248 : vector<1x64xf32>
    %250 = vector.broadcast %249 : vector<1x64xf32> to vector<64x64xf32>
    %251 = arith.mulf %246, %250 : vector<64x64xf32>
    %252 = vector.broadcast %229 : vector<1x64xf32> to vector<64x64xf32>
    %253 = arith.mulf %251, %252 : vector<64x64xf32>
    %254 = vector.broadcast %230 : vector<1x64xf32> to vector<64x64xf32>
    %255 = arith.addf %253, %254 : vector<64x64xf32>
    %256 = arith.truncf %255 : vector<64x64xf32> to vector<64x64xbf16>
    %c0_129 = arith.constant 0 : index
    %c0_130 = arith.constant 0 : index
    %257 = vector.load %arg17[%c0_129, %c0_130] : memref<64x192xbf16, #tpu.memory_space<vmem>>, vector<64x192xbf16>
    %cst_131 = arith.constant dense<0.000000e+00> : vector<64x192xf32>
    %258 = tpu.matmul %256, %257, %cst_131 {dimension_numbers = #tpu.dot_dimension_numbers<[1], [0], [0], [1], [0, 0, 1, 1], [], []>} : vector<64x64xbf16>, vector<64x192xbf16>, vector<64x192xf32> -> vector<64x192xf32>
    %c0_132 = arith.constant 0 : index
    %c0_133 = arith.constant 0 : index
    %259 = vector.load %arg18[%c0_132, %c0_133] : memref<1x192xf32, #tpu.memory_space<vmem>>, vector<1x192xf32>
    %260 = vector.broadcast %259 : vector<1x192xf32> to vector<64x192xf32>
    %261 = arith.addf %258, %260 : vector<64x192xf32>
    %262 = vector.extract_strided_slice %261 {offsets = [0, 0], sizes = [64, 32], strides = [1, 1]} : vector<64x192xf32> to vector<64x32xf32>
    %263 = vector.extract_strided_slice %261 {offsets = [0, 32], sizes = [64, 32], strides = [1, 1]} : vector<64x192xf32> to vector<64x32xf32>
    %264 = vector.extract_strided_slice %261 {offsets = [0, 64], sizes = [64, 32], strides = [1, 1]} : vector<64x192xf32> to vector<64x32xf32>
    %cst_134 = arith.constant 1.250000e-01 : f32
    %265 = vector.broadcast %cst_134 : f32 to vector<64x32xf32>
    %266 = arith.mulf %262, %265 : vector<64x32xf32>
    %267 = arith.truncf %266 : vector<64x32xf32> to vector<64x32xbf16>
    %268 = arith.truncf %263 : vector<64x32xf32> to vector<64x32xbf16>
    %cst_135 = arith.constant dense<0.000000e+00> : vector<64x64xf32>
    %269 = tpu.matmul %267, %268, %cst_135 {dimension_numbers = #tpu.dot_dimension_numbers<[1], [1], [0], [0], [0, 0, 1, 0], [], []>} : vector<64x32xbf16>, vector<64x32xbf16>, vector<64x64xf32> -> vector<64x64xf32>
    %cst_136 = arith.constant dense<0xFF800000> : vector<64xf32>
    %270 = vector.multi_reduction <maximumf>, %269, %cst_136 [1] : vector<64x64xf32> to vector<64xf32>
    %271 = vector.shape_cast %270 : vector<64xf32> to vector<64x1xf32>
    %272 = vector.broadcast %271 : vector<64x1xf32> to vector<64x64xf32>
    %273 = arith.subf %269, %272 : vector<64x64xf32>
    %274 = math.exp %273 : vector<64x64xf32>
    %cst_137 = arith.constant dense<0.000000e+00> : vector<64xf32>
    %275 = vector.multi_reduction <add>, %274, %cst_137 [1] : vector<64x64xf32> to vector<64xf32>
    %276 = vector.shape_cast %275 : vector<64xf32> to vector<64x1xf32>
    %277 = tpu.reciprocal %276 {approx = true} : vector<64x1xf32> -> vector<64x1xf32>
    %278 = vector.broadcast %277 : vector<64x1xf32> to vector<64x64xf32>
    %279 = arith.mulf %274, %278 : vector<64x64xf32>
    %280 = arith.truncf %279 : vector<64x64xf32> to vector<64x64xbf16>
    %281 = arith.truncf %264 : vector<64x32xf32> to vector<64x32xbf16>
    %cst_138 = arith.constant dense<0.000000e+00> : vector<64x32xf32>
    %282 = tpu.matmul %280, %281, %cst_138 {dimension_numbers = #tpu.dot_dimension_numbers<[1], [0], [0], [1], [0, 0, 1, 1], [], []>} : vector<64x64xbf16>, vector<64x32xbf16>, vector<64x32xf32> -> vector<64x32xf32>
    %283 = vector.extract_strided_slice %261 {offsets = [0, 96], sizes = [64, 32], strides = [1, 1]} : vector<64x192xf32> to vector<64x32xf32>
    %284 = vector.extract_strided_slice %261 {offsets = [0, 128], sizes = [64, 32], strides = [1, 1]} : vector<64x192xf32> to vector<64x32xf32>
    %285 = vector.extract_strided_slice %261 {offsets = [0, 160], sizes = [64, 32], strides = [1, 1]} : vector<64x192xf32> to vector<64x32xf32>
    %cst_139 = arith.constant 1.250000e-01 : f32
    %286 = vector.broadcast %cst_139 : f32 to vector<64x32xf32>
    %287 = arith.mulf %283, %286 : vector<64x32xf32>
    %288 = arith.truncf %287 : vector<64x32xf32> to vector<64x32xbf16>
    %289 = arith.truncf %284 : vector<64x32xf32> to vector<64x32xbf16>
    %cst_140 = arith.constant dense<0.000000e+00> : vector<64x64xf32>
    %290 = tpu.matmul %288, %289, %cst_140 {dimension_numbers = #tpu.dot_dimension_numbers<[1], [1], [0], [0], [0, 0, 1, 0], [], []>} : vector<64x32xbf16>, vector<64x32xbf16>, vector<64x64xf32> -> vector<64x64xf32>
    %cst_141 = arith.constant dense<0xFF800000> : vector<64xf32>
    %291 = vector.multi_reduction <maximumf>, %290, %cst_141 [1] : vector<64x64xf32> to vector<64xf32>
    %292 = vector.shape_cast %291 : vector<64xf32> to vector<64x1xf32>
    %293 = vector.broadcast %292 : vector<64x1xf32> to vector<64x64xf32>
    %294 = arith.subf %290, %293 : vector<64x64xf32>
    %295 = math.exp %294 : vector<64x64xf32>
    %cst_142 = arith.constant dense<0.000000e+00> : vector<64xf32>
    %296 = vector.multi_reduction <add>, %295, %cst_142 [1] : vector<64x64xf32> to vector<64xf32>
    %297 = vector.shape_cast %296 : vector<64xf32> to vector<64x1xf32>
    %298 = tpu.reciprocal %297 {approx = true} : vector<64x1xf32> -> vector<64x1xf32>
    %299 = vector.broadcast %298 : vector<64x1xf32> to vector<64x64xf32>
    %300 = arith.mulf %295, %299 : vector<64x64xf32>
    %301 = arith.truncf %300 : vector<64x64xf32> to vector<64x64xbf16>
    %302 = arith.truncf %285 : vector<64x32xf32> to vector<64x32xbf16>
    %cst_143 = arith.constant dense<0.000000e+00> : vector<64x32xf32>
    %303 = tpu.matmul %301, %302, %cst_143 {dimension_numbers = #tpu.dot_dimension_numbers<[1], [0], [0], [1], [0, 0, 1, 1], [], []>} : vector<64x64xbf16>, vector<64x32xbf16>, vector<64x32xf32> -> vector<64x32xf32>
    %304 = tpu.concatenate %282, %303 in 1 : vector<64x32xf32>, vector<64x32xf32> -> vector<64x64xf32>
    %305 = arith.truncf %304 : vector<64x64xf32> to vector<64x64xbf16>
    %c0_144 = arith.constant 0 : index
    %c0_145 = arith.constant 0 : index
    %306 = vector.load %arg19[%c0_144, %c0_145] : memref<64x64xbf16, #tpu.memory_space<vmem>>, vector<64x64xbf16>
    %cst_146 = arith.constant dense<0.000000e+00> : vector<64x64xf32>
    %307 = tpu.matmul %305, %306, %cst_146 {dimension_numbers = #tpu.dot_dimension_numbers<[1], [0], [0], [1], [0, 0, 1, 1], [], []>} : vector<64x64xbf16>, vector<64x64xbf16>, vector<64x64xf32> -> vector<64x64xf32>
    %c0_147 = arith.constant 0 : index
    %c0_148 = arith.constant 0 : index
    %308 = vector.load %arg20[%c0_147, %c0_148] : memref<1x64xf32, #tpu.memory_space<vmem>>, vector<1x64xf32>
    %309 = vector.broadcast %308 : vector<1x64xf32> to vector<64x64xf32>
    %310 = arith.addf %307, %309 : vector<64x64xf32>
    %311 = arith.addf %310, %228 : vector<64x64xf32>
    %cst_149 = arith.constant 0.707106769 : f32
    %312 = vector.broadcast %cst_149 : f32 to vector<64x64xf32>
    %313 = arith.mulf %311, %312 : vector<64x64xf32>
    %c0_150 = arith.constant 0 : index
    %c0_151 = arith.constant 0 : index
    %c0_152 = arith.constant 0 : index
    %314 = vector.load %arg21[%c0_150, %c0_151, %c0_152] : memref<1x64x64xf32, #tpu.memory_space<vmem>>, vector<1x64x64xf32>
    %315 = vector.shape_cast %314 : vector<1x64x64xf32> to vector<64x64xf32>
    %316 = vector.shape_cast %313 : vector<64x64xf32> to vector<1x64x64xf32>
    tpu.vector_store %arg21[%c0_150, %c0_151, %c0_152], %316 {strides = array<i32>} : memref<1x64x64xf32, #tpu.memory_space<vmem>>, vector<1x64x64xf32>,
    return
  }
  func.func @transform_0(%arg0: i32) -> (i32, i32, i32) {
    %c0_i32 = arith.constant 0 : i32
    %c0_i32_0 = arith.constant 0 : i32
    %c0_i32_1 = arith.constant 0 : i32
    return %arg0, %c0_i32, %c0_i32_0 : i32, i32, i32
  }
  func.func @transform_1(%arg0: i32) -> (i32, i32, i32) {
    %c0_i32 = arith.constant 0 : i32
    %c0_i32_0 = arith.constant 0 : i32
    %c0_i32_1 = arith.constant 0 : i32
    return %arg0, %c0_i32, %c0_i32_0 : i32, i32, i32
  }
  func.func @transform_2(%arg0: i32) -> (i32, i32) {
    %c0_i32 = arith.constant 0 : i32
    %c0_i32_0 = arith.constant 0 : i32
    %c0_i32_1 = arith.constant 0 : i32
    return %c0_i32, %c0_i32_0 : i32, i32
  }
  func.func @transform_3(%arg0: i32) -> (i32, i32) {
    %c0_i32 = arith.constant 0 : i32
    %c0_i32_0 = arith.constant 0 : i32
    %c0_i32_1 = arith.constant 0 : i32
    return %c0_i32, %c0_i32_0 : i32, i32
  }
  func.func @transform_4(%arg0: i32) -> (i32, i32) {
    %c0_i32 = arith.constant 0 : i32
    %c0_i32_0 = arith.constant 0 : i32
    %c0_i32_1 = arith.constant 0 : i32
    return %c0_i32, %c0_i32_0 : i32, i32
  }
  func.func @transform_5(%arg0: i32) -> (i32, i32) {
    %c0_i32 = arith.constant 0 : i32
    %c0_i32_0 = arith.constant 0 : i32
    %c0_i32_1 = arith.constant 0 : i32
    return %c0_i32, %c0_i32_0 : i32, i32
  }
  func.func @transform_6(%arg0: i32) -> (i32, i32) {
    %c0_i32 = arith.constant 0 : i32
    %c0_i32_0 = arith.constant 0 : i32
    %c0_i32_1 = arith.constant 0 : i32
    return %c0_i32, %c0_i32_0 : i32, i32
  }
  func.func @transform_7(%arg0: i32) -> (i32, i32) {
    %c0_i32 = arith.constant 0 : i32
    %c0_i32_0 = arith.constant 0 : i32
    %c0_i32_1 = arith.constant 0 : i32
    return %c0_i32, %c0_i32_0 : i32, i32
  }
  func.func @transform_8(%arg0: i32) -> (i32, i32) {
    %c0_i32 = arith.constant 0 : i32
    %c0_i32_0 = arith.constant 0 : i32
    %c0_i32_1 = arith.constant 0 : i32
    return %c0_i32, %c0_i32_0 : i32, i32
  }
  func.func @transform_9(%arg0: i32) -> (i32, i32) {
    %c0_i32 = arith.constant 0 : i32
    %c0_i32_0 = arith.constant 0 : i32
    %c0_i32_1 = arith.constant 0 : i32
    return %c0_i32, %c0_i32_0 : i32, i32
  }
  func.func @transform_10(%arg0: i32) -> (i32, i32) {
    %c0_i32 = arith.constant 0 : i32
    %c0_i32_0 = arith.constant 0 : i32
    %c0_i32_1 = arith.constant 0 : i32
    return %c0_i32, %c0_i32_0 : i32, i32
  }
  func.func @transform_11(%arg0: i32) -> (i32, i32) {
    %c0_i32 = arith.constant 0 : i32
    %c0_i32_0 = arith.constant 0 : i32
    %c0_i32_1 = arith.constant 0 : i32
    return %c0_i32, %c0_i32_0 : i32, i32
  }
  func.func @transform_12(%arg0: i32) -> (i32, i32) {
    %c0_i32 = arith.constant 0 : i32
    %c0_i32_0 = arith.constant 0 : i32
    %c0_i32_1 = arith.constant 0 : i32
    return %c0_i32, %c0_i32_0 : i32, i32
  }
  func.func @transform_13(%arg0: i32) -> (i32, i32) {
    %c0_i32 = arith.constant 0 : i32
    %c0_i32_0 = arith.constant 0 : i32
    %c0_i32_1 = arith.constant 0 : i32
    return %c0_i32, %c0_i32_0 : i32, i32
  }
  func.func @transform_14(%arg0: i32) -> (i32, i32) {
    %c0_i32 = arith.constant 0 : i32
    %c0_i32_0 = arith.constant 0 : i32
    %c0_i32_1 = arith.constant 0 : i32
    return %c0_i32, %c0_i32_0 : i32, i32
  }
  func.func @transform_15(%arg0: i32) -> (i32, i32) {
    %c0_i32 = arith.constant 0 : i32
    %c0_i32_0 = arith.constant 0 : i32
    %c0_i32_1 = arith.constant 0 : i32
    return %c0_i32, %c0_i32_0 : i32, i32
  }
  func.func @transform_16(%arg0: i32) -> (i32, i32) {
    %c0_i32 = arith.constant 0 : i32
    %c0_i32_0 = arith.constant 0 : i32
    %c0_i32_1 = arith.constant 0 : i32
    return %c0_i32, %c0_i32_0 : i32, i32
  }
  func.func @transform_17(%arg0: i32) -> (i32, i32) {
    %c0_i32 = arith.constant 0 : i32
    %c0_i32_0 = arith.constant 0 : i32
    %c0_i32_1 = arith.constant 0 : i32
    return %c0_i32, %c0_i32_0 : i32, i32
  }
  func.func @transform_18(%arg0: i32) -> (i32, i32) {
    %c0_i32 = arith.constant 0 : i32
    %c0_i32_0 = arith.constant 0 : i32
    %c0_i32_1 = arith.constant 0 : i32
    return %c0_i32, %c0_i32_0 : i32, i32
  }
  func.func @transform_19(%arg0: i32) -> (i32, i32) {
    %c0_i32 = arith.constant 0 : i32
    %c0_i32_0 = arith.constant 0 : i32
    %c0_i32_1 = arith.constant 0 : i32
    return %c0_i32, %c0_i32_0 : i32, i32
  }
  func.func @transform_20(%arg0: i32) -> (i32, i32, i32) {
    %c0_i32 = arith.constant 0 : i32
    %c0_i32_0 = arith.constant 0 : i32
    %c0_i32_1 = arith.constant 0 : i32
    return %arg0, %c0_i32, %c0_i32_0 : i32, i32, i32
  }
}

</mosaic_0001>

<llo_original>
// kernel: res_block_with_attention.1
$region0: #{res_block_with_attention.1}
  #allocation0 [shape = 'u32[]', space=smem, size = 0x4, offset = 0x4, fixed_abs, tag = 'smem constant byte address 0x4 - core index']
  #allocation1 [shape = 'u32[72,128]{1,0:T(1,128)}', space=vmem, size = 0x9000, scoped, tag = 'internal scratch']
  #allocation2 [shape = 'bf16[96,32]{1,0:T(8,128)(2,1)}', space=vmem, size = 0x6000, scoped, tag = 'scratch operand']
  #allocation3 [shape = 'bf16[96,64]{1,0:T(8,128)(2,1)}', space=vmem, size = 0x6000, scoped, tag = 'scratch operand']
  %s0 = inlined_call_operand.vmem [shape: f32[2,64,32], index: 0, kind: input, shape index: {}]
  %s1 = inlined_call_operand.vmem [shape: f32[2,1,64], index: 1, kind: input, shape index: {}]
  %s2 = inlined_call_operand.vmem [shape: f32[1,32], index: 2, kind: input, shape index: {}]
  %s3 = inlined_call_operand.vmem [shape: f32[1,32], index: 3, kind: input, shape index: {}]
  %s4 = inlined_call_operand.vmem [shape: f32[32,32], index: 4, kind: input, shape index: {}]
  %s5 = inlined_call_operand.vmem [shape: bf16[288,64], index: 5, kind: input, shape index: {}]
  %s6 = inlined_call_operand.vmem [shape: f32[1,64], index: 6, kind: input, shape index: {}]
  %s7 = inlined_call_operand.vmem [shape: f32[1,64], index: 7, kind: input, shape index: {}]
  %s8 = inlined_call_operand.vmem [shape: f32[1,64], index: 8, kind: input, shape index: {}]
  %s9 = inlined_call_operand.vmem [shape: f32[64,64], index: 9, kind: input, shape index: {}]
  %s10 = inlined_call_operand.vmem [shape: bf16[576,64], index: 10, kind: input, shape index: {}]
  %s11 = inlined_call_operand.vmem [shape: f32[1,64], index: 11, kind: input, shape index: {}]
  %s12 = inlined_call_operand.vmem [shape: bf16[32,64], index: 12, kind: input, shape index: {}]
  %s13 = inlined_call_operand.vmem [shape: f32[1,64], index: 13, kind: input, shape index: {}]
  %s14 = inlined_call_operand.vmem [shape: f32[1,64], index: 14, kind: input, shape index: {}]
  %s15 = inlined_call_operand.vmem [shape: f32[1,64], index: 15, kind: input, shape index: {}]
  %s16 = inlined_call_operand.vmem [shape: bf16[64,192], index: 16, kind: input, shape index: {}]
  %s17 = inlined_call_operand.vmem [shape: f32[1,192], index: 17, kind: input, shape index: {}]
  %s18 = inlined_call_operand.vmem [shape: bf16[64,64], index: 18, kind: input, shape index: {}]
  %s19 = inlined_call_operand.vmem [shape: f32[1,64], index: 19, kind: input, shape index: {}]
  %s20 = inlined_call_operand.hbm [shape: f32[2,64,64], index: 20, kind: output, shape index: {}]
  %s21 = sld [smem:[#allocation0]]
  $region113: #{res_block_with_attention.1} parent=0
    _
  %s23 = ssub.s32 1, %s21
  %s24 = scalar_select 0, %s23, %s21
  $region1: #{res_block_with_attention.1} parent=0
    #allocation4 [shape = 'u8[65536]{0}', space=vmem, size = 0x10000, scoped, tag = 'output window, operand 0']
    #allocation5 [shape = 's32[2]{0}', space=sflag, size = 0x8, scoped, tag = 'scoped memory for res_block_with_attention.1']
    %25 = vsyncpa [#allocation5], 0
    %s26 = scalar_lea.sflag [#allocation5], 1
    %27 = vsyncpa %s26, 0
    loop: start=0, step=1, limit=4
    $region2: #{res_block_with_attention.1} parent=1 // loop_pre_header
      _
    $region3: #{res_block_with_attention.1} parent=1 // loop_header
      %s29 = sphi 0, %s33
      %p30 = scmp.ge.s32.totalorder %s29, 4
      %s39 = sphi 0, %s41
      %s42 = sphi 0, %s39
      %s43 = sphi 0, %s42
      %s59 = sphi 0, %s43
      %s65 = sphi 0, %s67
      %s68 = sphi 0, %s65
      %s69 = sphi 0, %s68
      %s85 = sphi 0, %s69
      %s89 = sphi 0, %s89
      %s91 = sphi 0, %s89
      %s92 = sphi 0, %s91
      %s106 = sphi 0, %s92
      %s110 = sphi 0, %s110
      %s112 = sphi 0, %s110
      %s113 = sphi 0, %s112
      %s127 = sphi 0, %s113
      %s131 = sphi 0, %s131
      %s133 = sphi 0, %s131
      %s134 = sphi 0, %s133
      %s148 = sphi 0, %s134
      %s152 = sphi 0, %s152
      %s154 = sphi 0, %s152
      %s155 = sphi 0, %s154
      %s169 = sphi 0, %s155
      %s173 = sphi 0, %s173
      %s175 = sphi 0, %s173
      %s176 = sphi 0, %s175
      %s190 = sphi 0, %s176
      %s194 = sphi 0, %s194
      %s196 = sphi 0, %s194
      %s197 = sphi 0, %s196
      %s211 = sphi 0, %s197
      %s215 = sphi 0, %s215
      %s217 = sphi 0, %s215
      %s218 = sphi 0, %s217
      %s232 = sphi 0, %s218
      %s236 = sphi 0, %s236
      %s238 = sphi 0, %s236
      %s239 = sphi 0, %s238
      %s253 = sphi 0, %s239
      %s257 = sphi 0, %s257
      %s259 = sphi 0, %s257
      %s260 = sphi 0, %s259
      %s274 = sphi 0, %s260
      %s278 = sphi 0, %s278
      %s280 = sphi 0, %s278
      %s281 = sphi 0, %s280
      %s295 = sphi 0, %s281
      %s299 = sphi 0, %s299
      %s301 = sphi 0, %s299
      %s302 = sphi 0, %s301
      %s316 = sphi 0, %s302
      %s320 = sphi 0, %s320
      %s322 = sphi 0, %s320
      %s323 = sphi 0, %s322
      %s337 = sphi 0, %s323
      %s341 = sphi 0, %s341
      %s343 = sphi 0, %s341
      %s344 = sphi 0, %s343
      %s358 = sphi 0, %s344
      %s362 = sphi 0, %s362
      %s364 = sphi 0, %s362
      %s365 = sphi 0, %s364
      %s379 = sphi 0, %s365
      %s383 = sphi 0, %s383
      %s385 = sphi 0, %s383
      %s386 = sphi 0, %s385
      %s400 = sphi 0, %s386
      %s404 = sphi 0, %s404
      %s406 = sphi 0, %s404
      %s407 = sphi 0, %s406
      %s421 = sphi 0, %s407
      %s425 = sphi 0, %s425
      %s427 = sphi 0, %s425
      %s428 = sphi 0, %s427
      %s442 = sphi 0, %s428
      %s446 = sphi 0, %s446
      %s448 = sphi 0, %s446
      %s449 = sphi 0, %s448
      %s463 = sphi 0, %s449
      %s469 = sphi 0, %s471
      %s472 = sphi 0, %s469
      %s473 = sphi 0, %s472
      %s489 = sphi 0, %s473
    $region4: #{res_block_with_attention.1} parent=1 // loop_header_branch
      %32 = sbr.rel (%p30) target = $region8
    $region5: #{res_block_with_attention.1} parent=1 // loop_body
      %s34 = ssub.s32 %s29, 1
      %s35 = ssub.s32 %s29, 2
      %s36 = sadd.s32 %s29, 1
      %s37 = ssub.s32 %s29, %s36
      %p38 = scmp.eq.s32.totalorder %s37, 0
      %s40 = sadd.s32 %s39, 1
      %s41 = scalar_select %p38, %s39, %s40
      %p44 = pneg %p38
      %p45 = scmp.eq.s32.totalorder %s29, 1
      %p46 = por %p44, %p45
      %p47 = scmp.ne.s32.totalorder %s39, %s42
      %p48 = scmp.eq.s32.totalorder %s29, 0
      %p49 = por %p47, %p48
      %p50 = scmp.ne.s32.totalorder %s39, %s42
      %p51 = scmp.eq.s32.totalorder %s34, 1
      %p52 = por %p50, %p51
      %p53 = scmp.ne.s32.totalorder %s42, %s43
      %p54 = scmp.eq.s32.totalorder %s34, 0
      %p55 = por %p53, %p54
      %p56 = scmp.ne.s32.totalorder %s42, %s43
      %p57 = scmp.eq.s32.totalorder %s35, 1
      %p58 = por %p56, %p57
      %p60 = scmp.ne.s32.totalorder %s43, %s59
      %p61 = scmp.eq.s32.totalorder %s35, 0
      %p62 = por %p60, %p61
      %s63 = ssub.s32 %s29, %s36
      %p64 = scmp.eq.s32.totalorder %s63, 0
      %s66 = sadd.s32 %s65, 1
      %s67 = scalar_select %p64, %s65, %s66
      %p70 = pneg %p64
      %p71 = scmp.eq.s32.totalorder %s29, 1
      %p72 = por %p70, %p71
      %p73 = scmp.ne.s32.totalorder %s65, %s68
      %p74 = scmp.eq.s32.totalorder %s29, 0
      %p75 = por %p73, %p74
      %p76 = scmp.ne.s32.totalorder %s65, %s68
      %p77 = scmp.eq.s32.totalorder %s34, 1
      %p78 = por %p76, %p77
      %p79 = scmp.ne.s32.totalorder %s68, %s69
      %p80 = scmp.eq.s32.totalorder %s34, 0
      %p81 = por %p79, %p80
      %p82 = scmp.ne.s32.totalorder %s68, %s69
      %p83 = scmp.eq.s32.totalorder %s35, 1
      %p84 = por %p82, %p83
      %p86 = scmp.ne.s32.totalorder %s69, %s85
      %p87 = scmp.eq.s32.totalorder %s35, 0
      %p88 = por %p86, %p87
      %s90 = sadd.s32 %s89, 1
      %p93 = scmp.eq.s32.totalorder %s29, 1
      %p94 = scmp.ne.s32.totalorder %s89, %s91
      %p95 = scmp.eq.s32.totalorder %s29, 0
      %p96 = por %p94, %p95
      %p97 = scmp.ne.s32.totalorder %s89, %s91
      %p98 = scmp.eq.s32.totalorder %s34, 1
      %p99 = por %p97, %p98
      %p100 = scmp.ne.s32.totalorder %s91, %s92
      %p101 = scmp.eq.s32.totalorder %s34, 0
      %p102 = por %p100, %p101
      %p103 = scmp.ne.s32.totalorder %s91, %s92
      %p104 = scmp.eq.s32.totalorder %s35, 1
      %p105 = por %p103, %p104
      %p107 = scmp.ne.s32.totalorder %s92, %s106
      %p108 = scmp.eq.s32.totalorder %s35, 0
      %p109 = por %p107, %p108
      %s111 = sadd.s32 %s110, 1
      %p114 = scmp.eq.s32.totalorder %s29, 1
      %p115 = scmp.ne.s32.totalorder %s110, %s112
      %p116 = scmp.eq.s32.totalorder %s29, 0
      %p117 = por %p115, %p116
      %p118 = scmp.ne.s32.totalorder %s110, %s112
      %p119 = scmp.eq.s32.totalorder %s34, 1
      %p120 = por %p118, %p119
      %p121 = scmp.ne.s32.totalorder %s112, %s113
      %p122 = scmp.eq.s32.totalorder %s34, 0
      %p123 = por %p121, %p122
      %p124 = scmp.ne.s32.totalorder %s112, %s113
      %p125 = scmp.eq.s32.totalorder %s35, 1
      %p126 = por %p124, %p125
      %p128 = scmp.ne.s32.totalorder %s113, %s127
      %p129 = scmp.eq.s32.totalorder %s35, 0
      %p130 = por %p128, %p129
      %s132 = sadd.s32 %s131, 1
      %p135 = scmp.eq.s32.totalorder %s29, 1
      %p136 = scmp.ne.s32.totalorder %s131, %s133
      %p137 = scmp.eq.s32.totalorder %s29, 0
      %p138 = por %p136, %p137
      %p139 = scmp.ne.s32.totalorder %s131, %s133
      %p140 = scmp.eq.s32.totalorder %s34, 1
      %p141 = por %p139, %p140
      %p142 = scmp.ne.s32.totalorder %s133, %s134
      %p143 = scmp.eq.s32.totalorder %s34, 0
      %p144 = por %p142, %p143
      %p145 = scmp.ne.s32.totalorder %s133, %s134
      %p146 = scmp.eq.s32.totalorder %s35, 1
      %p147 = por %p145, %p146
      %p149 = scmp.ne.s32.totalorder %s134, %s148
      %p150 = scmp.eq.s32.totalorder %s35, 0
      %p151 = por %p149, %p150
      %s153 = sadd.s32 %s152, 1
      %p156 = scmp.eq.s32.totalorder %s29, 1
      %p157 = scmp.ne.s32.totalorder %s152, %s154
      %p158 = scmp.eq.s32.totalorder %s29, 0
      %p159 = por %p157, %p158
      %p160 = scmp.ne.s32.totalorder %s152, %s154
      %p161 = scmp.eq.s32.totalorder %s34, 1
      %p162 = por %p160, %p161
      %p163 = scmp.ne.s32.totalorder %s154, %s155
      %p164 = scmp.eq.s32.totalorder %s34, 0
      %p165 = por %p163, %p164
      %p166 = scmp.ne.s32.totalorder %s154, %s155
      %p167 = scmp.eq.s32.totalorder %s35, 1
      %p168 = por %p166, %p167
      %p170 = scmp.ne.s32.totalorder %s155, %s169
      %p171 = scmp.eq.s32.totalorder %s35, 0
      %p172 = por %p170, %p171
      %s174 = sadd.s32 %s173, 1
      %p177 = scmp.eq.s32.totalorder %s29, 1
      %p178 = scmp.ne.s32.totalorder %s173, %s175
      %p179 = scmp.eq.s32.totalorder %s29, 0
      %p180 = por %p178, %p179
      %p181 = scmp.ne.s32.totalorder %s173, %s175
      %p182 = scmp.eq.s32.totalorder %s34, 1
      %p183 = por %p181, %p182
      %p184 = scmp.ne.s32.totalorder %s175, %s176
      %p185 = scmp.eq.s32.totalorder %s34, 0
      %p186 = por %p184, %p185
      %p187 = scmp.ne.s32.totalorder %s175, %s176
      %p188 = scmp.eq.s32.totalorder %s35, 1
      %p189 = por %p187, %p188
      %p191 = scmp.ne.s32.totalorder %s176, %s190
      %p192 = scmp.eq.s32.totalorder %s35, 0
      %p193 = por %p191, %p192
      %s195 = sadd.s32 %s194, 1
      %p198 = scmp.eq.s32.totalorder %s29, 1
      %p199 = scmp.ne.s32.totalorder %s194, %s196
      %p200 = scmp.eq.s32.totalorder %s29, 0
      %p201 = por %p199, %p200
      %p202 = scmp.ne.s32.totalorder %s194, %s196
      %p203 = scmp.eq.s32.totalorder %s34, 1
      %p204 = por %p202, %p203
      %p205 = scmp.ne.s32.totalorder %s196, %s197
      %p206 = scmp.eq.s32.totalorder %s34, 0
      %p207 = por %p205, %p206
      %p208 = scmp.ne.s32.totalorder %s196, %s197
      %p209 = scmp.eq.s32.totalorder %s35, 1
      %p210 = por %p208, %p209
      %p212 = scmp.ne.s32.totalorder %s197, %s211
      %p213 = scmp.eq.s32.totalorder %s35, 0
      %p214 = por %p212, %p213
      %s216 = sadd.s32 %s215, 1
      %p219 = scmp.eq.s32.totalorder %s29, 1
      %p220 = scmp.ne.s32.totalorder %s215, %s217
      %p221 = scmp.eq.s32.totalorder %s29, 0
      %p222 = por %p220, %p221
      %p223 = scmp.ne.s32.totalorder %s215, %s217
      %p224 = scmp.eq.s32.totalorder %s34, 1
      %p225 = por %p223, %p224
      %p226 = scmp.ne.s32.totalorder %s217, %s218
      %p227 = scmp.eq.s32.totalorder %s34, 0
      %p228 = por %p226, %p227
      %p229 = scmp.ne.s32.totalorder %s217, %s218
      %p230 = scmp.eq.s32.totalorder %s35, 1
      %p231 = por %p229, %p230
      %p233 = scmp.ne.s32.totalorder %s218, %s232
      %p234 = scmp.eq.s32.totalorder %s35, 0
      %p235 = por %p233, %p234
      %s237 = sadd.s32 %s236, 1
      %p240 = scmp.eq.s32.totalorder %s29, 1
      %p241 = scmp.ne.s32.totalorder %s236, %s238
      %p242 = scmp.eq.s32.totalorder %s29, 0
      %p243 = por %p241, %p242
      %p244 = scmp.ne.s32.totalorder %s236, %s238
      %p245 = scmp.eq.s32.totalorder %s34, 1
      %p246 = por %p244, %p245
      %p247 = scmp.ne.s32.totalorder %s238, %s239
      %p248 = scmp.eq.s32.totalorder %s34, 0
      %p249 = por %p247, %p248
      %p250 = scmp.ne.s32.totalorder %s238, %s239
      %p251 = scmp.eq.s32.totalorder %s35, 1
      %p252 = por %p250, %p251
      %p254 = scmp.ne.s32.totalorder %s239, %s253
      %p255 = scmp.eq.s32.totalorder %s35, 0
      %p256 = por %p254, %p255
      %s258 = sadd.s32 %s257, 1
      %p261 = scmp.eq.s32.totalorder %s29, 1
      %p262 = scmp.ne.s32.totalorder %s257, %s259
      %p263 = scmp.eq.s32.totalorder %s29, 0
      %p264 = por %p262, %p263
      %p265 = scmp.ne.s32.totalorder %s257, %s259
      %p266 = scmp.eq.s32.totalorder %s34, 1
      %p267 = por %p265, %p266
      %p268 = scmp.ne.s32.totalorder %s259, %s260
      %p269 = scmp.eq.s32.totalorder %s34, 0
      %p270 = por %p268, %p269
      %p271 = scmp.ne.s32.totalorder %s259, %s260
      %p272 = scmp.eq.s32.totalorder %s35, 1
      %p273 = por %p271, %p272
      %p275 = scmp.ne.s32.totalorder %s260, %s274
      %p276 = scmp.eq.s32.totalorder %s35, 0
      %p277 = por %p275, %p276
      %s279 = sadd.s32 %s278, 1
      %p282 = scmp.eq.s32.totalorder %s29, 1
      %p283 = scmp.ne.s32.totalorder %s278, %s280
      %p284 = scmp.eq.s32.totalorder %s29, 0
      %p285 = por %p283, %p284
      %p286 = scmp.ne.s32.totalorder %s278, %s280
      %p287 = scmp.eq.s32.totalorder %s34, 1
      %p288 = por %p286, %p287
      %p289 = scmp.ne.s32.totalorder %s280, %s281
      %p290 = scmp.eq.s32.totalorder %s34, 0
      %p291 = por %p289, %p290
      %p292 = scmp.ne.s32.totalorder %s280, %s281
      %p293 = scmp.eq.s32.totalorder %s35, 1
      %p294 = por %p292, %p293
      %p296 = scmp.ne.s32.totalorder %s281, %s295
      %p297 = scmp.eq.s32.totalorder %s35, 0
      %p298 = por %p296, %p297
      %s300 = sadd.s32 %s299, 1
      %p303 = scmp.eq.s32.totalorder %s29, 1
      %p304 = scmp.ne.s32.totalorder %s299, %s301
      %p305 = scmp.eq.s32.totalorder %s29, 0
      %p306 = por %p304, %p305
      %p307 = scmp.ne.s32.totalorder %s299, %s301
      %p308 = scmp.eq.s32.totalorder %s34, 1
      %p309 = por %p307, %p308
      %p310 = scmp.ne.s32.totalorder %s301, %s302
      %p311 = scmp.eq.s32.totalorder %s34, 0
      %p312 = por %p310, %p311
      %p313 = scmp.ne.s32.totalorder %s301, %s302
      %p314 = scmp.eq.s32.totalorder %s35, 1
      %p315 = por %p313, %p314
      %p317 = scmp.ne.s32.totalorder %s302, %s316
      %p318 = scmp.eq.s32.totalorder %s35, 0
      %p319 = por %p317, %p318
      %s321 = sadd.s32 %s320, 1
      %p324 = scmp.eq.s32.totalorder %s29, 1
      %p325 = scmp.ne.s32.totalorder %s320, %s322
      %p326 = scmp.eq.s32.totalorder %s29, 0
      %p327 = por %p325, %p326
      %p328 = scmp.ne.s32.totalorder %s320, %s322
      %p329 = scmp.eq.s32.totalorder %s34, 1
      %p330 = por %p328, %p329
      %p331 = scmp.ne.s32.totalorder %s322, %s323
      %p332 = scmp.eq.s32.totalorder %s34, 0
      %p333 = por %p331, %p332
      %p334 = scmp.ne.s32.totalorder %s322, %s323
      %p335 = scmp.eq.s32.totalorder %s35, 1
      %p336 = por %p334, %p335
      %p338 = scmp.ne.s32.totalorder %s323, %s337
      %p339 = scmp.eq.s32.totalorder %s35, 0
      %p340 = por %p338, %p339
      %s342 = sadd.s32 %s341, 1
      %p345 = scmp.eq.s32.totalorder %s29, 1
      %p346 = scmp.ne.s32.totalorder %s341, %s343
      %p347 = scmp.eq.s32.totalorder %s29, 0
      %p348 = por %p346, %p347
      %p349 = scmp.ne.s32.totalorder %s341, %s343
      %p350 = scmp.eq.s32.totalorder %s34, 1
      %p351 = por %p349, %p350
      %p352 = scmp.ne.s32.totalorder %s343, %s344
      %p353 = scmp.eq.s32.totalorder %s34, 0
      %p354 = por %p352, %p353
      %p355 = scmp.ne.s32.totalorder %s343, %s344
      %p356 = scmp.eq.s32.totalorder %s35, 1
      %p357 = por %p355, %p356
      %p359 = scmp.ne.s32.totalorder %s344, %s358
      %p360 = scmp.eq.s32.totalorder %s35, 0
      %p361 = por %p359, %p360
      %s363 = sadd.s32 %s362, 1
      %p366 = scmp.eq.s32.totalorder %s29, 1
      %p367 = scmp.ne.s32.totalorder %s362, %s364
      %p368 = scmp.eq.s32.totalorder %s29, 0
      %p369 = por %p367, %p368
      %p370 = scmp.ne.s32.totalorder %s362, %s364
      %p371 = scmp.eq.s32.totalorder %s34, 1
      %p372 = por %p370, %p371
      %p373 = scmp.ne.s32.totalorder %s364, %s365
      %p374 = scmp.eq.s32.totalorder %s34, 0
      %p375 = por %p373, %p374
      %p376 = scmp.ne.s32.totalorder %s364, %s365
      %p377 = scmp.eq.s32.totalorder %s35, 1
      %p378 = por %p376, %p377
      %p380 = scmp.ne.s32.totalorder %s365, %s379
      %p381 = scmp.eq.s32.totalorder %s35, 0
      %p382 = por %p380, %p381
      %s384 = sadd.s32 %s383, 1
      %p387 = scmp.eq.s32.totalorder %s29, 1
      %p388 = scmp.ne.s32.totalorder %s383, %s385
      %p389 = scmp.eq.s32.totalorder %s29, 0
      %p390 = por %p388, %p389
      %p391 = scmp.ne.s32.totalorder %s383, %s385
      %p392 = scmp.eq.s32.totalorder %s34, 1
      %p393 = por %p391, %p392
      %p394 = scmp.ne.s32.totalorder %s385, %s386
      %p395 = scmp.eq.s32.totalorder %s34, 0
      %p396 = por %p394, %p395
      %p397 = scmp.ne.s32.totalorder %s385, %s386
      %p398 = scmp.eq.s32.totalorder %s35, 1
      %p399 = por %p397, %p398
      %p401 = scmp.ne.s32.totalorder %s386, %s400
      %p402 = scmp.eq.s32.totalorder %s35, 0
      %p403 = por %p401, %p402
      %s405 = sadd.s32 %s404, 1
      %p408 = scmp.eq.s32.totalorder %s29, 1
      %p409 = scmp.ne.s32.totalorder %s404, %s406
      %p410 = scmp.eq.s32.totalorder %s29, 0
      %p411 = por %p409, %p410
      %p412 = scmp.ne.s32.totalorder %s404, %s406
      %p413 = scmp.eq.s32.totalorder %s34, 1
      %p414 = por %p412, %p413
      %p415 = scmp.ne.s32.totalorder %s406, %s407
      %p416 = scmp.eq.s32.totalorder %s34, 0
      %p417 = por %p415, %p416
      %p418 = scmp.ne.s32.totalorder %s406, %s407
      %p419 = scmp.eq.s32.totalorder %s35, 1
      %p420 = por %p418, %p419
      %p422 = scmp.ne.s32.totalorder %s407, %s421
      %p423 = scmp.eq.s32.totalorder %s35, 0
      %p424 = por %p422, %p423
      %s426 = sadd.s32 %s425, 1
      %p429 = scmp.eq.s32.totalorder %s29, 1
      %p430 = scmp.ne.s32.totalorder %s425, %s427
      %p431 = scmp.eq.s32.totalorder %s29, 0
      %p432 = por %p430, %p431
      %p433 = scmp.ne.s32.totalorder %s425, %s427
      %p434 = scmp.eq.s32.totalorder %s34, 1
      %p435 = por %p433, %p434
      %p436 = scmp.ne.s32.totalorder %s427, %s428
      %p437 = scmp.eq.s32.totalorder %s34, 0
      %p438 = por %p436, %p437
      %p439 = scmp.ne.s32.totalorder %s427, %s428
      %p440 = scmp.eq.s32.totalorder %s35, 1
      %p441 = por %p439, %p440
      %p443 = scmp.ne.s32.totalorder %s428, %s442
      %p444 = scmp.eq.s32.totalorder %s35, 0
      %p445 = por %p443, %p444
      %s447 = sadd.s32 %s446, 1
      %p450 = scmp.eq.s32.totalorder %s29, 1
      %p451 = scmp.ne.s32.totalorder %s446, %s448
      %p452 = scmp.eq.s32.totalorder %s29, 0
      %p453 = por %p451, %p452
      %p454 = scmp.ne.s32.totalorder %s446, %s448
      %p455 = scmp.eq.s32.totalorder %s34, 1
      %p456 = por %p454, %p455
      %p457 = scmp.ne.s32.totalorder %s448, %s449
      %p458 = scmp.eq.s32.totalorder %s34, 0
      %p459 = por %p457, %p458
      %p460 = scmp.ne.s32.totalorder %s448, %s449
      %p461 = scmp.eq.s32.totalorder %s35, 1
      %p462 = por %p460, %p461
      %p464 = scmp.ne.s32.totalorder %s449, %s463
      %p465 = scmp.eq.s32.totalorder %s35, 0
      %p466 = por %p464, %p465
      %s467 = ssub.s32 %s29, %s36
      %p468 = scmp.eq.s32.totalorder %s467, 0
      %s470 = sadd.s32 %s469, 1
      %s471 = scalar_select %p468, %s469, %s470
      %p474 = pneg %p468
      %p475 = scmp.eq.s32.totalorder %s29, 1
      %p476 = por %p474, %p475
      %p477 = scmp.ne.s32.totalorder %s469, %s472
      %p478 = scmp.eq.s32.totalorder %s29, 0
      %p479 = por %p477, %p478
      %p480 = scmp.ne.s32.totalorder %s469, %s472
      %p481 = scmp.eq.s32.totalorder %s34, 1
      %p482 = por %p480, %p481
      %p483 = scmp.ne.s32.totalorder %s472, %s473
      %p484 = scmp.eq.s32.totalorder %s34, 0
      %p485 = por %p483, %p484
      %p486 = scmp.ne.s32.totalorder %s472, %s473
      %p487 = scmp.eq.s32.totalorder %s35, 1
      %p488 = por %p486, %p487
      %p490 = scmp.ne.s32.totalorder %s473, %s489
      %p491 = scmp.eq.s32.totalorder %s35, 0
      %p492 = por %p490, %p491
      %p493 = scmp.le.s32.totalorder 1, %s29
      %p494 = scmp.lt.s32.totalorder %s29, 3
      %p495 = pnand %p493, %p494
      %p496 = pneg %p495
      // Predicated region
      $region9: #{res_block_with_attention.1} parent=5 // pred_check
        _
      $region10: #{res_block_with_attention.1} parent=5 // pred_check_branch
        %498 = sbr.rel (%p495) target = $region12
      $region11: #{res_block_with_attention.1} parent=5 // pred_region
        %s499 = ssub.s32 %s29, 1
        // Predicated region
        $region13: #{res_block_with_attention.1} parent=11 // pred_check
          %p500 = pneg %p102
        $region14: #{res_block_with_attention.1} parent=11 // pred_check_branch
          %502 = sbr.rel (%p500) target = $region16
        $region15: #{res_block_with_attention.1} parent=11 // pred_region
          _
        $region16: #{res_block_with_attention.1} parent=11 // pred_fallthru
          _
        // Predicated region
        $region17: #{res_block_with_attention.1} parent=11 // pred_check
          %p503 = pneg %p123
        $region18: #{res_block_with_attention.1} parent=11 // pred_check_branch
          %505 = sbr.rel (%p503) target = $region20
        $region19: #{res_block_with_attention.1} parent=11 // pred_region
          _
        $region20: #{res_block_with_attention.1} parent=11 // pred_fallthru
          _
        // Predicated region
        $region21: #{res_block_with_attention.1} parent=11 // pred_check
          %p506 = pneg %p144
        $region22: #{res_block_with_attention.1} parent=11 // pred_check_branch
          %508 = sbr.rel (%p506) target = $region24
        $region23: #{res_block_with_attention.1} parent=11 // pred_region
          _
        $region24: #{res_block_with_attention.1} parent=11 // pred_fallthru
          _
        // Predicated region
        $region25: #{res_block_with_attention.1} parent=11 // pred_check
          %p509 = pneg %p165
        $region26: #{res_block_with_attention.1} parent=11 // pred_check_branch
          %511 = sbr.rel (%p509) target = $region28
        $region27: #{res_block_with_attention.1} parent=11 // pred_region
          _
        $region28: #{res_block_with_attention.1} parent=11 // pred_fallthru
          _
        // Predicated region
        $region29: #{res_block_with_attention.1} parent=11 // pred_check
          %p512 = pneg %p186
        $region30: #{res_block_with_attention.1} parent=11 // pred_check_branch
          %514 = sbr.rel (%p512) target = $region32
        $region31: #{res_block_with_attention.1} parent=11 // pred_region
          _
        $region32: #{res_block_with_attention.1} parent=11 // pred_fallthru
          _
        // Predicated region
        $region33: #{res_block_with_attention.1} parent=11 // pred_check
          %p515 = pneg %p207
        $region34: #{res_block_with_attention.1} parent=11 // pred_check_branch
          %517 = sbr.rel (%p515) target = $region36
        $region35: #{res_block_with_attention.1} parent=11 // pred_region
          _
        $region36: #{res_block_with_attention.1} parent=11 // pred_fallthru
          _
        // Predicated region
        $region37: #{res_block_with_attention.1} parent=11 // pred_check
          %p518 = pneg %p228
        $region38: #{res_block_with_attention.1} parent=11 // pred_check_branch
          %520 = sbr.rel (%p518) target = $region40
        $region39: #{res_block_with_attention.1} parent=11 // pred_region
          _
        $region40: #{res_block_with_attention.1} parent=11 // pred_fallthru
          _
        // Predicated region
        $region41: #{res_block_with_attention.1} parent=11 // pred_check
          %p521 = pneg %p249
        $region42: #{res_block_with_attention.1} parent=11 // pred_check_branch
          %523 = sbr.rel (%p521) target = $region44
        $region43: #{res_block_with_attention.1} parent=11 // pred_region
          _
        $region44: #{res_block_with_attention.1} parent=11 // pred_fallthru
          _
        // Predicated region
        $region45: #{res_block_with_attention.1} parent=11 // pred_check
          %p524 = pneg %p270
        $region46: #{res_block_with_attention.1} parent=11 // pred_check_branch
          %526 = sbr.rel (%p524) target = $region48
        $region47: #{res_block_with_attention.1} parent=11 // pred_region
          _
        $region48: #{res_block_with_attention.1} parent=11 // pred_fallthru
          _
        // Predicated region
        $region49: #{res_block_with_attention.1} parent=11 // pred_check
          %p527 = pneg %p291
        $region50: #{res_block_with_attention.1} parent=11 // pred_check_branch
          %529 = sbr.rel (%p527) target = $region52
        $region51: #{res_block_with_attention.1} parent=11 // pred_region
          _
        $region52: #{res_block_with_attention.1} parent=11 // pred_fallthru
          _
        // Predicated region
        $region53: #{res_block_with_attention.1} parent=11 // pred_check
          %p530 = pneg %p312
        $region54: #{res_block_with_attention.1} parent=11 // pred_check_branch
          %532 = sbr.rel (%p530) target = $region56
        $region55: #{res_block_with_attention.1} parent=11 // pred_region
          _
        $region56: #{res_block_with_attention.1} parent=11 // pred_fallthru
          _
        // Predicated region
        $region57: #{res_block_with_attention.1} parent=11 // pred_check
          %p533 = pneg %p333
        $region58: #{res_block_with_attention.1} parent=11 // pred_check_branch
          %535 = sbr.rel (%p533) target = $region60
        $region59: #{res_block_with_attention.1} parent=11 // pred_region
          _
        $region60: #{res_block_with_attention.1} parent=11 // pred_fallthru
          _
        // Predicated region
        $region61: #{res_block_with_attention.1} parent=11 // pred_check
          %p536 = pneg %p354
        $region62: #{res_block_with_attention.1} parent=11 // pred_check_branch
          %538 = sbr.rel (%p536) target = $region64
        $region63: #{res_block_with_attention.1} parent=11 // pred_region
          _
        $region64: #{res_block_with_attention.1} parent=11 // pred_fallthru
          _
        // Predicated region
        $region65: #{res_block_with_attention.1} parent=11 // pred_check
          %p539 = pneg %p375
        $region66: #{res_block_with_attention.1} parent=11 // pred_check_branch
          %541 = sbr.rel (%p539) target = $region68
        $region67: #{res_block_with_attention.1} parent=11 // pred_region
          _
        $region68: #{res_block_with_attention.1} parent=11 // pred_fallthru
          _
        // Predicated region
        $region69: #{res_block_with_attention.1} parent=11 // pred_check
          %p542 = pneg %p396
        $region70: #{res_block_with_attention.1} parent=11 // pred_check_branch
          %544 = sbr.rel (%p542) target = $region72
        $region71: #{res_block_with_attention.1} parent=11 // pred_region
          _
        $region72: #{res_block_with_attention.1} parent=11 // pred_fallthru
          _
        // Predicated region
        $region73: #{res_block_with_attention.1} parent=11 // pred_check
          %p545 = pneg %p417
        $region74: #{res_block_with_attention.1} parent=11 // pred_check_branch
          %547 = sbr.rel (%p545) target = $region76
        $region75: #{res_block_with_attention.1} parent=11 // pred_region
          _
        $region76: #{res_block_with_attention.1} parent=11 // pred_fallthru
          _
        // Predicated region
        $region77: #{res_block_with_attention.1} parent=11 // pred_check
          %p548 = pneg %p438
        $region78: #{res_block_with_attention.1} parent=11 // pred_check_branch
          %550 = sbr.rel (%p548) target = $region80
        $region79: #{res_block_with_attention.1} parent=11 // pred_region
          _
        $region80: #{res_block_with_attention.1} parent=11 // pred_fallthru
          _
        // Predicated region
        $region81: #{res_block_with_attention.1} parent=11 // pred_check
          %p551 = pneg %p459
        $region82: #{res_block_with_attention.1} parent=11 // pred_check_branch
          %553 = sbr.rel (%p551) target = $region84
        $region83: #{res_block_with_attention.1} parent=11 // pred_region
          _
        $region84: #{res_block_with_attention.1} parent=11 // pred_fallthru
          _
      $region12: #{res_block_with_attention.1} parent=5 // pred_fallthru
        _
      %p554 = scmp.lt.s32.totalorder %s29, 2
      // Predicated region
      $region85: #{res_block_with_attention.1} parent=5 // pred_check
        %p555 = pneg %p554
      $region86: #{res_block_with_attention.1} parent=5 // pred_check_branch
        %557 = sbr.rel (%p555) target = $region88
      $region87: #{res_block_with_attention.1} parent=5 // pred_region
        // Predicated region
        $region89: #{res_block_with_attention.1} parent=87 // pred_check
          %p558 = pneg %p49
        $region90: #{res_block_with_attention.1} parent=87 // pred_check_branch
          %560 = sbr.rel (%p558) target = $region92
        $region91: #{res_block_with_attention.1} parent=87 // pred_region
          %p561 = scmp.lt.s32.totalorder %s29, 1
          %s562 = scalar_select %p561, %s29, 1
          %s563 = smul.addr %s562, 8
          %s564 = smul.addr %s563, 8
          %s565 = scalar_lea.vmem %s0, %s564
        $region92: #{res_block_with_attention.1} parent=87 // pred_fallthru
          _
        // Predicated region
        $region93: #{res_block_with_attention.1} parent=87 // pred_check
          %p566 = pneg %p75
        $region94: #{res_block_with_attention.1} parent=87 // pred_check_branch
          %568 = sbr.rel (%p566) target = $region96
        $region95: #{res_block_with_attention.1} parent=87 // pred_region
          %p569 = scmp.lt.s32.totalorder %s29, 1
          %s570 = scalar_select %p569, %s29, 1
          %s571 = scalar_lea.vmem %s1, %s570
        $region96: #{res_block_with_attention.1} parent=87 // pred_fallthru
          _
      $region88: #{res_block_with_attention.1} parent=5 // pred_fallthru
        _
      %p572 = scmp.le.s32.totalorder 1, %s29
      %p573 = scmp.lt.s32.totalorder %s29, 3
      %p574 = pnand %p572, %p573
      %p575 = pneg %p574
      // Predicated region
      $region97: #{res_block_with_attention.1} parent=5 // pred_check
        _
      $region98: #{res_block_with_attention.1} parent=5 // pred_check_branch
        %577 = sbr.rel (%p574) target = $region100
      $region99: #{res_block_with_attention.1} parent=5 // pred_region
        %s578 = ssub.s32 %s29, 1
        %p579 = scmp.lt.s32.totalorder %s34, 1
        %s580 = scalar_select %p579, %s34, 1
        %s581 = smul.addr %s580, 8
        %s582 = smul.addr %s581, 8
        %s583 = scalar_lea.vmem %s0, %s582
        %p584 = pneg %p55
        %p585 = pneg %p52
        %p586 = scmp.lt.s32.totalorder %s34, 1
        %s587 = scalar_select %p586, %s34, 1
        %s588 = scalar_lea.vmem %s1, %s587
        %p589 = pneg %p81
        %p590 = pneg %p78
        %p591 = pneg %p102
        %p592 = pneg %p99
        %p593 = pneg %p123
        %p594 = pneg %p120
        %p595 = pneg %p144
        %p596 = pneg %p141
        %p597 = pneg %p165
        %p598 = pneg %p162
        %p599 = pneg %p186
        %p600 = pneg %p183
        %p601 = pneg %p207
        %p602 = pneg %p204
        %p603 = pneg %p228
        %p604 = pneg %p225
        %p605 = pneg %p249
        %p606 = pneg %p246
        %p607 = pneg %p270
        %p608 = pneg %p267
        %p609 = pneg %p291
        %p610 = pneg %p288
        %p611 = pneg %p312
        %p612 = pneg %p309
        %p613 = pneg %p333
        %p614 = pneg %p330
        %p615 = pneg %p354
        %p616 = pneg %p351
        %p617 = pneg %p375
        %p618 = pneg %p372
        %p619 = pneg %p396
        %p620 = pneg %p393
        %p621 = pneg %p417
        %p622 = pneg %p414
        %p623 = pneg %p438
        %p624 = pneg %p435
        %p625 = pneg %p459
        %p626 = pneg %p456
        %p627 = pneg %p485
        %p628 = pneg %p482
        %s629 = sand.u32 %s472, 1
        %s630 = scalar_lea.sflag [#allocation5], %s629
        %s631 = sand.u32 %s472, 1
        %s632 = smul.addr %s631, 64
        %s633 = scalar_lea.vmem [#allocation4], %s632
        %p634 = scmp.lt.s32.totalorder %s34, 1
        %s635 = scalar_select %p634, %s34, 1
        %s636 = smul.addr %s635, 8
        %s637 = smul.addr %s636, 8
        %s638 = scalar_lea.vmem %s0, %s637
        %p639 = scmp.lt.s32.totalorder %s34, 1
        %s640 = scalar_select %p639, %s34, 1
        %s641 = scalar_lea.vmem %s1, %s640
        %v645 = vld [vmem:[%s638] sm:$0xff]
        %v646 = vld [vmem:[%s638 + $0x8] sm:$0xff]
        %v647 = vld [vmem:[%s638 + $0x10] sm:$0xff]
        %v648 = vld [vmem:[%s638 + $0x18] sm:$0xff]
        %v649 = vld [vmem:[%s638 + $0x20] sm:$0xff]
        %v650 = vld [vmem:[%s638 + $0x28] sm:$0xff]
        %v651 = vld [vmem:[%s638 + $0x30] sm:$0xff]
        %v652 = vld [vmem:[%s638 + $0x38] sm:$0xff]
        %v653 = vld [vmem:[%s2] sm:$0x1]
        %v654 = vld [vmem:[%s3] sm:$0x1]
        %v655 = vld [vmem:[%s4] sm:$0xff]
        %v656 = vld [vmem:[%s4 + $0x8] sm:$0xff]
        %v657 = vld [vmem:[%s4 + $0x10] sm:$0xff]
        %v658 = vld [vmem:[%s4 + $0x18] sm:$0xff]
        %vm659 = vcmask 261120
        %v660 = vsel %vm659, %v645, 0.0
        %v661 = vsel %vm659, %v646, 0.0
        %v662 = vadd.f32 %v660, %v661
        %v663 = vsel %vm659, %v647, 0.0
        %v664 = vadd.f32 %v662, %v663
        %v665 = vsel %vm659, %v648, 0.0
        %v666 = vadd.f32 %v664, %v665
        %v667 = vsel %vm659, %v649, 0.0
        %v668 = vadd.f32 %v666, %v667
        %v669 = vsel %vm659, %v650, 0.0
        %v670 = vadd.f32 %v668, %v669
        %v671 = vsel %vm659, %v651, 0.0
        %v672 = vadd.f32 %v670, %v671
        %v673 = vsel %vm659, %v652, 0.0
        %v674 = vadd.f32 %v672, %v673
        %v675 = vrot.slane %v674, 4
        %v676 = vadd.f32 %v674, %v675
        %v677 = vrot.slane %v676, 2
        %v678 = vadd.f32 %v676, %v677
        %v679 = vrot.slane %v678, 1
        %v680 = vadd.f32 %v678, %v679
        %v681 = vmul.f32 %v645, %v645
        %v682 = vmul.f32 %v646, %v646
        %v683 = vmul.f32 %v647, %v647
        %v684 = vmul.f32 %v648, %v648
        %v685 = vmul.f32 %v649, %v649
        %v686 = vmul.f32 %v650, %v650
        %v687 = vmul.f32 %v651, %v651
        %v688 = vmul.f32 %v652, %v652
        %v689 = vsel %vm659, %v681, 0.0
        %v690 = vsel %vm659, %v682, 0.0
        %v691 = vadd.f32 %v689, %v690
        %v692 = vsel %vm659, %v683, 0.0
        %v693 = vadd.f32 %v691, %v692
        %v694 = vsel %vm659, %v684, 0.0
        %v695 = vadd.f32 %v693, %v694
        %v696 = vsel %vm659, %v685, 0.0
        %v697 = vadd.f32 %v695, %v696
        %v698 = vsel %vm659, %v686, 0.0
        %v699 = vadd.f32 %v697, %v698
        %v700 = vsel %vm659, %v687, 0.0
        %v701 = vadd.f32 %v699, %v700
        %v702 = vsel %vm659, %v688, 0.0
        %v703 = vadd.f32 %v701, %v702
        %v704 = vrot.slane %v703, 4
        %v705 = vadd.f32 %v703, %v704
        %v706 = vrot.slane %v705, 2
        %v707 = vadd.f32 %v705, %v706
        %v708 = vrot.slane %v707, 1
        %v709 = vadd.f32 %v707, %v708
        %vm710 = vcmask 1040384
        %v711 = vsel %vm710, %v680, %v709
        %v713 = vsel %vm659, %v711, 0
        %715 = vmatpush.msra.mxu0 0.0
        %716 = vmatpush.msra.mxu0 0.0
        %717 = vmatpush.msra.mxu0 0.0
        %718 = vmatpush.msra.mxu0 0.0
        %719 = vmatpush.msra.mxu0 0.0
        %720 = vmatpush.msra.mxu0 0.0
        %721 = vmatpush.msra.mxu0 0.0
        %722 = vmatpush.msra.mxu0 0.0
        %723 = vmatpush.msra.mxu0 0.0
        %724 = vmatpush.msra.mxu0 0.0
        %725 = vmatpush.msra.mxu0 0.0
        %726 = vmatpush.msra.mxu0 0.0
        %727 = vmatpush.msra.mxu0 %v658
        %728 = vmatpush.msra.mxu0 %v657
        %729 = vmatpush.msra.mxu0 %v656
        %730 = vmatpush.msra.mxu0 %v655
        %731 = vmatmul.f32.gmra.mxu0 %v713
        %v732 = vpop.f32.mrf.mxu0
        %v733 = vadd.f32 0.0, %v732
        %734 = vdwg.mxu0
        %v735 = vmul.f32 %v733, 0.015625
        %v736 = vmul.f32 %v735, %v735
        %v738 = vrot.slane %v736, 7
        %v740 = vsub.f32 %v735, %v738
        %v741 = vperm.slane %v735, 0
        %v742 = vsub.f32 %v645, %v741
        %v743 = vsub.f32 %v646, %v741
        %v744 = vsub.f32 %v647, %v741
        %v745 = vsub.f32 %v648, %v741
        %v746 = vsub.f32 %v649, %v741
        %v747 = vsub.f32 %v650, %v741
        %v748 = vsub.f32 %v651, %v741
        %v749 = vsub.f32 %v652, %v741
        %v750 = vadd.f32 %v740, 1e-05
        %v751 = vrsqrt.pop %v750
        %v752 = vmul.f32 %v751, %v750
        %v753 = vmul.f32 %v752, %v751
        %v754 = vmul.f32 0.5, %v753
        %v755 = vsub.f32 1.5, %v754
        %v756 = vmul.f32 %v751, %v755
        %vm757 = vweird.f32 %v750
        %vm758 = vweird.f32 %v751
        %vm759 = vmor %vm757, %vm758
        %v760 = vsel %vm759, %v751, %v756
        %v761 = vperm.slane %v760, 1
        %v762 = vmul.f32 %v742, %v761
        %v763 = vmul.f32 %v743, %v761
        %v764 = vmul.f32 %v744, %v761
        %v765 = vmul.f32 %v745, %v761
        %v766 = vmul.f32 %v746, %v761
        %v767 = vmul.f32 %v747, %v761
        %v768 = vmul.f32 %v748, %v761
        %v769 = vmul.f32 %v749, %v761
        %v771 = vperm.slane %v653, 0
        %v773 = vmul.f32 %v762, %v771
        %v774 = vmul.f32 %v763, %v771
        %v775 = vmul.f32 %v764, %v771
        %v776 = vmul.f32 %v765, %v771
        %v777 = vmul.f32 %v766, %v771
        %v778 = vmul.f32 %v767, %v771
        %v779 = vmul.f32 %v768, %v771
        %v780 = vmul.f32 %v769, %v771
        %v782 = vperm.slane %v654, 0
        %v784 = vadd.f32 %v773, %v782
        %v785 = vadd.f32 %v774, %v782
        %v786 = vadd.f32 %v775, %v782
        %v787 = vadd.f32 %v776, %v782
        %v788 = vadd.f32 %v777, %v782
        %v789 = vadd.f32 %v778, %v782
        %v790 = vadd.f32 %v779, %v782
        %v791 = vadd.f32 %v780, %v782
        %v792 = vxor.u32 %v784, 2147483648
        %v793 = vxor.u32 %v785, 2147483648
        %v794 = vxor.u32 %v786, 2147483648
        %v795 = vxor.u32 %v787, 2147483648
        %v796 = vxor.u32 %v788, 2147483648
        %v797 = vxor.u32 %v789, 2147483648
        %v798 = vxor.u32 %v790, 2147483648
        %v799 = vxor.u32 %v791, 2147483648
        %v800 = vmul.f32 %v792, 1.442695
        %v801 = vpow.pop %v800
        %v802 = vmul.f32 %v793, 1.442695
        %v803 = vpow.pop %v802
        %v804 = vmul.f32 %v794, 1.442695
        %v805 = vpow.pop %v804
        %v806 = vmul.f32 %v795, 1.442695
        %v807 = vpow.pop %v806
        %v808 = vmul.f32 %v796, 1.442695
        %v809 = vpow.pop %v808
        %v810 = vmul.f32 %v797, 1.442695
        %v811 = vpow.pop %v810
        %v812 = vmul.f32 %v798, 1.442695
        %v813 = vpow.pop %v812
        %v814 = vmul.f32 %v799, 1.442695
        %v815 = vpow.pop %v814
        %v816 = vadd.f32 %v801, 1.0
        %v817 = vadd.f32 %v803, 1.0
        %v818 = vadd.f32 %v805, 1.0
        %v819 = vadd.f32 %v807, 1.0
        %v820 = vadd.f32 %v809, 1.0
        %v821 = vadd.f32 %v811, 1.0
        %v822 = vadd.f32 %v813, 1.0
        %v823 = vadd.f32 %v815, 1.0
        %v824 = vrcp.pop %v816
        %v825 = vmul.f32 %v816, %v824
        %v826 = vsub.f32 1.0, %v825
        %v827 = vmul.f32 %v824, %v826
        %v828 = vadd.f32 %v824, %v827
        %vm829 = vweird.f32 %v816
        %vm830 = vweird.f32 %v824
        %vm831 = vmor %vm829, %vm830
        %v832 = vsel %vm831, %v824, %v828
        %v833 = vand.u32 2147483647, %v816
        %vm834 = vcmp.eq.f32.partialorder %v833, 8.507059e+37
        %v835 = vand.u32 %v816, 2147483648
        %v836 = vor.u32 1.1754944e-38, %v835
        %v837 = vsel %vm834, %v836, %v832
        %v838 = vmul.f32 1.0, %v837
        %v839 = vrcp.pop %v817
        %v840 = vmul.f32 %v817, %v839
        %v841 = vsub.f32 1.0, %v840
        %v842 = vmul.f32 %v839, %v841
        %v843 = vadd.f32 %v839, %v842
        %vm844 = vweird.f32 %v817
        %vm845 = vweird.f32 %v839
        %vm846 = vmor %vm844, %vm845
        %v847 = vsel %vm846, %v839, %v843
        %v848 = vand.u32 2147483647, %v817
        %vm849 = vcmp.eq.f32.partialorder %v848, 8.507059e+37
        %v850 = vand.u32 %v817, 2147483648
        %v851 = vor.u32 1.1754944e-38, %v850
        %v852 = vsel %vm849, %v851, %v847
        %v853 = vmul.f32 1.0, %v852
        %v854 = vrcp.pop %v818
        %v855 = vmul.f32 %v818, %v854
        %v856 = vsub.f32 1.0, %v855
        %v857 = vmul.f32 %v854, %v856
        %v858 = vadd.f32 %v854, %v857
        %vm859 = vweird.f32 %v818
        %vm860 = vweird.f32 %v854
        %vm861 = vmor %vm859, %vm860
        %v862 = vsel %vm861, %v854, %v858
        %v863 = vand.u32 2147483647, %v818
        %vm864 = vcmp.eq.f32.partialorder %v863, 8.507059e+37
        %v865 = vand.u32 %v818, 2147483648
        %v866 = vor.u32 1.1754944e-38, %v865
        %v867 = vsel %vm864, %v866, %v862
        %v868 = vmul.f32 1.0, %v867
        %v869 = vrcp.pop %v819
        %v870 = vmul.f32 %v819, %v869
        %v871 = vsub.f32 1.0, %v870
        %v872 = vmul.f32 %v869, %v871
        %v873 = vadd.f32 %v869, %v872
        %vm874 = vweird.f32 %v819
        %vm875 = vweird.f32 %v869
        %vm876 = vmor %vm874, %vm875
        %v877 = vsel %vm876, %v869, %v873
        %v878 = vand.u32 2147483647, %v819
        %vm879 = vcmp.eq.f32.partialorder %v878, 8.507059e+37
        %v880 = vand.u32 %v819, 2147483648
        %v881 = vor.u32 1.1754944e-38, %v880
        %v882 = vsel %vm879, %v881, %v877
        %v883 = vmul.f32 1.0, %v882
        %v884 = vrcp.pop %v820
        %v885 = vmul.f32 %v820, %v884
        %v886 = vsub.f32 1.0, %v885
        %v887 = vmul.f32 %v884, %v886
        %v888 = vadd.f32 %v884, %v887
        %vm889 = vweird.f32 %v820
        %vm890 = vweird.f32 %v884
        %vm891 = vmor %vm889, %vm890
        %v892 = vsel %vm891, %v884, %v888
        %v893 = vand.u32 2147483647, %v820
        %vm894 = vcmp.eq.f32.partialorder %v893, 8.507059e+37
        %v895 = vand.u32 %v820, 2147483648
        %v896 = vor.u32 1.1754944e-38, %v895
        %v897 = vsel %vm894, %v896, %v892
        %v898 = vmul.f32 1.0, %v897
        %v899 = vrcp.pop %v821
        %v900 = vmul.f32 %v821, %v899
        %v901 = vsub.f32 1.0, %v900
        %v902 = vmul.f32 %v899, %v901
        %v903 = vadd.f32 %v899, %v902
        %vm904 = vweird.f32 %v821
        %vm905 = vweird.f32 %v899
        %vm906 = vmor %vm904, %vm905
        %v907 = vsel %vm906, %v899, %v903
        %v908 = vand.u32 2147483647, %v821
        %vm909 = vcmp.eq.f32.partialorder %v908, 8.507059e+37
        %v910 = vand.u32 %v821, 2147483648
        %v911 = vor.u32 1.1754944e-38, %v910
        %v912 = vsel %vm909, %v911, %v907
        %v913 = vmul.f32 1.0, %v912
        %v914 = vrcp.pop %v822
        %v915 = vmul.f32 %v822, %v914
        %v916 = vsub.f32 1.0, %v915
        %v917 = vmul.f32 %v914, %v916
        %v918 = vadd.f32 %v914, %v917
        %vm919 = vweird.f32 %v822
        %vm920 = vweird.f32 %v914
        %vm921 = vmor %vm919, %vm920
        %v922 = vsel %vm921, %v914, %v918
        %v923 = vand.u32 2147483647, %v822
        %vm924 = vcmp.eq.f32.partialorder %v923, 8.507059e+37
        %v925 = vand.u32 %v822, 2147483648
        %v926 = vor.u32 1.1754944e-38, %v925
        %v927 = vsel %vm924, %v926, %v922
        %v928 = vmul.f32 1.0, %v927
        %v929 = vrcp.pop %v823
        %v930 = vmul.f32 %v823, %v929
        %v931 = vsub.f32 1.0, %v930
        %v932 = vmul.f32 %v929, %v931
        %v933 = vadd.f32 %v929, %v932
        %vm934 = vweird.f32 %v823
        %vm935 = vweird.f32 %v929
        %vm936 = vmor %vm934, %vm935
        %v937 = vsel %vm936, %v929, %v933
        %v938 = vand.u32 2147483647, %v823
        %vm939 = vcmp.eq.f32.partialorder %v938, 8.507059e+37
        %v940 = vand.u32 %v823, 2147483648
        %v941 = vor.u32 1.1754944e-38, %v940
        %v942 = vsel %vm939, %v941, %v937
        %v943 = vmul.f32 1.0, %v942
        %v944 = vmul.f32 %v784, %v838
        %v945 = vmul.f32 %v785, %v853
        %v946 = vmul.f32 %v786, %v868
        %v947 = vmul.f32 %v787, %v883
        %v948 = vmul.f32 %v788, %v898
        %v949 = vmul.f32 %v789, %v913
        %v950 = vmul.f32 %v790, %v928
        %v951 = vmul.f32 %v791, %v943
        %vm952 = vcmask 257024
        %953 = vst.msk [vmem:[#allocation2] sm:$0xf] %vm952, 0
        %954 = vst.msk [vmem:[#allocation2 + $0x4] sm:$0xf] %vm952, 0
        %955 = vst.msk [vmem:[#allocation2 + $0x28] sm:$0xf] %vm952, 0
        %956 = vst.msk [vmem:[#allocation2 + $0x2c] sm:$0xf] %vm952, 0
        %v957 = vpack.c.bf16 %v944, %v944
        %v958 = vpack.c.bf16 %v945, %v945
        %v959 = vpack.c.bf16 %v946, %v946
        %v960 = vpack.c.bf16 %v947, %v947
        %v961 = vpack.c.bf16 %v948, %v948
        %v962 = vpack.c.bf16 %v949, %v949
        %v963 = vpack.c.bf16 %v950, %v950
        %v964 = vpack.c.bf16 %v951, %v951
        %965 = vst.msk [vmem:[#allocation2 + $0x8] sm:$0xf] %vm952, %v957
        %966 = vst.msk [vmem:[#allocation2 + $0xc] sm:$0xf] %vm952, %v958
        %967 = vst.msk [vmem:[#allocation2 + $0x10] sm:$0xf] %vm952, %v959
        %968 = vst.msk [vmem:[#allocation2 + $0x14] sm:$0xf] %vm952, %v960
        %969 = vst.msk [vmem:[#allocation2 + $0x18] sm:$0xf] %vm952, %v961
        %970 = vst.msk [vmem:[#allocation2 + $0x1c] sm:$0xf] %vm952, %v962
        %971 = vst.msk [vmem:[#allocation2 + $0x20] sm:$0xf] %vm952, %v963
        %972 = vst.msk [vmem:[#allocation2 + $0x24] sm:$0xf] %vm952, %v964
        %v973 = vlaneseq
        %v974 = vshrl.u32 %v973, 7
        %v975 = vadd.s32 %v974, 8
        %v976 = vadd.s32 %v974, 16
        %v977 = vadd.s32 %v974, 24
        %v978 = vadd.s32 %v974, 32
        %v979 = vadd.s32 %v974, 40
        %v980 = vadd.s32 %v974, 48
        %v981 = vadd.s32 %v974, 56
        %vm982 = vcmp.lt.s32.totalorder %v974, 0
        %v983 = vsub.s32 0, %v974
        %v984 = vsel %vm982, %v983, %v974
        %v985 = vshrl.u32 %v984, 3
        %v986 = vand.u32 %v984, 7
        %v987 = vsub.s32 0, %v986
        %v988 = vsel %vm982, %v987, %v986
        %vm989 = vcmp.lt.s32.totalorder %v975, 0
        %v990 = vsub.s32 0, %v975
        %v991 = vsel %vm989, %v990, %v975
        %v992 = vshrl.u32 %v991, 3
        %v993 = vand.u32 %v991, 7
        %v994 = vsub.s32 0, %v993
        %v995 = vsel %vm989, %v994, %v993
        %vm996 = vcmp.lt.s32.totalorder %v976, 0
        %v997 = vsub.s32 0, %v976
        %v998 = vsel %vm996, %v997, %v976
        %v999 = vshrl.u32 %v998, 3
        %v1000 = vand.u32 %v998, 7
        %v1001 = vsub.s32 0, %v1000
        %v1002 = vsel %vm996, %v1001, %v1000
        %vm1003 = vcmp.lt.s32.totalorder %v977, 0
        %v1004 = vsub.s32 0, %v977
        %v1005 = vsel %vm1003, %v1004, %v977
        %v1006 = vshrl.u32 %v1005, 3
        %v1007 = vand.u32 %v1005, 7
        %v1008 = vsub.s32 0, %v1007
        %v1009 = vsel %vm1003, %v1008, %v1007
        %vm1010 = vcmp.lt.s32.totalorder %v978, 0
        %v1011 = vsub.s32 0, %v978
        %v1012 = vsel %vm1010, %v1011, %v978
        %v1013 = vshrl.u32 %v1012, 3
        %v1014 = vand.u32 %v1012, 7
        %v1015 = vsub.s32 0, %v1014
        %v1016 = vsel %vm1010, %v1015, %v1014
        %vm1017 = vcmp.lt.s32.totalorder %v979, 0
        %v1018 = vsub.s32 0, %v979
        %v1019 = vsel %vm1017, %v1018, %v979
        %v1020 = vshrl.u32 %v1019, 3
        %v1021 = vand.u32 %v1019, 7
        %v1022 = vsub.s32 0, %v1021
        %v1023 = vsel %vm1017, %v1022, %v1021
        %vm1024 = vcmp.lt.s32.totalorder %v980, 0
        %v1025 = vsub.s32 0, %v980
        %v1026 = vsel %vm1024, %v1025, %v980
        %v1027 = vshrl.u32 %v1026, 3
        %v1028 = vand.u32 %v1026, 7
        %v1029 = vsub.s32 0, %v1028
        %v1030 = vsel %vm1024, %v1029, %v1028
        %vm1031 = vcmp.lt.s32.totalorder %v981, 0
        %v1032 = vsub.s32 0, %v981
        %v1033 = vsel %vm1031, %v1032, %v981
        %v1034 = vshrl.u32 %v1033, 3
        %v1035 = vand.u32 %v1033, 7
        %v1036 = vsub.s32 0, %v1035
        %v1037 = vsel %vm1031, %v1036, %v1035
        %vm1038 = vcmp.ne.s32.totalorder %v988, 0
        %vm1039 = vcmp.ne.s32.totalorder %v995, 0
        %vm1040 = vcmp.ne.s32.totalorder %v1002, 0
        %vm1041 = vcmp.ne.s32.totalorder %v1009, 0
        %vm1042 = vcmp.ne.s32.totalorder %v1016, 0
        %vm1043 = vcmp.ne.s32.totalorder %v1023, 0
        %vm1044 = vcmp.ne.s32.totalorder %v1030, 0
        %vm1045 = vcmp.ne.s32.totalorder %v1037, 0
        %vm1046 = vcmp.lt.s32.totalorder %v988, 0
        %vm1047 = vcmp.lt.s32.totalorder %v995, 0
        %vm1048 = vcmp.lt.s32.totalorder %v1002, 0
        %vm1049 = vcmp.lt.s32.totalorder %v1009, 0
        %vm1050 = vcmp.lt.s32.totalorder %v1016, 0
        %vm1051 = vcmp.lt.s32.totalorder %v1023, 0
        %vm1052 = vcmp.lt.s32.totalorder %v1030, 0
        %vm1053 = vcmp.lt.s32.totalorder %v1037, 0
        %vm1054 = vmand %vm1046, %vm1038
        %vm1055 = vmand %vm1047, %vm1039
        %vm1056 = vmand %vm1048, %vm1040
        %vm1057 = vmand %vm1049, %vm1041
        %vm1058 = vmand %vm1050, %vm1042
        %vm1059 = vmand %vm1051, %vm1043
        %vm1060 = vmand %vm1052, %vm1044
        %vm1061 = vmand %vm1053, %vm1045
        %v1062 = vadd.s32 %v988, 8
        %v1063 = vadd.s32 %v995, 8
        %v1064 = vadd.s32 %v1002, 8
        %v1065 = vadd.s32 %v1009, 8
        %v1066 = vadd.s32 %v1016, 8
        %v1067 = vadd.s32 %v1023, 8
        %v1068 = vadd.s32 %v1030, 8
        %v1069 = vadd.s32 %v1037, 8
        %v1070 = vsel %vm1054, %v1062, %v988
        %v1071 = vsel %vm1055, %v1063, %v995
        %v1072 = vsel %vm1056, %v1064, %v1002
        %v1073 = vsel %vm1057, %v1065, %v1009
        %v1074 = vsel %vm1058, %v1066, %v1016
        %v1075 = vsel %vm1059, %v1067, %v1023
        %v1076 = vsel %vm1060, %v1068, %v1030
        %v1077 = vsel %vm1061, %v1069, %v1037
        %v1078 = vld [vmem:[#allocation2] sm:$0x8]
        %v1079 = vld [vmem:[#allocation2 + $0x4] sm:$0xf]
        %v1080 = vld [vmem:[#allocation2 + $0x8] sm:$0xf]
        %v1081 = vld [vmem:[#allocation2 + $0xc] sm:$0xf]
        %v1082 = vld [vmem:[#allocation2 + $0x10] sm:$0xf]
        %v1083 = vld [vmem:[#allocation2 + $0x14] sm:$0xf]
        %v1084 = vld [vmem:[#allocation2 + $0x18] sm:$0xf]
        %v1085 = vld [vmem:[#allocation2 + $0x1c] sm:$0xf]
        %v1086 = vld [vmem:[#allocation2 + $0x20] sm:$0xf]
        %vm1087 = vcmp.eq.s32.totalorder %v1070, 0
        %vm1088 = vcmp.eq.s32.totalorder %v1071, 0
        %vm1089 = vcmp.eq.s32.totalorder %v1072, 0
        %vm1090 = vcmp.eq.s32.totalorder %v1073, 0
        %vm1091 = vcmp.eq.s32.totalorder %v1074, 0
        %vm1092 = vcmp.eq.s32.totalorder %v1075, 0
        %vm1093 = vcmp.eq.s32.totalorder %v1076, 0
        %vm1094 = vcmp.eq.s32.totalorder %v1077, 0
        %v1095 = vsel %vm1087, 1, 0
        %v1096 = vsel %vm1088, 1, 0
        %v1097 = vsel %vm1089, 1, 0
        %v1098 = vsel %vm1090, 1, 0
        %v1099 = vsel %vm1091, 1, 0
        %v1100 = vsel %vm1092, 1, 0
        %v1101 = vsel %vm1093, 1, 0
        %v1102 = vsel %vm1094, 1, 0
        %vm1103 = vcmp.eq.s32.totalorder %v1095, 1
        %vm1104 = vcmp.eq.s32.totalorder %v1096, 1
        %vm1105 = vcmp.eq.s32.totalorder %v1097, 1
        %vm1106 = vcmp.eq.s32.totalorder %v1098, 1
        %vm1107 = vcmp.eq.s32.totalorder %v1099, 1
        %vm1108 = vcmp.eq.s32.totalorder %v1100, 1
        %vm1109 = vcmp.eq.s32.totalorder %v1101, 1
        %vm1110 = vcmp.eq.s32.totalorder %v1102, 1
        %vm1111 = vmpackc.low %vm1103, %vm1103
        %vm1112 = vmpackc.low %vm1104, %vm1104
        %vm1113 = vmpackc.low %vm1105, %vm1105
        %vm1114 = vmpackc.low %vm1106, %vm1106
        %vm1115 = vmpackc.low %vm1107, %vm1107
        %vm1116 = vmpackc.low %vm1108, %vm1108
        %vm1117 = vmpackc.low %vm1109, %vm1109
        %vm1118 = vmpackc.low %vm1110, %vm1110
        %v1119 = vsel %vm1111, 65537, 0
        %v1120 = vsel %vm1112, 65537, 0
        %v1121 = vsel %vm1113, 65537, 0
        %v1122 = vsel %vm1114, 65537, 0
        %v1123 = vsel %vm1115, 65537, 0
        %v1124 = vsel %vm1116, 65537, 0
        %v1125 = vsel %vm1117, 65537, 0
        %v1126 = vsel %vm1118, 65537, 0
        %vm1127 = vsmask.f32 3328
        %vm1128 = vsmask.f32 7440
        %vm1129 = vmor %vm1127, %vm1128
        %v1131 = vshll.u32 %v1119, 16
        %v1133 = vrot.slane %v1131, 5
        %v1134 = vshrl.u32 %v1119, 16
        %v1136 = vrot.slane %v1134, 4
        %v1137 = vor.u32 %v1136, %v1133
        %v1138 = vrot.slane %v1137, 4
        %v1140 = vshll.u32 %v1120, 16
        %v1142 = vrot.slane %v1140, 5
        %v1143 = vsel %vm1129, %v1138, %v1142
        %v1144 = vshrl.u32 %v1120, 16
        %v1146 = vrot.slane %v1144, 4
        %v1147 = vor.u32 %v1146, %v1142
        %v1148 = vrot.slane %v1147, 4
        %v1150 = vshll.u32 %v1121, 16
        %v1152 = vrot.slane %v1150, 5
        %v1153 = vsel %vm1129, %v1148, %v1152
        %v1154 = vshrl.u32 %v1121, 16
        %v1156 = vrot.slane %v1154, 4
        %v1157 = vor.u32 %v1156, %v1152
        %v1158 = vrot.slane %v1157, 4
        %v1160 = vshll.u32 %v1122, 16
        %v1162 = vrot.slane %v1160, 5
        %v1163 = vsel %vm1129, %v1158, %v1162
        %v1164 = vshrl.u32 %v1122, 16
        %v1166 = vrot.slane %v1164, 4
        %v1167 = vor.u32 %v1166, %v1162
        %v1168 = vrot.slane %v1167, 4
        %v1170 = vshll.u32 %v1123, 16
        %v1172 = vrot.slane %v1170, 5
        %v1173 = vsel %vm1129, %v1168, %v1172
        %v1174 = vshrl.u32 %v1123, 16
        %v1176 = vrot.slane %v1174, 4
        %v1177 = vor.u32 %v1176, %v1172
        %v1178 = vrot.slane %v1177, 4
        %v1180 = vshll.u32 %v1124, 16
        %v1182 = vrot.slane %v1180, 5
        %v1183 = vsel %vm1129, %v1178, %v1182
        %v1184 = vshrl.u32 %v1124, 16
        %v1186 = vrot.slane %v1184, 4
        %v1187 = vor.u32 %v1186, %v1182
        %v1188 = vrot.slane %v1187, 4
        %v1190 = vshll.u32 %v1125, 16
        %v1192 = vrot.slane %v1190, 5
        %v1193 = vsel %vm1129, %v1188, %v1192
        %v1194 = vshrl.u32 %v1125, 16
        %v1196 = vrot.slane %v1194, 4
        %v1197 = vor.u32 %v1196, %v1192
        %v1198 = vrot.slane %v1197, 4
        %v1200 = vshll.u32 %v1126, 16
        %v1202 = vrot.slane %v1200, 5
        %v1203 = vsel %vm1129, %v1198, %v1202
        %v1204 = vshrl.u32 %v1126, 16
        %v1206 = vrot.slane %v1204, 4
        %v1207 = vor.u32 %v1206, %v1202
        %v1208 = vrot.slane %v1207, 4
        %v1209 = vunpack.c.l.b16 %v1133
        %v1210 = vunpack.c.h.b16 %v1133
        %v1211 = vunpack.c.l.b16 0
        %v1212 = vunpack.c.h.b16 0
        %vm1213 = vcmp.ne.s32.totalorder %v1209, %v1211
        %vm1214 = vcmp.ne.s32.totalorder %v1210, %v1212
        %vm1215 = vmpackc.low %vm1214, %vm1213
        %v1216 = vunpack.c.l.b16 %v1143
        %v1217 = vunpack.c.h.b16 %v1143
        %v1218 = vunpack.c.l.b16 0
        %v1219 = vunpack.c.h.b16 0
        %vm1220 = vcmp.ne.s32.totalorder %v1216, %v1218
        %vm1221 = vcmp.ne.s32.totalorder %v1217, %v1219
        %vm1222 = vmpackc.low %vm1221, %vm1220
        %v1223 = vunpack.c.l.b16 %v1153
        %v1224 = vunpack.c.h.b16 %v1153
        %v1225 = vunpack.c.l.b16 0
        %v1226 = vunpack.c.h.b16 0
        %vm1227 = vcmp.ne.s32.totalorder %v1223, %v1225
        %vm1228 = vcmp.ne.s32.totalorder %v1224, %v1226
        %vm1229 = vmpackc.low %vm1228, %vm1227
        %v1230 = vunpack.c.l.b16 %v1163
        %v1231 = vunpack.c.h.b16 %v1163
        %v1232 = vunpack.c.l.b16 0
        %v1233 = vunpack.c.h.b16 0
        %vm1234 = vcmp.ne.s32.totalorder %v1230, %v1232
        %vm1235 = vcmp.ne.s32.totalorder %v1231, %v1233
        %vm1236 = vmpackc.low %vm1235, %vm1234
        %v1237 = vunpack.c.l.b16 %v1173
        %v1238 = vunpack.c.h.b16 %v1173
        %v1239 = vunpack.c.l.b16 0
        %v1240 = vunpack.c.h.b16 0
        %vm1241 = vcmp.ne.s32.totalorder %v1237, %v1239
        %vm1242 = vcmp.ne.s32.totalorder %v1238, %v1240
        %vm1243 = vmpackc.low %vm1242, %vm1241
        %v1244 = vunpack.c.l.b16 %v1183
        %v1245 = vunpack.c.h.b16 %v1183
        %v1246 = vunpack.c.l.b16 0
        %v1247 = vunpack.c.h.b16 0
        %vm1248 = vcmp.ne.s32.totalorder %v1244, %v1246
        %vm1249 = vcmp.ne.s32.totalorder %v1245, %v1247
        %vm1250 = vmpackc.low %vm1249, %vm1248
        %v1251 = vunpack.c.l.b16 %v1193
        %v1252 = vunpack.c.h.b16 %v1193
        %v1253 = vunpack.c.l.b16 0
        %v1254 = vunpack.c.h.b16 0
        %vm1255 = vcmp.ne.s32.totalorder %v1251, %v1253
        %vm1256 = vcmp.ne.s32.totalorder %v1252, %v1254
        %vm1257 = vmpackc.low %vm1256, %vm1255
        %v1258 = vunpack.c.l.b16 %v1203
        %v1259 = vunpack.c.h.b16 %v1203
        %v1260 = vunpack.c.l.b16 0
        %v1261 = vunpack.c.h.b16 0
        %vm1262 = vcmp.ne.s32.totalorder %v1258, %v1260
        %vm1263 = vcmp.ne.s32.totalorder %v1259, %v1261
        %vm1264 = vmpackc.low %vm1263, %vm1262
        %v1265 = vunpack.c.l.b16 %v1208
        %v1266 = vunpack.c.h.b16 %v1208
        %v1267 = vunpack.c.l.b16 0
        %v1268 = vunpack.c.h.b16 0
        %vm1269 = vcmp.ne.s32.totalorder %v1265, %v1267
        %vm1270 = vcmp.ne.s32.totalorder %v1266, %v1268
        %vm1271 = vmpackc.low %vm1270, %vm1269
        %v1272 = vsel %vm1215, 0, %v1078
        %v1273 = vsel %vm1222, 0, %v1079
        %v1274 = vsel %vm1229, 0, %v1080
        %v1275 = vsel %vm1236, 0, %v1081
        %v1276 = vsel %vm1243, 0, %v1082
        %v1277 = vsel %vm1250, 0, %v1083
        %v1278 = vsel %vm1257, 0, %v1084
        %v1279 = vsel %vm1264, 0, %v1085
        %v1280 = vsel %vm1271, 0, %v1086
        %v1281 = vld [vmem:[#allocation2 + $0x24] sm:$0x1]
        %vm1282 = vcmp.eq.s32.totalorder %v1070, 7
        %vm1283 = vcmp.eq.s32.totalorder %v1071, 7
        %vm1284 = vcmp.eq.s32.totalorder %v1072, 7
        %vm1285 = vcmp.eq.s32.totalorder %v1073, 7
        %vm1286 = vcmp.eq.s32.totalorder %v1074, 7
        %vm1287 = vcmp.eq.s32.totalorder %v1075, 7
        %vm1288 = vcmp.eq.s32.totalorder %v1076, 7
        %vm1289 = vcmp.eq.s32.totalorder %v1077, 7
        %v1290 = vsel %vm1282, 1, 0
        %v1291 = vsel %vm1283, 1, 0
        %v1292 = vsel %vm1284, 1, 0
        %v1293 = vsel %vm1285, 1, 0
        %v1294 = vsel %vm1286, 1, 0
        %v1295 = vsel %vm1287, 1, 0
        %v1296 = vsel %vm1288, 1, 0
        %v1297 = vsel %vm1289, 1, 0
        %vm1298 = vcmp.eq.s32.totalorder %v1290, 1
        %vm1299 = vcmp.eq.s32.totalorder %v1291, 1
        %vm1300 = vcmp.eq.s32.totalorder %v1292, 1
        %vm1301 = vcmp.eq.s32.totalorder %v1293, 1
        %vm1302 = vcmp.eq.s32.totalorder %v1294, 1
        %vm1303 = vcmp.eq.s32.totalorder %v1295, 1
        %vm1304 = vcmp.eq.s32.totalorder %v1296, 1
        %vm1305 = vcmp.eq.s32.totalorder %v1297, 1
        %vm1306 = vmpackc.low %vm1298, %vm1298
        %vm1307 = vmpackc.low %vm1299, %vm1299
        %vm1308 = vmpackc.low %vm1300, %vm1300
        %vm1309 = vmpackc.low %vm1301, %vm1301
        %vm1310 = vmpackc.low %vm1302, %vm1302
        %vm1311 = vmpackc.low %vm1303, %vm1303
        %vm1312 = vmpackc.low %vm1304, %vm1304
        %vm1313 = vmpackc.low %vm1305, %vm1305
        %v1314 = vsel %vm1306, 65537, 0
        %v1315 = vsel %vm1307, 65537, 0
        %v1316 = vsel %vm1308, 65537, 0
        %v1317 = vsel %vm1309, 65537, 0
        %v1318 = vsel %vm1310, 65537, 0
        %v1319 = vsel %vm1311, 65537, 0
        %v1320 = vsel %vm1312, 65537, 0
        %v1321 = vsel %vm1313, 65537, 0
        %vm1322 = vsmask.f32 256
        %vm1323 = vsmask.f32 4368
        %vm1324 = vmor %vm1322, %vm1323
        %v1326 = vshrl.u32 %v1314, 16
        %v1328 = vrot.slane %v1326, 7
        %v1329 = vshll.u32 %v1314, 16
        %v1331 = vor.u32 %v1328, %v1329
        %v1332 = vrot.slane %v1328, 4
        %v1334 = vshrl.u32 %v1315, 16
        %v1336 = vrot.slane %v1334, 7
        %v1337 = vshll.u32 %v1315, 16
        %v1339 = vor.u32 %v1336, %v1337
        %v1340 = vsel %vm1324, %v1332, %v1339
        %v1341 = vrot.slane %v1336, 4
        %v1343 = vshrl.u32 %v1316, 16
        %v1345 = vrot.slane %v1343, 7
        %v1346 = vshll.u32 %v1316, 16
        %v1348 = vor.u32 %v1345, %v1346
        %v1349 = vsel %vm1324, %v1341, %v1348
        %v1350 = vrot.slane %v1345, 4
        %v1352 = vshrl.u32 %v1317, 16
        %v1354 = vrot.slane %v1352, 7
        %v1355 = vshll.u32 %v1317, 16
        %v1357 = vor.u32 %v1354, %v1355
        %v1358 = vsel %vm1324, %v1350, %v1357
        %v1359 = vrot.slane %v1354, 4
        %v1361 = vshrl.u32 %v1318, 16
        %v1363 = vrot.slane %v1361, 7
        %v1364 = vshll.u32 %v1318, 16
        %v1366 = vor.u32 %v1363, %v1364
        %v1367 = vsel %vm1324, %v1359, %v1366
        %v1368 = vrot.slane %v1363, 4
        %v1370 = vshrl.u32 %v1319, 16
        %v1372 = vrot.slane %v1370, 7
        %v1373 = vshll.u32 %v1319, 16
        %v1375 = vor.u32 %v1372, %v1373
        %v1376 = vsel %vm1324, %v1368, %v1375
        %v1377 = vrot.slane %v1372, 4
        %v1379 = vshrl.u32 %v1320, 16
        %v1381 = vrot.slane %v1379, 7
        %v1382 = vshll.u32 %v1320, 16
        %v1384 = vor.u32 %v1381, %v1382
        %v1385 = vsel %vm1324, %v1377, %v1384
        %v1386 = vrot.slane %v1381, 4
        %v1388 = vshrl.u32 %v1321, 16
        %v1390 = vrot.slane %v1388, 7
        %v1391 = vshll.u32 %v1321, 16
        %v1393 = vor.u32 %v1390, %v1391
        %v1394 = vsel %vm1324, %v1386, %v1393
        %v1395 = vrot.slane %v1390, 4
        %v1396 = vunpack.c.l.b16 %v1331
        %v1397 = vunpack.c.h.b16 %v1331
        %v1398 = vunpack.c.l.b16 0
        %v1399 = vunpack.c.h.b16 0
        %vm1400 = vcmp.ne.s32.totalorder %v1396, %v1398
        %vm1401 = vcmp.ne.s32.totalorder %v1397, %v1399
        %vm1402 = vmpackc.low %vm1401, %vm1400
        %v1403 = vunpack.c.l.b16 %v1340
        %v1404 = vunpack.c.h.b16 %v1340
        %v1405 = vunpack.c.l.b16 0
        %v1406 = vunpack.c.h.b16 0
        %vm1407 = vcmp.ne.s32.totalorder %v1403, %v1405
        %vm1408 = vcmp.ne.s32.totalorder %v1404, %v1406
        %vm1409 = vmpackc.low %vm1408, %vm1407
        %v1410 = vunpack.c.l.b16 %v1349
        %v1411 = vunpack.c.h.b16 %v1349
        %v1412 = vunpack.c.l.b16 0
        %v1413 = vunpack.c.h.b16 0
        %vm1414 = vcmp.ne.s32.totalorder %v1410, %v1412
        %vm1415 = vcmp.ne.s32.totalorder %v1411, %v1413
        %vm1416 = vmpackc.low %vm1415, %vm1414
        %v1417 = vunpack.c.l.b16 %v1358
        %v1418 = vunpack.c.h.b16 %v1358
        %v1419 = vunpack.c.l.b16 0
        %v1420 = vunpack.c.h.b16 0
        %vm1421 = vcmp.ne.s32.totalorder %v1417, %v1419
        %vm1422 = vcmp.ne.s32.totalorder %v1418, %v1420
        %vm1423 = vmpackc.low %vm1422, %vm1421
        %v1424 = vunpack.c.l.b16 %v1367
        %v1425 = vunpack.c.h.b16 %v1367
        %v1426 = vunpack.c.l.b16 0
        %v1427 = vunpack.c.h.b16 0
        %vm1428 = vcmp.ne.s32.totalorder %v1424, %v1426
        %vm1429 = vcmp.ne.s32.totalorder %v1425, %v1427
        %vm1430 = vmpackc.low %vm1429, %vm1428
        %v1431 = vunpack.c.l.b16 %v1376
        %v1432 = vunpack.c.h.b16 %v1376
        %v1433 = vunpack.c.l.b16 0
        %v1434 = vunpack.c.h.b16 0
        %vm1435 = vcmp.ne.s32.totalorder %v1431, %v1433
        %vm1436 = vcmp.ne.s32.totalorder %v1432, %v1434
        %vm1437 = vmpackc.low %vm1436, %vm1435
        %v1438 = vunpack.c.l.b16 %v1385
        %v1439 = vunpack.c.h.b16 %v1385
        %v1440 = vunpack.c.l.b16 0
        %v1441 = vunpack.c.h.b16 0
        %vm1442 = vcmp.ne.s32.totalorder %v1438, %v1440
        %vm1443 = vcmp.ne.s32.totalorder %v1439, %v1441
        %vm1444 = vmpackc.low %vm1443, %vm1442
        %v1445 = vunpack.c.l.b16 %v1394
        %v1446 = vunpack.c.h.b16 %v1394
        %v1447 = vunpack.c.l.b16 0
        %v1448 = vunpack.c.h.b16 0
        %vm1449 = vcmp.ne.s32.totalorder %v1445, %v1447
        %vm1450 = vcmp.ne.s32.totalorder %v1446, %v1448
        %vm1451 = vmpackc.low %vm1450, %vm1449
        %v1452 = vunpack.c.l.b16 %v1395
        %v1453 = vunpack.c.h.b16 %v1395
        %v1454 = vunpack.c.l.b16 0
        %v1455 = vunpack.c.h.b16 0
        %vm1456 = vcmp.ne.s32.totalorder %v1452, %v1454
        %vm1457 = vcmp.ne.s32.totalorder %v1453, %v1455
        %vm1458 = vmpackc.low %vm1457, %vm1456
        %v1459 = vsel %vm1402, 0, %v1079
        %v1460 = vsel %vm1409, 0, %v1080
        %v1461 = vsel %vm1416, 0, %v1081
        %v1462 = vsel %vm1423, 0, %v1082
        %v1463 = vsel %vm1430, 0, %v1083
        %v1464 = vsel %vm1437, 0, %v1084
        %v1465 = vsel %vm1444, 0, %v1085
        %v1466 = vsel %vm1451, 0, %v1086
        %v1467 = vsel %vm1458, 0, %v1281
        %v1468 = vld [vmem:[#allocation2 + $0x4] sm:$0x8]
        %v1469 = vld [vmem:[#allocation2 + $0x24] sm:$0xf]
        %v1470 = vsel %vm1215, 0, %v1468
        %v1471 = vsel %vm1222, 0, %v1080
        %v1472 = vsel %vm1229, 0, %v1081
        %v1473 = vsel %vm1236, 0, %v1082
        %v1474 = vsel %vm1243, 0, %v1083
        %v1475 = vsel %vm1250, 0, %v1084
        %v1476 = vsel %vm1257, 0, %v1085
        %v1477 = vsel %vm1264, 0, %v1086
        %v1478 = vsel %vm1271, 0, %v1469
        %v1479 = vld [vmem:[#allocation2 + $0x28] sm:$0x1]
        %v1480 = vsel %vm1402, 0, %v1080
        %v1481 = vsel %vm1409, 0, %v1081
        %v1482 = vsel %vm1416, 0, %v1082
        %v1483 = vsel %vm1423, 0, %v1083
        %v1484 = vsel %vm1430, 0, %v1084
        %v1485 = vsel %vm1437, 0, %v1085
        %v1486 = vsel %vm1444, 0, %v1086
        %v1487 = vsel %vm1451, 0, %v1469
        %v1488 = vsel %vm1458, 0, %v1479
        %v1489 = vld [vmem:[#allocation2 + $0x8] sm:$0x8]
        %v1490 = vld [vmem:[#allocation2 + $0x28] sm:$0xf]
        %v1491 = vsel %vm1215, 0, %v1489
        %v1492 = vsel %vm1222, 0, %v1081
        %v1493 = vsel %vm1229, 0, %v1082
        %v1494 = vsel %vm1236, 0, %v1083
        %v1495 = vsel %vm1243, 0, %v1084
        %v1496 = vsel %vm1250, 0, %v1085
        %v1497 = vsel %vm1257, 0, %v1086
        %v1498 = vsel %vm1264, 0, %v1469
        %v1499 = vsel %vm1271, 0, %v1490
        %v1500 = vld [vmem:[#allocation2 + $0x2c] sm:$0x1]
        %v1501 = vsel %vm1402, 0, %v1081
        %v1502 = vsel %vm1409, 0, %v1082
        %v1503 = vsel %vm1416, 0, %v1083
        %v1504 = vsel %vm1423, 0, %v1084
        %v1505 = vsel %vm1430, 0, %v1085
        %v1506 = vsel %vm1437, 0, %v1086
        %v1507 = vsel %vm1444, 0, %v1469
        %v1508 = vsel %vm1451, 0, %v1490
        %v1509 = vsel %vm1458, 0, %v1500
        %v1519 = vunpack.c.l.b16 %v1272
        %v1520 = vunpack.c.l.b16 %v1273
        %v1521 = vunpack.c.l.b16 %v1274
        %v1522 = vunpack.c.l.b16 %v1275
        %v1523 = vunpack.c.l.b16 %v1276
        %v1524 = vunpack.c.l.b16 %v1277
        %v1525 = vunpack.c.l.b16 %v1278
        %v1526 = vunpack.c.l.b16 %v1279
        %v1527 = vunpack.c.l.b16 %v1280
        %v1528 = vpack.c.b16 %v1520, %v1519
        %v1529 = vpack.c.b16 %v1522, %v1521
        %v1530 = vpack.c.b16 %v1524, %v1523
        %v1531 = vpack.c.b16 %v1526, %v1525
        %v1532 = vpack.c.b16 %v1527, %v1527
        %v1541 = vunpack.c.l.b16 %v1079
        %v1542 = vunpack.c.l.b16 %v1080
        %v1543 = vunpack.c.l.b16 %v1081
        %v1544 = vunpack.c.l.b16 %v1082
        %v1545 = vunpack.c.l.b16 %v1083
        %v1546 = vunpack.c.l.b16 %v1084
        %v1547 = vunpack.c.l.b16 %v1085
        %v1548 = vunpack.c.l.b16 %v1086
        %v1549 = vpack.c.b16 %v1542, %v1541
        %v1550 = vpack.c.b16 %v1544, %v1543
        %v1551 = vpack.c.b16 %v1546, %v1545
        %v1552 = vpack.c.b16 %v1548, %v1547
        %v1554 = vshrl.u32 %v1549, 16
        %v1556 = vrot.slane %v1554, 4
        %v1557 = vshll.u32 %v1549, 16
        %v1559 = vrot.slane %v1557, 5
        %v1560 = vor.u32 %v1556, %v1559
        %v1562 = vshrl.u32 %v1550, 16
        %v1564 = vrot.slane %v1562, 4
        %v1565 = vshll.u32 %v1550, 16
        %v1567 = vrot.slane %v1565, 5
        %v1568 = vor.u32 %v1564, %v1567
        %v1569 = vsel %vm1127, %v1560, %v1568
        %v1571 = vshrl.u32 %v1551, 16
        %v1573 = vrot.slane %v1571, 4
        %v1574 = vshll.u32 %v1551, 16
        %v1576 = vrot.slane %v1574, 5
        %v1577 = vor.u32 %v1573, %v1576
        %v1578 = vsel %vm1127, %v1568, %v1577
        %v1580 = vshrl.u32 %v1552, 16
        %v1582 = vrot.slane %v1580, 4
        %v1583 = vshll.u32 %v1552, 16
        %v1585 = vrot.slane %v1583, 5
        %v1586 = vor.u32 %v1582, %v1585
        %v1587 = vsel %vm1127, %v1577, %v1586
        %1588 = vrot.lane.b32.xlu0 %v1560, 32
        %v1589 = vpop.permute.xlu0 %1588
        %1590 = vrot.lane.b32.xlu0 %v1569, 32
        %v1591 = vpop.permute.xlu0 %1590
        %1592 = vrot.lane.b32.xlu0 %v1578, 32
        %v1593 = vpop.permute.xlu0 %1592
        %1594 = vrot.lane.b32.xlu0 %v1587, 32
        %v1595 = vpop.permute.xlu0 %1594
        %1596 = vrot.lane.b32.xlu0 %v1586, 32
        %v1597 = vpop.permute.xlu0 %1596
        %v1607 = vunpack.c.l.b16 %v1459
        %v1608 = vunpack.c.l.b16 %v1460
        %v1609 = vunpack.c.l.b16 %v1461
        %v1610 = vunpack.c.l.b16 %v1462
        %v1611 = vunpack.c.l.b16 %v1463
        %v1612 = vunpack.c.l.b16 %v1464
        %v1613 = vunpack.c.l.b16 %v1465
        %v1614 = vunpack.c.l.b16 %v1466
        %v1615 = vunpack.c.l.b16 %v1467
        %v1616 = vpack.c.b16 %v1608, %v1607
        %v1617 = vpack.c.b16 %v1610, %v1609
        %v1618 = vpack.c.b16 %v1612, %v1611
        %v1619 = vpack.c.b16 %v1614, %v1613
        %v1620 = vpack.c.b16 %v1615, %v1615
        %vm1621 = vcmask 1042432
        %v1622 = vrot.slane %v1616, 5
        %v1623 = vrot.slane %v1617, 5
        %v1624 = vsel %vm1621, %v1622, %v1623
        %v1625 = vrot.slane %v1618, 5
        %v1626 = vsel %vm1621, %v1623, %v1625
        %v1627 = vrot.slane %v1619, 5
        %v1628 = vsel %vm1621, %v1625, %v1627
        %v1629 = vrot.slane %v1620, 5
        %v1630 = vsel %vm1621, %v1627, %v1629
        %1631 = vrot.lane.b32.xlu0 %v1622, 64
        %v1632 = vpop.permute.xlu0 %1631
        %1633 = vrot.lane.b32.xlu0 %v1624, 64
        %v1634 = vpop.permute.xlu0 %1633
        %1635 = vrot.lane.b32.xlu0 %v1626, 64
        %v1636 = vpop.permute.xlu0 %1635
        %1637 = vrot.lane.b32.xlu0 %v1628, 64
        %v1638 = vpop.permute.xlu0 %1637
        %1639 = vrot.lane.b32.xlu0 %v1630, 64
        %v1640 = vpop.permute.xlu0 %1639
        %v1650 = vunpack.c.l.b16 %v1470
        %v1651 = vunpack.c.l.b16 %v1471
        %v1652 = vunpack.c.l.b16 %v1472
        %v1653 = vunpack.c.l.b16 %v1473
        %v1654 = vunpack.c.l.b16 %v1474
        %v1655 = vunpack.c.l.b16 %v1475
        %v1656 = vunpack.c.l.b16 %v1476
        %v1657 = vunpack.c.l.b16 %v1477
        %v1658 = vunpack.c.l.b16 %v1478
        %v1659 = vpack.c.b16 %v1651, %v1650
        %v1660 = vpack.c.b16 %v1653, %v1652
        %v1661 = vpack.c.b16 %v1655, %v1654
        %v1662 = vpack.c.b16 %v1657, %v1656
        %v1663 = vpack.c.b16 %v1658, %v1658
        %1664 = vrot.lane.b32.xlu0 %v1659, 96
        %v1665 = vpop.permute.xlu0 %1664
        %1666 = vrot.lane.b32.xlu0 %v1660, 96
        %v1667 = vpop.permute.xlu0 %1666
        %1668 = vrot.lane.b32.xlu0 %v1661, 96
        %v1669 = vpop.permute.xlu0 %1668
        %1670 = vrot.lane.b32.xlu0 %v1662, 96
        %v1671 = vpop.permute.xlu0 %1670
        %1672 = vrot.lane.b32.xlu0 %v1663, 96
        %v1673 = vpop.permute.xlu0 %1672
        %v1675 = vunpack.c.l.b16 %v1469
        %v1676 = vpack.c.b16 %v1543, %v1542
        %v1677 = vpack.c.b16 %v1545, %v1544
        %v1678 = vpack.c.b16 %v1547, %v1546
        %v1679 = vpack.c.b16 %v1675, %v1548
        %v1681 = vshrl.u32 %v1676, 16
        %v1683 = vrot.slane %v1681, 4
        %v1684 = vshll.u32 %v1676, 16
        %v1686 = vrot.slane %v1684, 5
        %v1687 = vor.u32 %v1683, %v1686
        %v1689 = vshrl.u32 %v1677, 16
        %v1691 = vrot.slane %v1689, 4
        %v1692 = vshll.u32 %v1677, 16
        %v1694 = vrot.slane %v1692, 5
        %v1695 = vor.u32 %v1691, %v1694
        %v1696 = vsel %vm1127, %v1687, %v1695
        %v1698 = vshrl.u32 %v1678, 16
        %v1700 = vrot.slane %v1698, 4
        %v1701 = vshll.u32 %v1678, 16
        %v1703 = vrot.slane %v1701, 5
        %v1704 = vor.u32 %v1700, %v1703
        %v1705 = vsel %vm1127, %v1695, %v1704
        %v1707 = vshrl.u32 %v1679, 16
        %v1709 = vrot.slane %v1707, 4
        %v1710 = vshll.u32 %v1679, 16
        %v1712 = vrot.slane %v1710, 5
        %v1713 = vor.u32 %v1709, %v1712
        %v1714 = vsel %vm1127, %v1704, %v1713
        %v1724 = vunpack.c.l.b16 %v1480
        %v1725 = vunpack.c.l.b16 %v1481
        %v1726 = vunpack.c.l.b16 %v1482
        %v1727 = vunpack.c.l.b16 %v1483
        %v1728 = vunpack.c.l.b16 %v1484
        %v1729 = vunpack.c.l.b16 %v1485
        %v1730 = vunpack.c.l.b16 %v1486
        %v1731 = vunpack.c.l.b16 %v1487
        %v1732 = vunpack.c.l.b16 %v1488
        %v1733 = vpack.c.b16 %v1725, %v1724
        %v1734 = vpack.c.b16 %v1727, %v1726
        %v1735 = vpack.c.b16 %v1729, %v1728
        %v1736 = vpack.c.b16 %v1731, %v1730
        %v1737 = vpack.c.b16 %v1732, %v1732
        %v1738 = vrot.slane %v1733, 5
        %v1739 = vrot.slane %v1734, 5
        %v1740 = vsel %vm1621, %v1738, %v1739
        %v1741 = vrot.slane %v1735, 5
        %v1742 = vsel %vm1621, %v1739, %v1741
        %v1743 = vrot.slane %v1736, 5
        %v1744 = vsel %vm1621, %v1741, %v1743
        %v1745 = vrot.slane %v1737, 5
        %v1746 = vsel %vm1621, %v1743, %v1745
        %1747 = vrot.lane.b32.xlu0 %v1738, 32
        %v1748 = vpop.permute.xlu0 %1747
        %1749 = vrot.lane.b32.xlu0 %v1740, 32
        %v1750 = vpop.permute.xlu0 %1749
        %1751 = vrot.lane.b32.xlu0 %v1742, 32
        %v1752 = vpop.permute.xlu0 %1751
        %1753 = vrot.lane.b32.xlu0 %v1744, 32
        %v1754 = vpop.permute.xlu0 %1753
        %1755 = vrot.lane.b32.xlu0 %v1746, 32
        %v1756 = vpop.permute.xlu0 %1755
        %v1766 = vunpack.c.l.b16 %v1491
        %v1767 = vunpack.c.l.b16 %v1492
        %v1768 = vunpack.c.l.b16 %v1493
        %v1769 = vunpack.c.l.b16 %v1494
        %v1770 = vunpack.c.l.b16 %v1495
        %v1771 = vunpack.c.l.b16 %v1496
        %v1772 = vunpack.c.l.b16 %v1497
        %v1773 = vunpack.c.l.b16 %v1498
        %v1774 = vunpack.c.l.b16 %v1499
        %v1775 = vpack.c.b16 %v1767, %v1766
        %v1776 = vpack.c.b16 %v1769, %v1768
        %v1777 = vpack.c.b16 %v1771, %v1770
        %v1778 = vpack.c.b16 %v1773, %v1772
        %v1779 = vpack.c.b16 %v1774, %v1774
        %1780 = vrot.lane.b32.xlu0 %v1775, 64
        %v1781 = vpop.permute.xlu0 %1780
        %1782 = vrot.lane.b32.xlu0 %v1776, 64
        %v1783 = vpop.permute.xlu0 %1782
        %1784 = vrot.lane.b32.xlu0 %v1777, 64
        %v1785 = vpop.permute.xlu0 %1784
        %1786 = vrot.lane.b32.xlu0 %v1778, 64
        %v1787 = vpop.permute.xlu0 %1786
        %1788 = vrot.lane.b32.xlu0 %v1779, 64
        %v1789 = vpop.permute.xlu0 %1788
        %v1791 = vunpack.c.l.b16 %v1490
        %v1792 = vpack.c.b16 %v1791, %v1675
        %v1794 = vshrl.u32 %v1792, 16
        %v1796 = vrot.slane %v1794, 4
        %v1797 = vshll.u32 %v1792, 16
        %v1799 = vrot.slane %v1797, 5
        %v1800 = vor.u32 %v1796, %v1799
        %v1801 = vsel %vm1127, %v1586, %v1800
        %1802 = vrot.lane.b32.xlu0 %v1568, 96
        %v1803 = vpop.permute.xlu0 %1802
        %1804 = vrot.lane.b32.xlu0 %v1578, 96
        %v1805 = vpop.permute.xlu0 %1804
        %1806 = vrot.lane.b32.xlu0 %v1587, 96
        %v1807 = vpop.permute.xlu0 %1806
        %1808 = vrot.lane.b32.xlu0 %v1801, 96
        %v1809 = vpop.permute.xlu0 %1808
        %1810 = vrot.lane.b32.xlu0 %v1800, 96
        %v1811 = vpop.permute.xlu0 %1810
        %v1821 = vunpack.c.l.b16 %v1501
        %v1822 = vunpack.c.l.b16 %v1502
        %v1823 = vunpack.c.l.b16 %v1503
        %v1824 = vunpack.c.l.b16 %v1504
        %v1825 = vunpack.c.l.b16 %v1505
        %v1826 = vunpack.c.l.b16 %v1506
        %v1827 = vunpack.c.l.b16 %v1507
        %v1828 = vunpack.c.l.b16 %v1508
        %v1829 = vunpack.c.l.b16 %v1509
        %v1830 = vpack.c.b16 %v1822, %v1821
        %v1831 = vpack.c.b16 %v1824, %v1823
        %v1832 = vpack.c.b16 %v1826, %v1825
        %v1833 = vpack.c.b16 %v1828, %v1827
        %v1834 = vpack.c.b16 %v1829, %v1829
        %v1835 = vrot.slane %v1830, 5
        %v1836 = vrot.slane %v1831, 5
        %v1837 = vsel %vm1621, %v1835, %v1836
        %v1838 = vrot.slane %v1832, 5
        %v1839 = vsel %vm1621, %v1836, %v1838
        %v1840 = vrot.slane %v1833, 5
        %v1841 = vsel %vm1621, %v1838, %v1840
        %v1842 = vrot.slane %v1834, 5
        %v1843 = vsel %vm1621, %v1840, %v1842
        %v1846 = vsel %vm659, %v1528, %v1589
        %v1849 = vsel %vm659, %v1529, %v1591
        %v1852 = vsel %vm659, %v1530, %v1593
        %v1855 = vsel %vm659, %v1531, %v1595
        %v1858 = vsel %vm659, %v1532, %v1597
        %vm1859 = vcmask 523264
        %v1861 = vsel %vm1859, %v1846, %v1632
        %v1863 = vsel %vm1859, %v1849, %v1634
        %v1865 = vsel %vm1859, %v1852, %v1636
        %v1867 = vsel %vm1859, %v1855, %v1638
        %v1869 = vsel %vm1859, %v1858, %v1640
        %vm1870 = vcmask 785408
        %v1872 = vsel %vm1870, %v1861, %v1665
        %v1874 = vsel %vm1870, %v1863, %v1667
        %v1876 = vsel %vm1870, %v1865, %v1669
        %v1878 = vsel %vm1870, %v1867, %v1671
        %v1880 = vsel %vm1870, %v1869, %v1673
        %v1883 = vsel %vm659, %v1687, %v1748
        %v1886 = vsel %vm659, %v1696, %v1750
        %v1889 = vsel %vm659, %v1705, %v1752
        %v1892 = vsel %vm659, %v1714, %v1754
        %v1895 = vsel %vm659, %v1713, %v1756
        %v1897 = vsel %vm1859, %v1883, %v1781
        %v1899 = vsel %vm1859, %v1886, %v1783
        %v1901 = vsel %vm1859, %v1889, %v1785
        %v1903 = vsel %vm1859, %v1892, %v1787
        %v1905 = vsel %vm1859, %v1895, %v1789
        %v1907 = vsel %vm1870, %v1897, %v1803
        %v1909 = vsel %vm1870, %v1899, %v1805
        %v1911 = vsel %vm1870, %v1901, %v1807
        %v1913 = vsel %vm1870, %v1903, %v1809
        %v1915 = vsel %vm1870, %v1905, %v1811
        %v1916 = vld [vmem:[%s5] sm:$0xf]
        %v1917 = vld [vmem:[%s5 + $0x4] sm:$0xf]
        %v1918 = vld [vmem:[%s5 + $0x8] sm:$0xf]
        %v1919 = vld [vmem:[%s5 + $0xc] sm:$0xf]
        %v1920 = vld [vmem:[%s5 + $0x10] sm:$0xf]
        %v1921 = vld [vmem:[%s5 + $0x14] sm:$0xf]
        %v1922 = vld [vmem:[%s5 + $0x18] sm:$0xf]
        %v1923 = vld [vmem:[%s5 + $0x1c] sm:$0xf]
        %v1924 = vld [vmem:[%s5 + $0x20] sm:$0xf]
        %v1925 = vld [vmem:[%s5 + $0x24] sm:$0xf]
        %v1926 = vld [vmem:[%s5 + $0x28] sm:$0xf]
        %v1927 = vld [vmem:[%s5 + $0x2c] sm:$0xf]
        %v1928 = vld [vmem:[%s5 + $0x30] sm:$0xf]
        %v1929 = vld [vmem:[%s5 + $0x34] sm:$0xf]
        %v1930 = vld [vmem:[%s5 + $0x38] sm:$0xf]
        %v1931 = vld [vmem:[%s5 + $0x3c] sm:$0xf]
        %v1932 = vld [vmem:[%s5 + $0x40] sm:$0xf]
        %v1933 = vld [vmem:[%s5 + $0x44] sm:$0xf]
        %v1934 = vld [vmem:[%s5 + $0x48] sm:$0xf]
        %v1935 = vld [vmem:[%s5 + $0x4c] sm:$0xf]
        %v1936 = vld [vmem:[%s5 + $0x50] sm:$0xf]
        %v1937 = vld [vmem:[%s5 + $0x54] sm:$0xf]
        %v1938 = vld [vmem:[%s5 + $0x58] sm:$0xf]
        %v1939 = vld [vmem:[%s5 + $0x5c] sm:$0xf]
        %v1940 = vld [vmem:[%s5 + $0x60] sm:$0xf]
        %v1941 = vld [vmem:[%s5 + $0x64] sm:$0xf]
        %v1942 = vld [vmem:[%s5 + $0x68] sm:$0xf]
        %v1943 = vld [vmem:[%s5 + $0x6c] sm:$0xf]
        %v1944 = vld [vmem:[%s5 + $0x70] sm:$0xf]
        %v1945 = vld [vmem:[%s5 + $0x74] sm:$0xf]
        %v1946 = vld [vmem:[%s5 + $0x78] sm:$0xf]
        %v1947 = vld [vmem:[%s5 + $0x7c] sm:$0xf]
        %v1948 = vld [vmem:[%s5 + $0x80] sm:$0xf]
        %v1949 = vld [vmem:[%s5 + $0x84] sm:$0xf]
        %v1950 = vld [vmem:[%s5 + $0x88] sm:$0xf]
        %v1951 = vld [vmem:[%s5 + $0x8c] sm:$0xf]
        %v1952 = vld [vmem:[%s6] sm:$0x1]
        %v1954 = vperm.slane %v1952, 0
        %vm1956 = vsmask.f32 4352
        %v1957 = vshrl.u32 %v1872, 16
        %v1959 = vrot.slane %v1957, 3
        %v1960 = vshll.u32 %v1872, 16
        %v1962 = vrot.slane %v1960, 4
        %v1963 = vor.u32 %v1959, %v1962
        %v1964 = vshrl.u32 %v1874, 16
        %v1966 = vrot.slane %v1964, 3
        %v1967 = vshll.u32 %v1874, 16
        %v1969 = vrot.slane %v1967, 4
        %v1970 = vor.u32 %v1966, %v1969
        %v1971 = vsel %vm1956, %v1963, %v1970
        %v1972 = vshrl.u32 %v1907, 16
        %v1974 = vrot.slane %v1972, 3
        %v1975 = vshll.u32 %v1907, 16
        %v1977 = vrot.slane %v1975, 4
        %v1978 = vor.u32 %v1974, %v1977
        %v1979 = vshrl.u32 %v1909, 16
        %v1981 = vrot.slane %v1979, 3
        %v1982 = vshll.u32 %v1909, 16
        %v1984 = vrot.slane %v1982, 4
        %v1985 = vor.u32 %v1981, %v1984
        %v1986 = vsel %vm1956, %v1978, %v1985
        %v1988 = vshrl.u32 %v1835, 16
        %v1990 = vrot.slane %v1988, 3
        %v1991 = vshll.u32 %v1835, 16
        %v1993 = vrot.slane %v1991, 4
        %v1994 = vor.u32 %v1990, %v1993
        %v1996 = vshrl.u32 %v1837, 16
        %v1998 = vrot.slane %v1996, 3
        %v1999 = vshll.u32 %v1837, 16
        %v2001 = vrot.slane %v1999, 4
        %v2002 = vor.u32 %v1998, %v2001
        %v2003 = vsel %vm1956, %v1994, %v2002
        %v2004 = vshrl.u32 %v1876, 16
        %v2006 = vrot.slane %v2004, 3
        %v2007 = vshll.u32 %v1876, 16
        %v2009 = vrot.slane %v2007, 4
        %v2010 = vor.u32 %v2006, %v2009
        %v2011 = vsel %vm1956, %v1970, %v2010
        %v2012 = vshrl.u32 %v1911, 16
        %v2014 = vrot.slane %v2012, 3
        %v2015 = vshll.u32 %v1911, 16
        %v2017 = vrot.slane %v2015, 4
        %v2018 = vor.u32 %v2014, %v2017
        %v2019 = vsel %vm1956, %v1985, %v2018
        %v2021 = vshrl.u32 %v1839, 16
        %v2023 = vrot.slane %v2021, 3
        %v2024 = vshll.u32 %v1839, 16
        %v2026 = vrot.slane %v2024, 4
        %v2027 = vor.u32 %v2023, %v2026
        %v2028 = vsel %vm1956, %v2002, %v2027
        %v2029 = vshrl.u32 %v1878, 16
        %v2031 = vrot.slane %v2029, 3
        %v2032 = vshll.u32 %v1878, 16
        %v2034 = vrot.slane %v2032, 4
        %v2035 = vor.u32 %v2031, %v2034
        %v2036 = vsel %vm1956, %v2010, %v2035
        %v2037 = vshrl.u32 %v1913, 16
        %v2039 = vrot.slane %v2037, 3
        %v2040 = vshll.u32 %v1913, 16
        %v2042 = vrot.slane %v2040, 4
        %v2043 = vor.u32 %v2039, %v2042
        %v2044 = vsel %vm1956, %v2018, %v2043
        %v2046 = vshrl.u32 %v1841, 16
        %v2048 = vrot.slane %v2046, 3
        %v2049 = vshll.u32 %v1841, 16
        %v2051 = vrot.slane %v2049, 4
        %v2052 = vor.u32 %v2048, %v2051
        %v2053 = vsel %vm1956, %v2027, %v2052
        %v2054 = vshrl.u32 %v1880, 16
        %v2056 = vrot.slane %v2054, 3
        %v2057 = vshll.u32 %v1880, 16
        %v2059 = vrot.slane %v2057, 4
        %v2060 = vor.u32 %v2056, %v2059
        %v2061 = vsel %vm1956, %v2035, %v2060
        %v2062 = vshrl.u32 %v1915, 16
        %v2064 = vrot.slane %v2062, 3
        %v2065 = vshll.u32 %v1915, 16
        %v2067 = vrot.slane %v2065, 4
        %v2068 = vor.u32 %v2064, %v2067
        %v2069 = vsel %vm1956, %v2043, %v2068
        %v2071 = vshrl.u32 %v1843, 16
        %v2073 = vrot.slane %v2071, 3
        %v2074 = vshll.u32 %v1843, 16
        %v2076 = vrot.slane %v2074, 4
        %v2077 = vor.u32 %v2073, %v2076
        %v2078 = vsel %vm1956, %v2052, %v2077
        %v2123 = vunpack.c.l.b16 %v1916
        %v2124 = vunpack.c.l.b16 %v1917
        %v2125 = vunpack.c.l.b16 %v1918
        %v2126 = vunpack.c.l.b16 %v1919
        %v2127 = vunpack.c.l.b16 %v1920
        %v2128 = vunpack.c.l.b16 %v1921
        %v2129 = vunpack.c.l.b16 %v1922
        %v2130 = vunpack.c.l.b16 %v1923
        %v2131 = vunpack.c.l.b16 %v1924
        %v2132 = vunpack.c.l.b16 %v1925
        %v2133 = vunpack.c.l.b16 %v1926
        %v2134 = vunpack.c.l.b16 %v1927
        %v2135 = vunpack.c.l.b16 %v1928
        %v2136 = vunpack.c.l.b16 %v1929
        %v2137 = vunpack.c.l.b16 %v1930
        %v2138 = vunpack.c.l.b16 %v1931
        %v2139 = vunpack.c.l.b16 %v1932
        %v2140 = vunpack.c.l.b16 %v1933
        %v2141 = vunpack.c.l.b16 %v1934
        %v2142 = vunpack.c.l.b16 %v1935
        %v2143 = vunpack.c.l.b16 %v1936
        %v2144 = vunpack.c.l.b16 %v1937
        %v2145 = vunpack.c.l.b16 %v1938
        %v2146 = vunpack.c.l.b16 %v1939
        %v2147 = vunpack.c.l.b16 %v1940
        %v2148 = vunpack.c.l.b16 %v1941
        %v2149 = vunpack.c.l.b16 %v1942
        %v2150 = vunpack.c.l.b16 %v1943
        %v2151 = vunpack.c.l.b16 %v1944
        %v2152 = vunpack.c.l.b16 %v1945
        %v2153 = vunpack.c.l.b16 %v1946
        %v2154 = vunpack.c.l.b16 %v1947
        %v2155 = vunpack.c.l.b16 %v1948
        %v2156 = vunpack.c.l.b16 %v1949
        %v2157 = vunpack.c.l.b16 %v1950
        %v2158 = vunpack.c.l.b16 %v1951
        %v2159 = vpack.c.b16 %v2124, %v2123
        %v2160 = vpack.c.b16 %v2126, %v2125
        %v2161 = vpack.c.b16 %v2128, %v2127
        %v2162 = vpack.c.b16 %v2130, %v2129
        %v2163 = vpack.c.b16 %v2132, %v2131
        %v2164 = vpack.c.b16 %v2134, %v2133
        %v2165 = vpack.c.b16 %v2136, %v2135
        %v2166 = vpack.c.b16 %v2138, %v2137
        %v2167 = vpack.c.b16 %v2140, %v2139
        %v2168 = vpack.c.b16 %v2142, %v2141
        %v2169 = vpack.c.b16 %v2144, %v2143
        %v2170 = vpack.c.b16 %v2146, %v2145
        %v2171 = vpack.c.b16 %v2148, %v2147
        %v2172 = vpack.c.b16 %v2150, %v2149
        %v2173 = vpack.c.b16 %v2152, %v2151
        %v2174 = vpack.c.b16 %v2154, %v2153
        %v2175 = vpack.c.b16 %v2156, %v2155
        %v2176 = vpack.c.b16 %v2158, %v2157
        %v2196 = vsel %vm659, %v2003, 0
        %v2199 = vsel %vm659, %v2028, 0
        %v2202 = vsel %vm659, %v2053, 0
        %v2205 = vsel %vm659, %v2078, 0
        %2207 = vmatpush.bf16.msra.mxu0 %v2166
        %2208 = vmatpush.bf16.msra.mxu0 %v2165
        %2209 = vmatpush.bf16.msra.mxu0 %v2164
        %2210 = vmatpush.bf16.msra.mxu0 %v2163
        %2211 = vmatpush.bf16.msra.mxu0 %v2162
        %2212 = vmatpush.bf16.msra.mxu0 %v2161
        %2213 = vmatpush.bf16.msra.mxu0 %v2160
        %2214 = vmatpush.bf16.msra.mxu0 %v2159
        %2215 = vmatmul.bf16.gmra.mxu0 %v1971
        %v2216 = vpop.f32.mrf.mxu0
        %v2217 = vadd.f32 %v1954, %v2216
        %v2218 = vpop.f32.mrf.mxu0
        %v2219 = vadd.f32 %v1954, %v2218
        %2220 = vmatmul.bf16.gmra.mxu0 %v2011
        %v2221 = vpop.f32.mrf.mxu0
        %v2222 = vadd.f32 %v1954, %v2221
        %v2223 = vpop.f32.mrf.mxu0
        %v2224 = vadd.f32 %v1954, %v2223
        %2225 = vmatmul.bf16.gmra.mxu0 %v2036
        %v2226 = vpop.f32.mrf.mxu0
        %v2227 = vadd.f32 %v1954, %v2226
        %v2228 = vpop.f32.mrf.mxu0
        %v2229 = vadd.f32 %v1954, %v2228
        %2230 = vmatmul.bf16.gmra.mxu0 %v2061
        %v2231 = vpop.f32.mrf.mxu0
        %v2232 = vadd.f32 %v1954, %v2231
        %v2233 = vpop.f32.mrf.mxu0
        %v2234 = vadd.f32 %v1954, %v2233
        %2235 = vdwg.mxu0
        %2236 = vmatpush.bf16.msra.mxu0 %v2174
        %2237 = vmatpush.bf16.msra.mxu0 %v2173
        %2238 = vmatpush.bf16.msra.mxu0 %v2172
        %2239 = vmatpush.bf16.msra.mxu0 %v2171
        %2240 = vmatpush.bf16.msra.mxu0 %v2170
        %2241 = vmatpush.bf16.msra.mxu0 %v2169
        %2242 = vmatpush.bf16.msra.mxu0 %v2168
        %2243 = vmatpush.bf16.msra.mxu0 %v2167
        %2244 = vmatmul.bf16.gmra.mxu0 %v1986
        %v2245 = vpop.f32.mrf.mxu0
        %v2246 = vadd.f32 %v2217, %v2245
        %v2247 = vpop.f32.mrf.mxu0
        %v2248 = vadd.f32 %v2219, %v2247
        %2249 = vmatmul.bf16.gmra.mxu0 %v2019
        %v2250 = vpop.f32.mrf.mxu0
        %v2251 = vadd.f32 %v2222, %v2250
        %v2252 = vpop.f32.mrf.mxu0
        %v2253 = vadd.f32 %v2224, %v2252
        %2254 = vmatmul.bf16.gmra.mxu0 %v2044
        %v2255 = vpop.f32.mrf.mxu0
        %v2256 = vadd.f32 %v2227, %v2255
        %v2257 = vpop.f32.mrf.mxu0
        %v2258 = vadd.f32 %v2229, %v2257
        %2259 = vmatmul.bf16.gmra.mxu0 %v2069
        %v2260 = vpop.f32.mrf.mxu0
        %v2261 = vadd.f32 %v2232, %v2260
        %v2262 = vpop.f32.mrf.mxu0
        %v2263 = vadd.f32 %v2234, %v2262
        %2264 = vdwg.mxu0
        %2265 = vmatpush.bf16.msra.mxu0 0
        %2266 = vmatpush.bf16.msra.mxu0 0
        %2267 = vmatpush.bf16.msra.mxu0 0
        %2268 = vmatpush.bf16.msra.mxu0 0
        %2269 = vmatpush.bf16.msra.mxu0 0
        %2270 = vmatpush.bf16.msra.mxu0 0
        %2271 = vmatpush.bf16.msra.mxu0 %v2176
        %2272 = vmatpush.bf16.msra.mxu0 %v2175
        %2273 = vmatmul.bf16.gmra.mxu0 %v2196
        %v2274 = vpop.f32.mrf.mxu0
        %v2275 = vadd.f32 %v2246, %v2274
        %v2276 = vpop.f32.mrf.mxu0
        %v2277 = vadd.f32 %v2248, %v2276
        %2278 = vmatmul.bf16.gmra.mxu0 %v2199
        %v2279 = vpop.f32.mrf.mxu0
        %v2280 = vadd.f32 %v2251, %v2279
        %v2281 = vpop.f32.mrf.mxu0
        %v2282 = vadd.f32 %v2253, %v2281
        %2283 = vmatmul.bf16.gmra.mxu0 %v2202
        %v2284 = vpop.f32.mrf.mxu0
        %v2285 = vadd.f32 %v2256, %v2284
        %v2286 = vpop.f32.mrf.mxu0
        %v2287 = vadd.f32 %v2258, %v2286
        %2288 = vmatmul.bf16.gmra.mxu0 %v2205
        %v2289 = vpop.f32.mrf.mxu0
        %v2290 = vadd.f32 %v2261, %v2289
        %v2291 = vpop.f32.mrf.mxu0
        %v2292 = vadd.f32 %v2263, %v2291
        %2293 = vdwg.mxu0
        %v2294 = vld [vmem:[%s641] sm:$0x1]
        %v2296 = vperm.slane %v2294, 0
        %v2298 = vadd.f32 %v2275, %v2296
        %v2299 = vadd.f32 %v2277, %v2296
        %v2300 = vadd.f32 %v2280, %v2296
        %v2301 = vadd.f32 %v2282, %v2296
        %v2302 = vadd.f32 %v2285, %v2296
        %v2303 = vadd.f32 %v2287, %v2296
        %v2304 = vadd.f32 %v2290, %v2296
        %v2305 = vadd.f32 %v2292, %v2296
        %v2306 = vld [vmem:[%s7] sm:$0x1]
        %v2307 = vld [vmem:[%s8] sm:$0x1]
        %v2308 = vld [vmem:[%s9] sm:$0xff]
        %v2309 = vld [vmem:[%s9 + $0x8] sm:$0xff]
        %v2310 = vld [vmem:[%s9 + $0x10] sm:$0xff]
        %v2311 = vld [vmem:[%s9 + $0x18] sm:$0xff]
        %v2312 = vld [vmem:[%s9 + $0x20] sm:$0xff]
        %v2313 = vld [vmem:[%s9 + $0x28] sm:$0xff]
        %v2314 = vld [vmem:[%s9 + $0x30] sm:$0xff]
        %v2315 = vld [vmem:[%s9 + $0x38] sm:$0xff]
        %v2316 = vsel %vm1859, %v2298, 0.0
        %v2317 = vsel %vm1859, %v2299, 0.0
        %v2318 = vadd.f32 %v2316, %v2317
        %v2319 = vsel %vm1859, %v2300, 0.0
        %v2320 = vadd.f32 %v2318, %v2319
        %v2321 = vsel %vm1859, %v2301, 0.0
        %v2322 = vadd.f32 %v2320, %v2321
        %v2323 = vsel %vm1859, %v2302, 0.0
        %v2324 = vadd.f32 %v2322, %v2323
        %v2325 = vsel %vm1859, %v2303, 0.0
        %v2326 = vadd.f32 %v2324, %v2325
        %v2327 = vsel %vm1859, %v2304, 0.0
        %v2328 = vadd.f32 %v2326, %v2327
        %v2329 = vsel %vm1859, %v2305, 0.0
        %v2330 = vadd.f32 %v2328, %v2329
        %v2331 = vrot.slane %v2330, 4
        %v2332 = vadd.f32 %v2330, %v2331
        %v2333 = vrot.slane %v2332, 2
        %v2334 = vadd.f32 %v2332, %v2333
        %v2335 = vrot.slane %v2334, 1
        %v2336 = vadd.f32 %v2334, %v2335
        %v2337 = vmul.f32 %v2298, %v2298
        %v2338 = vmul.f32 %v2299, %v2299
        %v2339 = vmul.f32 %v2300, %v2300
        %v2340 = vmul.f32 %v2301, %v2301
        %v2341 = vmul.f32 %v2302, %v2302
        %v2342 = vmul.f32 %v2303, %v2303
        %v2343 = vmul.f32 %v2304, %v2304
        %v2344 = vmul.f32 %v2305, %v2305
        %v2345 = vsel %vm1859, %v2337, 0.0
        %v2346 = vsel %vm1859, %v2338, 0.0
        %v2347 = vadd.f32 %v2345, %v2346
        %v2348 = vsel %vm1859, %v2339, 0.0
        %v2349 = vadd.f32 %v2347, %v2348
        %v2350 = vsel %vm1859, %v2340, 0.0
        %v2351 = vadd.f32 %v2349, %v2350
        %v2352 = vsel %vm1859, %v2341, 0.0
        %v2353 = vadd.f32 %v2351, %v2352
        %v2354 = vsel %vm1859, %v2342, 0.0
        %v2355 = vadd.f32 %v2353, %v2354
        %v2356 = vsel %vm1859, %v2343, 0.0
        %v2357 = vadd.f32 %v2355, %v2356
        %v2358 = vsel %vm1859, %v2344, 0.0
        %v2359 = vadd.f32 %v2357, %v2358
        %v2360 = vrot.slane %v2359, 4
        %v2361 = vadd.f32 %v2359, %v2360
        %v2362 = vrot.slane %v2361, 2
        %v2363 = vadd.f32 %v2361, %v2362
        %v2364 = vrot.slane %v2363, 1
        %v2365 = vadd.f32 %v2363, %v2364
        %v2366 = vsel %vm710, %v2336, %v2365
        %v2368 = vsel %vm1859, %v2366, 0
        %2370 = vmatpush.msra.mxu0 0.0
        %2371 = vmatpush.msra.mxu0 0.0
        %2372 = vmatpush.msra.mxu0 0.0
        %2373 = vmatpush.msra.mxu0 0.0
        %2374 = vmatpush.msra.mxu0 0.0
        %2375 = vmatpush.msra.mxu0 0.0
        %2376 = vmatpush.msra.mxu0 0.0
        %2377 = vmatpush.msra.mxu0 0.0
        %2378 = vmatpush.msra.mxu0 %v2315
        %2379 = vmatpush.msra.mxu0 %v2314
        %2380 = vmatpush.msra.mxu0 %v2313
        %2381 = vmatpush.msra.mxu0 %v2312
        %2382 = vmatpush.msra.mxu0 %v2311
        %2383 = vmatpush.msra.mxu0 %v2310
        %2384 = vmatpush.msra.mxu0 %v2309
        %2385 = vmatpush.msra.mxu0 %v2308
        %2386 = vmatmul.f32.gmra.mxu0 %v2368
        %v2387 = vpop.f32.mrf.mxu0
        %v2388 = vadd.f32 0.0, %v2387
        %2389 = vdwg.mxu0
        %v2390 = vmul.f32 %v2388, 0.0078125
        %v2391 = vmul.f32 %v2390, %v2390
        %v2393 = vrot.slane %v2391, 7
        %v2395 = vsub.f32 %v2390, %v2393
        %v2396 = vperm.slane %v2390, 0
        %v2397 = vsub.f32 %v2298, %v2396
        %v2398 = vsub.f32 %v2299, %v2396
        %v2399 = vsub.f32 %v2300, %v2396
        %v2400 = vsub.f32 %v2301, %v2396
        %v2401 = vsub.f32 %v2302, %v2396
        %v2402 = vsub.f32 %v2303, %v2396
        %v2403 = vsub.f32 %v2304, %v2396
        %v2404 = vsub.f32 %v2305, %v2396
        %v2405 = vadd.f32 %v2395, 1e-05
        %v2406 = vrsqrt.pop %v2405
        %v2407 = vmul.f32 %v2406, %v2405
        %v2408 = vmul.f32 %v2407, %v2406
        %v2409 = vmul.f32 0.5, %v2408
        %v2410 = vsub.f32 1.5, %v2409
        %v2411 = vmul.f32 %v2406, %v2410
        %vm2412 = vweird.f32 %v2405
        %vm2413 = vweird.f32 %v2406
        %vm2414 = vmor %vm2412, %vm2413
        %v2415 = vsel %vm2414, %v2406, %v2411
        %v2416 = vperm.slane %v2415, 1
        %v2417 = vmul.f32 %v2397, %v2416
        %v2418 = vmul.f32 %v2398, %v2416
        %v2419 = vmul.f32 %v2399, %v2416
        %v2420 = vmul.f32 %v2400, %v2416
        %v2421 = vmul.f32 %v2401, %v2416
        %v2422 = vmul.f32 %v2402, %v2416
        %v2423 = vmul.f32 %v2403, %v2416
        %v2424 = vmul.f32 %v2404, %v2416
        %v2426 = vperm.slane %v2306, 0
        %v2428 = vmul.f32 %v2417, %v2426
        %v2429 = vmul.f32 %v2418, %v2426
        %v2430 = vmul.f32 %v2419, %v2426
        %v2431 = vmul.f32 %v2420, %v2426
        %v2432 = vmul.f32 %v2421, %v2426
        %v2433 = vmul.f32 %v2422, %v2426
        %v2434 = vmul.f32 %v2423, %v2426
        %v2435 = vmul.f32 %v2424, %v2426
        %v2437 = vperm.slane %v2307, 0
        %v2439 = vadd.f32 %v2428, %v2437
        %v2440 = vadd.f32 %v2429, %v2437
        %v2441 = vadd.f32 %v2430, %v2437
        %v2442 = vadd.f32 %v2431, %v2437
        %v2443 = vadd.f32 %v2432, %v2437
        %v2444 = vadd.f32 %v2433, %v2437
        %v2445 = vadd.f32 %v2434, %v2437
        %v2446 = vadd.f32 %v2435, %v2437
        %v2447 = vxor.u32 %v2439, 2147483648
        %v2448 = vxor.u32 %v2440, 2147483648
        %v2449 = vxor.u32 %v2441, 2147483648
        %v2450 = vxor.u32 %v2442, 2147483648
        %v2451 = vxor.u32 %v2443, 2147483648
        %v2452 = vxor.u32 %v2444, 2147483648
        %v2453 = vxor.u32 %v2445, 2147483648
        %v2454 = vxor.u32 %v2446, 2147483648
        %v2455 = vmul.f32 %v2447, 1.442695
        %v2456 = vpow.pop %v2455
        %v2457 = vmul.f32 %v2448, 1.442695
        %v2458 = vpow.pop %v2457
        %v2459 = vmul.f32 %v2449, 1.442695
        %v2460 = vpow.pop %v2459
        %v2461 = vmul.f32 %v2450, 1.442695
        %v2462 = vpow.pop %v2461
        %v2463 = vmul.f32 %v2451, 1.442695
        %v2464 = vpow.pop %v2463
        %v2465 = vmul.f32 %v2452, 1.442695
        %v2466 = vpow.pop %v2465
        %v2467 = vmul.f32 %v2453, 1.442695
        %v2468 = vpow.pop %v2467
        %v2469 = vmul.f32 %v2454, 1.442695
        %v2470 = vpow.pop %v2469
        %v2471 = vadd.f32 %v2456, 1.0
        %v2472 = vadd.f32 %v2458, 1.0
        %v2473 = vadd.f32 %v2460, 1.0
        %v2474 = vadd.f32 %v2462, 1.0
        %v2475 = vadd.f32 %v2464, 1.0
        %v2476 = vadd.f32 %v2466, 1.0
        %v2477 = vadd.f32 %v2468, 1.0
        %v2478 = vadd.f32 %v2470, 1.0
        %v2479 = vrcp.pop %v2471
        %v2480 = vmul.f32 %v2471, %v2479
        %v2481 = vsub.f32 1.0, %v2480
        %v2482 = vmul.f32 %v2479, %v2481
        %v2483 = vadd.f32 %v2479, %v2482
        %vm2484 = vweird.f32 %v2471
        %vm2485 = vweird.f32 %v2479
        %vm2486 = vmor %vm2484, %vm2485
        %v2487 = vsel %vm2486, %v2479, %v2483
        %v2488 = vand.u32 2147483647, %v2471
        %vm2489 = vcmp.eq.f32.partialorder %v2488, 8.507059e+37
        %v2490 = vand.u32 %v2471, 2147483648
        %v2491 = vor.u32 1.1754944e-38, %v2490
        %v2492 = vsel %vm2489, %v2491, %v2487
        %v2493 = vmul.f32 1.0, %v2492
        %v2494 = vrcp.pop %v2472
        %v2495 = vmul.f32 %v2472, %v2494
        %v2496 = vsub.f32 1.0, %v2495
        %v2497 = vmul.f32 %v2494, %v2496
        %v2498 = vadd.f32 %v2494, %v2497
        %vm2499 = vweird.f32 %v2472
        %vm2500 = vweird.f32 %v2494
        %vm2501 = vmor %vm2499, %vm2500
        %v2502 = vsel %vm2501, %v2494, %v2498
        %v2503 = vand.u32 2147483647, %v2472
        %vm2504 = vcmp.eq.f32.partialorder %v2503, 8.507059e+37
        %v2505 = vand.u32 %v2472, 2147483648
        %v2506 = vor.u32 1.1754944e-38, %v2505
        %v2507 = vsel %vm2504, %v2506, %v2502
        %v2508 = vmul.f32 1.0, %v2507
        %v2509 = vrcp.pop %v2473
        %v2510 = vmul.f32 %v2473, %v2509
        %v2511 = vsub.f32 1.0, %v2510
        %v2512 = vmul.f32 %v2509, %v2511
        %v2513 = vadd.f32 %v2509, %v2512
        %vm2514 = vweird.f32 %v2473
        %vm2515 = vweird.f32 %v2509
        %vm2516 = vmor %vm2514, %vm2515
        %v2517 = vsel %vm2516, %v2509, %v2513
        %v2518 = vand.u32 2147483647, %v2473
        %vm2519 = vcmp.eq.f32.partialorder %v2518, 8.507059e+37
        %v2520 = vand.u32 %v2473, 2147483648
        %v2521 = vor.u32 1.1754944e-38, %v2520
        %v2522 = vsel %vm2519, %v2521, %v2517
        %v2523 = vmul.f32 1.0, %v2522
        %v2524 = vrcp.pop %v2474
        %v2525 = vmul.f32 %v2474, %v2524
        %v2526 = vsub.f32 1.0, %v2525
        %v2527 = vmul.f32 %v2524, %v2526
        %v2528 = vadd.f32 %v2524, %v2527
        %vm2529 = vweird.f32 %v2474
        %vm2530 = vweird.f32 %v2524
        %vm2531 = vmor %vm2529, %vm2530
        %v2532 = vsel %vm2531, %v2524, %v2528
        %v2533 = vand.u32 2147483647, %v2474
        %vm2534 = vcmp.eq.f32.partialorder %v2533, 8.507059e+37
        %v2535 = vand.u32 %v2474, 2147483648
        %v2536 = vor.u32 1.1754944e-38, %v2535
        %v2537 = vsel %vm2534, %v2536, %v2532
        %v2538 = vmul.f32 1.0, %v2537
        %v2539 = vrcp.pop %v2475
        %v2540 = vmul.f32 %v2475, %v2539
        %v2541 = vsub.f32 1.0, %v2540
        %v2542 = vmul.f32 %v2539, %v2541
        %v2543 = vadd.f32 %v2539, %v2542
        %vm2544 = vweird.f32 %v2475
        %vm2545 = vweird.f32 %v2539
        %vm2546 = vmor %vm2544, %vm2545
        %v2547 = vsel %vm2546, %v2539, %v2543
        %v2548 = vand.u32 2147483647, %v2475
        %vm2549 = vcmp.eq.f32.partialorder %v2548, 8.507059e+37
        %v2550 = vand.u32 %v2475, 2147483648
        %v2551 = vor.u32 1.1754944e-38, %v2550
        %v2552 = vsel %vm2549, %v2551, %v2547
        %v2553 = vmul.f32 1.0, %v2552
        %v2554 = vrcp.pop %v2476
        %v2555 = vmul.f32 %v2476, %v2554
        %v2556 = vsub.f32 1.0, %v2555
        %v2557 = vmul.f32 %v2554, %v2556
        %v2558 = vadd.f32 %v2554, %v2557
        %vm2559 = vweird.f32 %v2476
        %vm2560 = vweird.f32 %v2554
        %vm2561 = vmor %vm2559, %vm2560
        %v2562 = vsel %vm2561, %v2554, %v2558
        %v2563 = vand.u32 2147483647, %v2476
        %vm2564 = vcmp.eq.f32.partialorder %v2563, 8.507059e+37
        %v2565 = vand.u32 %v2476, 2147483648
        %v2566 = vor.u32 1.1754944e-38, %v2565
        %v2567 = vsel %vm2564, %v2566, %v2562
        %v2568 = vmul.f32 1.0, %v2567
        %v2569 = vrcp.pop %v2477
        %v2570 = vmul.f32 %v2477, %v2569
        %v2571 = vsub.f32 1.0, %v2570
        %v2572 = vmul.f32 %v2569, %v2571
        %v2573 = vadd.f32 %v2569, %v2572
        %vm2574 = vweird.f32 %v2477
        %vm2575 = vweird.f32 %v2569
        %vm2576 = vmor %vm2574, %vm2575
        %v2577 = vsel %vm2576, %v2569, %v2573
        %v2578 = vand.u32 2147483647, %v2477
        %vm2579 = vcmp.eq.f32.partialorder %v2578, 8.507059e+37
        %v2580 = vand.u32 %v2477, 2147483648
        %v2581 = vor.u32 1.1754944e-38, %v2580
        %v2582 = vsel %vm2579, %v2581, %v2577
        %v2583 = vmul.f32 1.0, %v2582
        %v2584 = vrcp.pop %v2478
        %v2585 = vmul.f32 %v2478, %v2584
        %v2586 = vsub.f32 1.0, %v2585
        %v2587 = vmul.f32 %v2584, %v2586
        %v2588 = vadd.f32 %v2584, %v2587
        %vm2589 = vweird.f32 %v2478
        %vm2590 = vweird.f32 %v2584
        %vm2591 = vmor %vm2589, %vm2590
        %v2592 = vsel %vm2591, %v2584, %v2588
        %v2593 = vand.u32 2147483647, %v2478
        %vm2594 = vcmp.eq.f32.partialorder %v2593, 8.507059e+37
        %v2595 = vand.u32 %v2478, 2147483648
        %v2596 = vor.u32 1.1754944e-38, %v2595
        %v2597 = vsel %vm2594, %v2596, %v2592
        %v2598 = vmul.f32 1.0, %v2597
        %v2599 = vmul.f32 %v2439, %v2493
        %v2600 = vmul.f32 %v2440, %v2508
        %v2601 = vmul.f32 %v2441, %v2523
        %v2602 = vmul.f32 %v2442, %v2538
        %v2603 = vmul.f32 %v2443, %v2553
        %v2604 = vmul.f32 %v2444, %v2568
        %v2605 = vmul.f32 %v2445, %v2583
        %v2606 = vmul.f32 %v2446, %v2598
        %vm2607 = vcmask 519168
        %2608 = vst.msk [vmem:[#allocation3] sm:$0xf] %vm2607, 0
        %2609 = vst.msk [vmem:[#allocation3 + $0x4] sm:$0xf] %vm2607, 0
        %2610 = vst.msk [vmem:[#allocation3 + $0x28] sm:$0xf] %vm2607, 0
        %2611 = vst.msk [vmem:[#allocation3 + $0x2c] sm:$0xf] %vm2607, 0
        %v2612 = vpack.c.bf16 %v2599, %v2599
        %v2613 = vpack.c.bf16 %v2600, %v2600
        %v2614 = vpack.c.bf16 %v2601, %v2601
        %v2615 = vpack.c.bf16 %v2602, %v2602
        %v2616 = vpack.c.bf16 %v2603, %v2603
        %v2617 = vpack.c.bf16 %v2604, %v2604
        %v2618 = vpack.c.bf16 %v2605, %v2605
        %v2619 = vpack.c.bf16 %v2606, %v2606
        %2620 = vst.msk [vmem:[#allocation3 + $0x8] sm:$0xf] %vm2607, %v2612
        %2621 = vst.msk [vmem:[#allocation3 + $0xc] sm:$0xf] %vm2607, %v2613
        %2622 = vst.msk [vmem:[#allocation3 + $0x10] sm:$0xf] %vm2607, %v2614
        %2623 = vst.msk [vmem:[#allocation3 + $0x14] sm:$0xf] %vm2607, %v2615
        %2624 = vst.msk [vmem:[#allocation3 + $0x18] sm:$0xf] %vm2607, %v2616
        %2625 = vst.msk [vmem:[#allocation3 + $0x1c] sm:$0xf] %vm2607, %v2617
        %2626 = vst.msk [vmem:[#allocation3 + $0x20] sm:$0xf] %vm2607, %v2618
        %2627 = vst.msk [vmem:[#allocation3 + $0x24] sm:$0xf] %vm2607, %v2619
        %v2628 = vld [vmem:[#allocation3] sm:$0x8]
        %v2629 = vld [vmem:[#allocation3 + $0x4] sm:$0xf]
        %v2630 = vld [vmem:[#allocation3 + $0x8] sm:$0xf]
        %v2631 = vld [vmem:[#allocation3 + $0xc] sm:$0xf]
        %v2632 = vld [vmem:[#allocation3 + $0x10] sm:$0xf]
        %v2633 = vld [vmem:[#allocation3 + $0x14] sm:$0xf]
        %v2634 = vld [vmem:[#allocation3 + $0x18] sm:$0xf]
        %v2635 = vld [vmem:[#allocation3 + $0x1c] sm:$0xf]
        %v2636 = vld [vmem:[#allocation3 + $0x20] sm:$0xf]
        %v2637 = vsel %vm1215, 0, %v2628
        %v2638 = vsel %vm1222, 0, %v2629
        %v2639 = vsel %vm1229, 0, %v2630
        %v2640 = vsel %vm1236, 0, %v2631
        %v2641 = vsel %vm1243, 0, %v2632
        %v2642 = vsel %vm1250, 0, %v2633
        %v2643 = vsel %vm1257, 0, %v2634
        %v2644 = vsel %vm1264, 0, %v2635
        %v2645 = vsel %vm1271, 0, %v2636
        %v2646 = vld [vmem:[#allocation3 + $0x24] sm:$0x1]
        %v2647 = vsel %vm1402, 0, %v2629
        %v2648 = vsel %vm1409, 0, %v2630
        %v2649 = vsel %vm1416, 0, %v2631
        %v2650 = vsel %vm1423, 0, %v2632
        %v2651 = vsel %vm1430, 0, %v2633
        %v2652 = vsel %vm1437, 0, %v2634
        %v2653 = vsel %vm1444, 0, %v2635
        %v2654 = vsel %vm1451, 0, %v2636
        %v2655 = vsel %vm1458, 0, %v2646
        %v2656 = vld [vmem:[#allocation3 + $0x4] sm:$0x8]
        %v2657 = vld [vmem:[#allocation3 + $0x24] sm:$0xf]
        %v2658 = vsel %vm1215, 0, %v2656
        %v2659 = vsel %vm1222, 0, %v2630
        %v2660 = vsel %vm1229, 0, %v2631
        %v2661 = vsel %vm1236, 0, %v2632
        %v2662 = vsel %vm1243, 0, %v2633
        %v2663 = vsel %vm1250, 0, %v2634
        %v2664 = vsel %vm1257, 0, %v2635
        %v2665 = vsel %vm1264, 0, %v2636
        %v2666 = vsel %vm1271, 0, %v2657
        %v2667 = vld [vmem:[#allocation3 + $0x28] sm:$0x1]
        %v2668 = vsel %vm1402, 0, %v2630
        %v2669 = vsel %vm1409, 0, %v2631
        %v2670 = vsel %vm1416, 0, %v2632
        %v2671 = vsel %vm1423, 0, %v2633
        %v2672 = vsel %vm1430, 0, %v2634
        %v2673 = vsel %vm1437, 0, %v2635
        %v2674 = vsel %vm1444, 0, %v2636
        %v2675 = vsel %vm1451, 0, %v2657
        %v2676 = vsel %vm1458, 0, %v2667
        %v2677 = vld [vmem:[#allocation3 + $0x8] sm:$0x8]
        %v2678 = vld [vmem:[#allocation3 + $0x28] sm:$0xf]
        %v2679 = vsel %vm1215, 0, %v2677
        %v2680 = vsel %vm1222, 0, %v2631
        %v2681 = vsel %vm1229, 0, %v2632
        %v2682 = vsel %vm1236, 0, %v2633
        %v2683 = vsel %vm1243, 0, %v2634
        %v2684 = vsel %vm1250, 0, %v2635
        %v2685 = vsel %vm1257, 0, %v2636
        %v2686 = vsel %vm1264, 0, %v2657
        %v2687 = vsel %vm1271, 0, %v2678
        %v2688 = vld [vmem:[#allocation3 + $0x2c] sm:$0x1]
        %v2689 = vsel %vm1402, 0, %v2631
        %v2690 = vsel %vm1409, 0, %v2632
        %v2691 = vsel %vm1416, 0, %v2633
        %v2692 = vsel %vm1423, 0, %v2634
        %v2693 = vsel %vm1430, 0, %v2635
        %v2694 = vsel %vm1437, 0, %v2636
        %v2695 = vsel %vm1444, 0, %v2657
        %v2696 = vsel %vm1451, 0, %v2678
        %v2697 = vsel %vm1458, 0, %v2688
        %v2707 = vunpack.c.l.b16 %v2637
        %v2708 = vunpack.c.l.b16 %v2638
        %v2709 = vunpack.c.l.b16 %v2639
        %v2710 = vunpack.c.l.b16 %v2640
        %v2711 = vunpack.c.l.b16 %v2641
        %v2712 = vunpack.c.l.b16 %v2642
        %v2713 = vunpack.c.l.b16 %v2643
        %v2714 = vunpack.c.l.b16 %v2644
        %v2715 = vunpack.c.l.b16 %v2645
        %v2716 = vpack.c.b16 %v2708, %v2707
        %v2717 = vpack.c.b16 %v2710, %v2709
        %v2718 = vpack.c.b16 %v2712, %v2711
        %v2719 = vpack.c.b16 %v2714, %v2713
        %v2720 = vpack.c.b16 %v2715, %v2715
        %v2729 = vunpack.c.l.b16 %v2629
        %v2730 = vunpack.c.l.b16 %v2630
        %v2731 = vunpack.c.l.b16 %v2631
        %v2732 = vunpack.c.l.b16 %v2632
        %v2733 = vunpack.c.l.b16 %v2633
        %v2734 = vunpack.c.l.b16 %v2634
        %v2735 = vunpack.c.l.b16 %v2635
        %v2736 = vunpack.c.l.b16 %v2636
        %v2737 = vpack.c.b16 %v2730, %v2729
        %v2738 = vpack.c.b16 %v2732, %v2731
        %v2739 = vpack.c.b16 %v2734, %v2733
        %v2740 = vpack.c.b16 %v2736, %v2735
        %v2742 = vshrl.u32 %v2737, 16
        %v2744 = vrot.slane %v2742, 4
        %v2745 = vshll.u32 %v2737, 16
        %v2747 = vrot.slane %v2745, 5
        %v2748 = vor.u32 %v2744, %v2747
        %v2750 = vshrl.u32 %v2738, 16
        %v2752 = vrot.slane %v2750, 4
        %v2753 = vshll.u32 %v2738, 16
        %v2755 = vrot.slane %v2753, 5
        %v2756 = vor.u32 %v2752, %v2755
        %v2757 = vsel %vm1127, %v2748, %v2756
        %v2759 = vshrl.u32 %v2739, 16
        %v2761 = vrot.slane %v2759, 4
        %v2762 = vshll.u32 %v2739, 16
        %v2764 = vrot.slane %v2762, 5
        %v2765 = vor.u32 %v2761, %v2764
        %v2766 = vsel %vm1127, %v2756, %v2765
        %v2768 = vshrl.u32 %v2740, 16
        %v2770 = vrot.slane %v2768, 4
        %v2771 = vshll.u32 %v2740, 16
        %v2773 = vrot.slane %v2771, 5
        %v2774 = vor.u32 %v2770, %v2773
        %v2775 = vsel %vm1127, %v2765, %v2774
        %2776 = vrot.lane.b32.xlu0 %v2748, 64
        %v2777 = vpop.permute.xlu0 %2776
        %2778 = vrot.lane.b32.xlu0 %v2757, 64
        %v2779 = vpop.permute.xlu0 %2778
        %2780 = vrot.lane.b32.xlu0 %v2766, 64
        %v2781 = vpop.permute.xlu0 %2780
        %2782 = vrot.lane.b32.xlu0 %v2775, 64
        %v2783 = vpop.permute.xlu0 %2782
        %2784 = vrot.lane.b32.xlu0 %v2774, 64
        %v2785 = vpop.permute.xlu0 %2784
        %v2795 = vunpack.c.l.b16 %v2647
        %v2796 = vunpack.c.l.b16 %v2648
        %v2797 = vunpack.c.l.b16 %v2649
        %v2798 = vunpack.c.l.b16 %v2650
        %v2799 = vunpack.c.l.b16 %v2651
        %v2800 = vunpack.c.l.b16 %v2652
        %v2801 = vunpack.c.l.b16 %v2653
        %v2802 = vunpack.c.l.b16 %v2654
        %v2803 = vunpack.c.l.b16 %v2655
        %v2804 = vpack.c.b16 %v2796, %v2795
        %v2805 = vpack.c.b16 %v2798, %v2797
        %v2806 = vpack.c.b16 %v2800, %v2799
        %v2807 = vpack.c.b16 %v2802, %v2801
        %v2808 = vpack.c.b16 %v2803, %v2803
        %v2809 = vrot.slane %v2804, 5
        %v2810 = vrot.slane %v2805, 5
        %v2811 = vsel %vm1621, %v2809, %v2810
        %v2812 = vrot.slane %v2806, 5
        %v2813 = vsel %vm1621, %v2810, %v2812
        %v2814 = vrot.slane %v2807, 5
        %v2815 = vsel %vm1621, %v2812, %v2814
        %v2816 = vrot.slane %v2808, 5
        %v2817 = vsel %vm1621, %v2814, %v2816
        %v2827 = vunpack.c.l.b16 %v2658
        %v2828 = vunpack.c.l.b16 %v2659
        %v2829 = vunpack.c.l.b16 %v2660
        %v2830 = vunpack.c.l.b16 %v2661
        %v2831 = vunpack.c.l.b16 %v2662
        %v2832 = vunpack.c.l.b16 %v2663
        %v2833 = vunpack.c.l.b16 %v2664
        %v2834 = vunpack.c.l.b16 %v2665
        %v2835 = vunpack.c.l.b16 %v2666
        %v2836 = vpack.c.b16 %v2828, %v2827
        %v2837 = vpack.c.b16 %v2830, %v2829
        %v2838 = vpack.c.b16 %v2832, %v2831
        %v2839 = vpack.c.b16 %v2834, %v2833
        %v2840 = vpack.c.b16 %v2835, %v2835
        %2841 = vrot.lane.b32.xlu0 %v2836, 64
        %v2842 = vpop.permute.xlu0 %2841
        %2843 = vrot.lane.b32.xlu0 %v2837, 64
        %v2844 = vpop.permute.xlu0 %2843
        %2845 = vrot.lane.b32.xlu0 %v2838, 64
        %v2846 = vpop.permute.xlu0 %2845
        %2847 = vrot.lane.b32.xlu0 %v2839, 64
        %v2848 = vpop.permute.xlu0 %2847
        %2849 = vrot.lane.b32.xlu0 %v2840, 64
        %v2850 = vpop.permute.xlu0 %2849
        %v2852 = vunpack.c.l.b16 %v2657
        %v2853 = vpack.c.b16 %v2731, %v2730
        %v2854 = vpack.c.b16 %v2733, %v2732
        %v2855 = vpack.c.b16 %v2735, %v2734
        %v2856 = vpack.c.b16 %v2852, %v2736
        %v2858 = vshrl.u32 %v2853, 16
        %v2860 = vrot.slane %v2858, 4
        %v2861 = vshll.u32 %v2853, 16
        %v2863 = vrot.slane %v2861, 5
        %v2864 = vor.u32 %v2860, %v2863
        %v2866 = vshrl.u32 %v2854, 16
        %v2868 = vrot.slane %v2866, 4
        %v2869 = vshll.u32 %v2854, 16
        %v2871 = vrot.slane %v2869, 5
        %v2872 = vor.u32 %v2868, %v2871
        %v2873 = vsel %vm1127, %v2864, %v2872
        %v2875 = vshrl.u32 %v2855, 16
        %v2877 = vrot.slane %v2875, 4
        %v2878 = vshll.u32 %v2855, 16
        %v2880 = vrot.slane %v2878, 5
        %v2881 = vor.u32 %v2877, %v2880
        %v2882 = vsel %vm1127, %v2872, %v2881
        %v2884 = vshrl.u32 %v2856, 16
        %v2886 = vrot.slane %v2884, 4
        %v2887 = vshll.u32 %v2856, 16
        %v2889 = vrot.slane %v2887, 5
        %v2890 = vor.u32 %v2886, %v2889
        %v2891 = vsel %vm1127, %v2881, %v2890
        %v2901 = vunpack.c.l.b16 %v2668
        %v2902 = vunpack.c.l.b16 %v2669
        %v2903 = vunpack.c.l.b16 %v2670
        %v2904 = vunpack.c.l.b16 %v2671
        %v2905 = vunpack.c.l.b16 %v2672
        %v2906 = vunpack.c.l.b16 %v2673
        %v2907 = vunpack.c.l.b16 %v2674
        %v2908 = vunpack.c.l.b16 %v2675
        %v2909 = vunpack.c.l.b16 %v2676
        %v2910 = vpack.c.b16 %v2902, %v2901
        %v2911 = vpack.c.b16 %v2904, %v2903
        %v2912 = vpack.c.b16 %v2906, %v2905
        %v2913 = vpack.c.b16 %v2908, %v2907
        %v2914 = vpack.c.b16 %v2909, %v2909
        %v2915 = vrot.slane %v2910, 5
        %v2916 = vrot.slane %v2911, 5
        %v2917 = vsel %vm1621, %v2915, %v2916
        %v2918 = vrot.slane %v2912, 5
        %v2919 = vsel %vm1621, %v2916, %v2918
        %v2920 = vrot.slane %v2913, 5
        %v2921 = vsel %vm1621, %v2918, %v2920
        %v2922 = vrot.slane %v2914, 5
        %v2923 = vsel %vm1621, %v2920, %v2922
        %2924 = vrot.lane.b32.xlu0 %v2915, 64
        %v2925 = vpop.permute.xlu0 %2924
        %2926 = vrot.lane.b32.xlu0 %v2917, 64
        %v2927 = vpop.permute.xlu0 %2926
        %2928 = vrot.lane.b32.xlu0 %v2919, 64
        %v2929 = vpop.permute.xlu0 %2928
        %2930 = vrot.lane.b32.xlu0 %v2921, 64
        %v2931 = vpop.permute.xlu0 %2930
        %2932 = vrot.lane.b32.xlu0 %v2923, 64
        %v2933 = vpop.permute.xlu0 %2932
        %v2943 = vunpack.c.l.b16 %v2679
        %v2944 = vunpack.c.l.b16 %v2680
        %v2945 = vunpack.c.l.b16 %v2681
        %v2946 = vunpack.c.l.b16 %v2682
        %v2947 = vunpack.c.l.b16 %v2683
        %v2948 = vunpack.c.l.b16 %v2684
        %v2949 = vunpack.c.l.b16 %v2685
        %v2950 = vunpack.c.l.b16 %v2686
        %v2951 = vunpack.c.l.b16 %v2687
        %v2952 = vpack.c.b16 %v2944, %v2943
        %v2953 = vpack.c.b16 %v2946, %v2945
        %v2954 = vpack.c.b16 %v2948, %v2947
        %v2955 = vpack.c.b16 %v2950, %v2949
        %v2956 = vpack.c.b16 %v2951, %v2951
        %v2958 = vunpack.c.l.b16 %v2678
        %v2959 = vpack.c.b16 %v2958, %v2852
        %v2961 = vshrl.u32 %v2959, 16
        %v2963 = vrot.slane %v2961, 4
        %v2964 = vshll.u32 %v2959, 16
        %v2966 = vrot.slane %v2964, 5
        %v2967 = vor.u32 %v2963, %v2966
        %v2968 = vsel %vm1127, %v2774, %v2967
        %2969 = vrot.lane.b32.xlu0 %v2756, 64
        %v2970 = vpop.permute.xlu0 %2969
        %2971 = vrot.lane.b32.xlu0 %v2968, 64
        %v2972 = vpop.permute.xlu0 %2971
        %2973 = vrot.lane.b32.xlu0 %v2967, 64
        %v2974 = vpop.permute.xlu0 %2973
        %v2984 = vunpack.c.l.b16 %v2689
        %v2985 = vunpack.c.l.b16 %v2690
        %v2986 = vunpack.c.l.b16 %v2691
        %v2987 = vunpack.c.l.b16 %v2692
        %v2988 = vunpack.c.l.b16 %v2693
        %v2989 = vunpack.c.l.b16 %v2694
        %v2990 = vunpack.c.l.b16 %v2695
        %v2991 = vunpack.c.l.b16 %v2696
        %v2992 = vunpack.c.l.b16 %v2697
        %v2993 = vpack.c.b16 %v2985, %v2984
        %v2994 = vpack.c.b16 %v2987, %v2986
        %v2995 = vpack.c.b16 %v2989, %v2988
        %v2996 = vpack.c.b16 %v2991, %v2990
        %v2997 = vpack.c.b16 %v2992, %v2992
        %v2998 = vrot.slane %v2993, 5
        %v2999 = vrot.slane %v2994, 5
        %v3000 = vsel %vm1621, %v2998, %v2999
        %v3001 = vrot.slane %v2995, 5
        %v3002 = vsel %vm1621, %v2999, %v3001
        %v3003 = vrot.slane %v2996, 5
        %v3004 = vsel %vm1621, %v3001, %v3003
        %v3005 = vrot.slane %v2997, 5
        %v3006 = vsel %vm1621, %v3003, %v3005
        %v3009 = vsel %vm1859, %v2716, %v2777
        %v3012 = vsel %vm1859, %v2717, %v2779
        %v3015 = vsel %vm1859, %v2718, %v2781
        %v3018 = vsel %vm1859, %v2719, %v2783
        %v3021 = vsel %vm1859, %v2720, %v2785
        %v3024 = vsel %vm1859, %v2809, %v2842
        %v3027 = vsel %vm1859, %v2811, %v2844
        %v3030 = vsel %vm1859, %v2813, %v2846
        %v3033 = vsel %vm1859, %v2815, %v2848
        %v3036 = vsel %vm1859, %v2817, %v2850
        %v3039 = vsel %vm1859, %v2864, %v2925
        %v3042 = vsel %vm1859, %v2873, %v2927
        %v3045 = vsel %vm1859, %v2882, %v2929
        %v3048 = vsel %vm1859, %v2891, %v2931
        %v3051 = vsel %vm1859, %v2890, %v2933
        %v3054 = vsel %vm1859, %v2952, %v2970
        %v3056 = vsel %vm1859, %v2953, %v2781
        %v3058 = vsel %vm1859, %v2954, %v2783
        %v3061 = vsel %vm1859, %v2955, %v2972
        %v3064 = vsel %vm1859, %v2956, %v2974
        %v3065 = vld [vmem:[%s10] sm:$0xf]
        %v3066 = vld [vmem:[%s10 + $0x4] sm:$0xf]
        %v3067 = vld [vmem:[%s10 + $0x8] sm:$0xf]
        %v3068 = vld [vmem:[%s10 + $0xc] sm:$0xf]
        %v3069 = vld [vmem:[%s10 + $0x10] sm:$0xf]
        %v3070 = vld [vmem:[%s10 + $0x14] sm:$0xf]
        %v3071 = vld [vmem:[%s10 + $0x18] sm:$0xf]
        %v3072 = vld [vmem:[%s10 + $0x1c] sm:$0xf]
        %v3073 = vld [vmem:[%s10 + $0x20] sm:$0xf]
        %v3074 = vld [vmem:[%s10 + $0x24] sm:$0xf]
        %v3075 = vld [vmem:[%s10 + $0x28] sm:$0xf]
        %v3076 = vld [vmem:[%s10 + $0x2c] sm:$0xf]
        %v3077 = vld [vmem:[%s10 + $0x30] sm:$0xf]
        %v3078 = vld [vmem:[%s10 + $0x34] sm:$0xf]
        %v3079 = vld [vmem:[%s10 + $0x38] sm:$0xf]
        %v3080 = vld [vmem:[%s10 + $0x3c] sm:$0xf]
        %v3081 = vld [vmem:[%s10 + $0x40] sm:$0xf]
        %v3082 = vld [vmem:[%s10 + $0x44] sm:$0xf]
        %v3083 = vld [vmem:[%s10 + $0x48] sm:$0xf]
        %v3084 = vld [vmem:[%s10 + $0x4c] sm:$0xf]
        %v3085 = vld [vmem:[%s10 + $0x50] sm:$0xf]
        %v3086 = vld [vmem:[%s10 + $0x54] sm:$0xf]
        %v3087 = vld [vmem:[%s10 + $0x58] sm:$0xf]
        %v3088 = vld [vmem:[%s10 + $0x5c] sm:$0xf]
        %v3089 = vld [vmem:[%s10 + $0x60] sm:$0xf]
        %v3090 = vld [vmem:[%s10 + $0x64] sm:$0xf]
        %v3091 = vld [vmem:[%s10 + $0x68] sm:$0xf]
        %v3092 = vld [vmem:[%s10 + $0x6c] sm:$0xf]
        %v3093 = vld [vmem:[%s10 + $0x70] sm:$0xf]
        %v3094 = vld [vmem:[%s10 + $0x74] sm:$0xf]
        %v3095 = vld [vmem:[%s10 + $0x78] sm:$0xf]
        %v3096 = vld [vmem:[%s10 + $0x7c] sm:$0xf]
        %v3097 = vld [vmem:[%s10 + $0x80] sm:$0xf]
        %v3098 = vld [vmem:[%s10 + $0x84] sm:$0xf]
        %v3099 = vld [vmem:[%s10 + $0x88] sm:$0xf]
        %v3100 = vld [vmem:[%s10 + $0x8c] sm:$0xf]
        %v3101 = vld [vmem:[%s10 + $0x90] sm:$0xf]
        %v3102 = vld [vmem:[%s10 + $0x94] sm:$0xf]
        %v3103 = vld [vmem:[%s10 + $0x98] sm:$0xf]
        %v3104 = vld [vmem:[%s10 + $0x9c] sm:$0xf]
        %v3105 = vld [vmem:[%s10 + $0xa0] sm:$0xf]
        %v3106 = vld [vmem:[%s10 + $0xa4] sm:$0xf]
        %v3107 = vld [vmem:[%s10 + $0xa8] sm:$0xf]
        %v3108 = vld [vmem:[%s10 + $0xac] sm:$0xf]
        %v3109 = vld [vmem:[%s10 + $0xb0] sm:$0xf]
        %v3110 = vld [vmem:[%s10 + $0xb4] sm:$0xf]
        %v3111 = vld [vmem:[%s10 + $0xb8] sm:$0xf]
        %v3112 = vld [vmem:[%s10 + $0xbc] sm:$0xf]
        %v3113 = vld [vmem:[%s10 + $0xc0] sm:$0xf]
        %v3114 = vld [vmem:[%s10 + $0xc4] sm:$0xf]
        %v3115 = vld [vmem:[%s10 + $0xc8] sm:$0xf]
        %v3116 = vld [vmem:[%s10 + $0xcc] sm:$0xf]
        %v3117 = vld [vmem:[%s10 + $0xd0] sm:$0xf]
        %v3118 = vld [vmem:[%s10 + $0xd4] sm:$0xf]
        %v3119 = vld [vmem:[%s10 + $0xd8] sm:$0xf]
        %v3120 = vld [vmem:[%s10 + $0xdc] sm:$0xf]
        %v3121 = vld [vmem:[%s10 + $0xe0] sm:$0xf]
        %v3122 = vld [vmem:[%s10 + $0xe4] sm:$0xf]
        %v3123 = vld [vmem:[%s10 + $0xe8] sm:$0xf]
        %v3124 = vld [vmem:[%s10 + $0xec] sm:$0xf]
        %v3125 = vld [vmem:[%s10 + $0xf0] sm:$0xf]
        %v3126 = vld [vmem:[%s10 + $0xf4] sm:$0xf]
        %v3127 = vld [vmem:[%s10 + $0xf8] sm:$0xf]
        %v3128 = vld [vmem:[%s10 + $0xfc] sm:$0xf]
        %v3129 = vld [vmem:[%s10 + $0x100] sm:$0xf]
        %v3130 = vld [vmem:[%s10 + $0x104] sm:$0xf]
        %v3131 = vld [vmem:[%s10 + $0x108] sm:$0xf]
        %v3132 = vld [vmem:[%s10 + $0x10c] sm:$0xf]
        %v3133 = vld [vmem:[%s10 + $0x110] sm:$0xf]
        %v3134 = vld [vmem:[%s10 + $0x114] sm:$0xf]
        %v3135 = vld [vmem:[%s10 + $0x118] sm:$0xf]
        %v3136 = vld [vmem:[%s10 + $0x11c] sm:$0xf]
        %v3137 = vpack.c.bf16 %v646, %v645
        %v3138 = vpack.c.bf16 %v648, %v647
        %v3139 = vpack.c.bf16 %v650, %v649
        %v3140 = vpack.c.bf16 %v652, %v651
        %v3141 = vld [vmem:[%s12] sm:$0xf]
        %v3142 = vld [vmem:[%s12 + $0x4] sm:$0xf]
        %v3143 = vld [vmem:[%s12 + $0x8] sm:$0xf]
        %v3144 = vld [vmem:[%s12 + $0xc] sm:$0xf]
        %v3145 = vld [vmem:[%s13] sm:$0x1]
        %v3147 = vperm.slane %v3145, 0
        %v3153 = vunpack.c.l.b16 %v3141
        %v3154 = vunpack.c.l.b16 %v3142
        %v3155 = vunpack.c.l.b16 %v3143
        %v3156 = vunpack.c.l.b16 %v3144
        %v3157 = vpack.c.b16 %v3154, %v3153
        %v3158 = vpack.c.b16 %v3156, %v3155
        %v3162 = vsel %vm659, %v3137, 0
        %v3165 = vsel %vm659, %v3138, 0
        %v3168 = vsel %vm659, %v3139, 0
        %v3171 = vsel %vm659, %v3140, 0
        %3173 = vmatpush.bf16.msra.mxu0 0
        %3174 = vmatpush.bf16.msra.mxu0 0
        %3175 = vmatpush.bf16.msra.mxu0 0
        %3176 = vmatpush.bf16.msra.mxu0 0
        %3177 = vmatpush.bf16.msra.mxu0 0
        %3178 = vmatpush.bf16.msra.mxu0 0
        %3179 = vmatpush.bf16.msra.mxu0 %v3158
        %3180 = vmatpush.bf16.msra.mxu0 %v3157
        %3181 = vmatmul.bf16.gmra.mxu0 %v3162
        %v3182 = vpop.f32.mrf.mxu0
        %v3183 = vadd.f32 %v3147, %v3182
        %v3184 = vpop.f32.mrf.mxu0
        %v3185 = vadd.f32 %v3147, %v3184
        %3186 = vmatmul.bf16.gmra.mxu0 %v3165
        %v3187 = vpop.f32.mrf.mxu0
        %v3188 = vadd.f32 %v3147, %v3187
        %v3189 = vpop.f32.mrf.mxu0
        %v3190 = vadd.f32 %v3147, %v3189
        %3191 = vmatmul.bf16.gmra.mxu0 %v3168
        %v3192 = vpop.f32.mrf.mxu0
        %v3193 = vadd.f32 %v3147, %v3192
        %v3194 = vpop.f32.mrf.mxu0
        %v3195 = vadd.f32 %v3147, %v3194
        %3196 = vmatmul.bf16.gmra.mxu0 %v3171
        %v3197 = vpop.f32.mrf.mxu0
        %v3198 = vadd.f32 %v3147, %v3197
        %v3199 = vpop.f32.mrf.mxu0
        %v3200 = vadd.f32 %v3147, %v3199
        %3201 = vdwg.mxu0
        %v3202 = vld [vmem:[%s11] sm:$0x1]
        %v3204 = vperm.slane %v3202, 0
        %v3206 = vshrl.u32 %v3009, 16
        %v3208 = vrot.slane %v3206, 3
        %v3209 = vshll.u32 %v3009, 16
        %v3211 = vrot.slane %v3209, 4
        %v3212 = vor.u32 %v3208, %v3211
        %v3213 = vshrl.u32 %v3012, 16
        %v3215 = vrot.slane %v3213, 3
        %v3216 = vshll.u32 %v3012, 16
        %v3218 = vrot.slane %v3216, 4
        %v3219 = vor.u32 %v3215, %v3218
        %v3220 = vsel %vm1956, %v3212, %v3219
        %v3221 = vshrl.u32 %v3024, 16
        %v3223 = vrot.slane %v3221, 3
        %v3224 = vshll.u32 %v3024, 16
        %v3226 = vrot.slane %v3224, 4
        %v3227 = vor.u32 %v3223, %v3226
        %v3228 = vshrl.u32 %v3027, 16
        %v3230 = vrot.slane %v3228, 3
        %v3231 = vshll.u32 %v3027, 16
        %v3233 = vrot.slane %v3231, 4
        %v3234 = vor.u32 %v3230, %v3233
        %v3235 = vsel %vm1956, %v3227, %v3234
        %v3236 = vshrl.u32 %v3039, 16
        %v3238 = vrot.slane %v3236, 3
        %v3239 = vshll.u32 %v3039, 16
        %v3241 = vrot.slane %v3239, 4
        %v3242 = vor.u32 %v3238, %v3241
        %v3243 = vshrl.u32 %v3042, 16
        %v3245 = vrot.slane %v3243, 3
        %v3246 = vshll.u32 %v3042, 16
        %v3248 = vrot.slane %v3246, 4
        %v3249 = vor.u32 %v3245, %v3248
        %v3250 = vsel %vm1956, %v3242, %v3249
        %v3251 = vshrl.u32 %v3054, 16
        %v3253 = vrot.slane %v3251, 3
        %v3254 = vshll.u32 %v3054, 16
        %v3256 = vrot.slane %v3254, 4
        %v3257 = vor.u32 %v3253, %v3256
        %v3258 = vshrl.u32 %v3056, 16
        %v3260 = vrot.slane %v3258, 3
        %v3261 = vshll.u32 %v3056, 16
        %v3263 = vrot.slane %v3261, 4
        %v3264 = vor.u32 %v3260, %v3263
        %v3265 = vsel %vm1956, %v3257, %v3264
        %v3267 = vshrl.u32 %v2998, 16
        %v3269 = vrot.slane %v3267, 3
        %v3270 = vshll.u32 %v2998, 16
        %v3272 = vrot.slane %v3270, 4
        %v3273 = vor.u32 %v3269, %v3272
        %v3275 = vshrl.u32 %v3000, 16
        %v3277 = vrot.slane %v3275, 3
        %v3278 = vshll.u32 %v3000, 16
        %v3280 = vrot.slane %v3278, 4
        %v3281 = vor.u32 %v3277, %v3280
        %v3282 = vsel %vm1956, %v3273, %v3281
        %v3283 = vshrl.u32 %v3015, 16
        %v3285 = vrot.slane %v3283, 3
        %v3286 = vshll.u32 %v3015, 16
        %v3288 = vrot.slane %v3286, 4
        %v3289 = vor.u32 %v3285, %v3288
        %v3290 = vsel %vm1956, %v3219, %v3289
        %v3291 = vshrl.u32 %v3030, 16
        %v3293 = vrot.slane %v3291, 3
        %v3294 = vshll.u32 %v3030, 16
        %v3296 = vrot.slane %v3294, 4
        %v3297 = vor.u32 %v3293, %v3296
        %v3298 = vsel %vm1956, %v3234, %v3297
        %v3299 = vshrl.u32 %v3045, 16
        %v3301 = vrot.slane %v3299, 3
        %v3302 = vshll.u32 %v3045, 16
        %v3304 = vrot.slane %v3302, 4
        %v3305 = vor.u32 %v3301, %v3304
        %v3306 = vsel %vm1956, %v3249, %v3305
        %v3307 = vshrl.u32 %v3058, 16
        %v3309 = vrot.slane %v3307, 3
        %v3310 = vshll.u32 %v3058, 16
        %v3312 = vrot.slane %v3310, 4
        %v3313 = vor.u32 %v3309, %v3312
        %v3314 = vsel %vm1956, %v3264, %v3313
        %v3316 = vshrl.u32 %v3002, 16
        %v3318 = vrot.slane %v3316, 3
        %v3319 = vshll.u32 %v3002, 16
        %v3321 = vrot.slane %v3319, 4
        %v3322 = vor.u32 %v3318, %v3321
        %v3323 = vsel %vm1956, %v3281, %v3322
        %v3324 = vshrl.u32 %v3018, 16
        %v3326 = vrot.slane %v3324, 3
        %v3327 = vshll.u32 %v3018, 16
        %v3329 = vrot.slane %v3327, 4
        %v3330 = vor.u32 %v3326, %v3329
        %v3331 = vsel %vm1956, %v3289, %v3330
        %v3332 = vshrl.u32 %v3033, 16
        %v3334 = vrot.slane %v3332, 3
        %v3335 = vshll.u32 %v3033, 16
        %v3337 = vrot.slane %v3335, 4
        %v3338 = vor.u32 %v3334, %v3337
        %v3339 = vsel %vm1956, %v3297, %v3338
        %v3340 = vshrl.u32 %v3048, 16
        %v3342 = vrot.slane %v3340, 3
        %v3343 = vshll.u32 %v3048, 16
        %v3345 = vrot.slane %v3343, 4
        %v3346 = vor.u32 %v3342, %v3345
        %v3347 = vsel %vm1956, %v3305, %v3346
        %v3348 = vshrl.u32 %v3061, 16
        %v3350 = vrot.slane %v3348, 3
        %v3351 = vshll.u32 %v3061, 16
        %v3353 = vrot.slane %v3351, 4
        %v3354 = vor.u32 %v3350, %v3353
        %v3355 = vsel %vm1956, %v3313, %v3354
        %v3357 = vshrl.u32 %v3004, 16
        %v3359 = vrot.slane %v3357, 3
        %v3360 = vshll.u32 %v3004, 16
        %v3362 = vrot.slane %v3360, 4
        %v3363 = vor.u32 %v3359, %v3362
        %v3364 = vsel %vm1956, %v3322, %v3363
        %v3365 = vshrl.u32 %v3021, 16
        %v3367 = vrot.slane %v3365, 3
        %v3368 = vshll.u32 %v3021, 16
        %v3370 = vrot.slane %v3368, 4
        %v3371 = vor.u32 %v3367, %v3370
        %v3372 = vsel %vm1956, %v3330, %v3371
        %v3373 = vshrl.u32 %v3036, 16
        %v3375 = vrot.slane %v3373, 3
        %v3376 = vshll.u32 %v3036, 16
        %v3378 = vrot.slane %v3376, 4
        %v3379 = vor.u32 %v3375, %v3378
        %v3380 = vsel %vm1956, %v3338, %v3379
        %v3381 = vshrl.u32 %v3051, 16
        %v3383 = vrot.slane %v3381, 3
        %v3384 = vshll.u32 %v3051, 16
        %v3386 = vrot.slane %v3384, 4
        %v3387 = vor.u32 %v3383, %v3386
        %v3388 = vsel %vm1956, %v3346, %v3387
        %v3389 = vshrl.u32 %v3064, 16
        %v3391 = vrot.slane %v3389, 3
        %v3392 = vshll.u32 %v3064, 16
        %v3394 = vrot.slane %v3392, 4
        %v3395 = vor.u32 %v3391, %v3394
        %v3396 = vsel %vm1956, %v3354, %v3395
        %v3398 = vshrl.u32 %v3006, 16
        %v3400 = vrot.slane %v3398, 3
        %v3401 = vshll.u32 %v3006, 16
        %v3403 = vrot.slane %v3401, 4
        %v3404 = vor.u32 %v3400, %v3403
        %v3405 = vsel %vm1956, %v3363, %v3404
        %v3494 = vunpack.c.l.b16 %v3065
        %v3495 = vunpack.c.l.b16 %v3066
        %v3496 = vunpack.c.l.b16 %v3067
        %v3497 = vunpack.c.l.b16 %v3068
        %v3498 = vunpack.c.l.b16 %v3069
        %v3499 = vunpack.c.l.b16 %v3070
        %v3500 = vunpack.c.l.b16 %v3071
        %v3501 = vunpack.c.l.b16 %v3072
        %v3502 = vunpack.c.l.b16 %v3073
        %v3503 = vunpack.c.l.b16 %v3074
        %v3504 = vunpack.c.l.b16 %v3075
        %v3505 = vunpack.c.l.b16 %v3076
        %v3506 = vunpack.c.l.b16 %v3077
        %v3507 = vunpack.c.l.b16 %v3078
        %v3508 = vunpack.c.l.b16 %v3079
        %v3509 = vunpack.c.l.b16 %v3080
        %v3510 = vunpack.c.l.b16 %v3081
        %v3511 = vunpack.c.l.b16 %v3082
        %v3512 = vunpack.c.l.b16 %v3083
        %v3513 = vunpack.c.l.b16 %v3084
        %v3514 = vunpack.c.l.b16 %v3085
        %v3515 = vunpack.c.l.b16 %v3086
        %v3516 = vunpack.c.l.b16 %v3087
        %v3517 = vunpack.c.l.b16 %v3088
        %v3518 = vunpack.c.l.b16 %v3089
        %v3519 = vunpack.c.l.b16 %v3090
        %v3520 = vunpack.c.l.b16 %v3091
        %v3521 = vunpack.c.l.b16 %v3092
        %v3522 = vunpack.c.l.b16 %v3093
        %v3523 = vunpack.c.l.b16 %v3094
        %v3524 = vunpack.c.l.b16 %v3095
        %v3525 = vunpack.c.l.b16 %v3096
        %v3526 = vunpack.c.l.b16 %v3097
        %v3527 = vunpack.c.l.b16 %v3098
        %v3528 = vunpack.c.l.b16 %v3099
        %v3529 = vunpack.c.l.b16 %v3100
        %v3530 = vunpack.c.l.b16 %v3101
        %v3531 = vunpack.c.l.b16 %v3102
        %v3532 = vunpack.c.l.b16 %v3103
        %v3533 = vunpack.c.l.b16 %v3104
        %v3534 = vunpack.c.l.b16 %v3105
        %v3535 = vunpack.c.l.b16 %v3106
        %v3536 = vunpack.c.l.b16 %v3107
        %v3537 = vunpack.c.l.b16 %v3108
        %v3538 = vunpack.c.l.b16 %v3109
        %v3539 = vunpack.c.l.b16 %v3110
        %v3540 = vunpack.c.l.b16 %v3111
        %v3541 = vunpack.c.l.b16 %v3112
        %v3542 = vunpack.c.l.b16 %v3113
        %v3543 = vunpack.c.l.b16 %v3114
        %v3544 = vunpack.c.l.b16 %v3115
        %v3545 = vunpack.c.l.b16 %v3116
        %v3546 = vunpack.c.l.b16 %v3117
        %v3547 = vunpack.c.l.b16 %v3118
        %v3548 = vunpack.c.l.b16 %v3119
        %v3549 = vunpack.c.l.b16 %v3120
        %v3550 = vunpack.c.l.b16 %v3121
        %v3551 = vunpack.c.l.b16 %v3122
        %v3552 = vunpack.c.l.b16 %v3123
        %v3553 = vunpack.c.l.b16 %v3124
        %v3554 = vunpack.c.l.b16 %v3125
        %v3555 = vunpack.c.l.b16 %v3126
        %v3556 = vunpack.c.l.b16 %v3127
        %v3557 = vunpack.c.l.b16 %v3128
        %v3558 = vunpack.c.l.b16 %v3129
        %v3559 = vunpack.c.l.b16 %v3130
        %v3560 = vunpack.c.l.b16 %v3131
        %v3561 = vunpack.c.l.b16 %v3132
        %v3562 = vunpack.c.l.b16 %v3133
        %v3563 = vunpack.c.l.b16 %v3134
        %v3564 = vunpack.c.l.b16 %v3135
        %v3565 = vunpack.c.l.b16 %v3136
        %v3566 = vpack.c.b16 %v3495, %v3494
        %v3567 = vpack.c.b16 %v3497, %v3496
        %v3568 = vpack.c.b16 %v3499, %v3498
        %v3569 = vpack.c.b16 %v3501, %v3500
        %v3570 = vpack.c.b16 %v3503, %v3502
        %v3571 = vpack.c.b16 %v3505, %v3504
        %v3572 = vpack.c.b16 %v3507, %v3506
        %v3573 = vpack.c.b16 %v3509, %v3508
        %v3574 = vpack.c.b16 %v3511, %v3510
        %v3575 = vpack.c.b16 %v3513, %v3512
        %v3576 = vpack.c.b16 %v3515, %v3514
        %v3577 = vpack.c.b16 %v3517, %v3516
        %v3578 = vpack.c.b16 %v3519, %v3518
        %v3579 = vpack.c.b16 %v3521, %v3520
        %v3580 = vpack.c.b16 %v3523, %v3522
        %v3581 = vpack.c.b16 %v3525, %v3524
        %v3582 = vpack.c.b16 %v3527, %v3526
        %v3583 = vpack.c.b16 %v3529, %v3528
        %v3584 = vpack.c.b16 %v3531, %v3530
        %v3585 = vpack.c.b16 %v3533, %v3532
        %v3586 = vpack.c.b16 %v3535, %v3534
        %v3587 = vpack.c.b16 %v3537, %v3536
        %v3588 = vpack.c.b16 %v3539, %v3538
        %v3589 = vpack.c.b16 %v3541, %v3540
        %v3590 = vpack.c.b16 %v3543, %v3542
        %v3591 = vpack.c.b16 %v3545, %v3544
        %v3592 = vpack.c.b16 %v3547, %v3546
        %v3593 = vpack.c.b16 %v3549, %v3548
        %v3594 = vpack.c.b16 %v3551, %v3550
        %v3595 = vpack.c.b16 %v3553, %v3552
        %v3596 = vpack.c.b16 %v3555, %v3554
        %v3597 = vpack.c.b16 %v3557, %v3556
        %v3598 = vpack.c.b16 %v3559, %v3558
        %v3599 = vpack.c.b16 %v3561, %v3560
        %v3600 = vpack.c.b16 %v3563, %v3562
        %v3601 = vpack.c.b16 %v3565, %v3564
        %v3639 = vsel %vm1859, %v3282, 0
        %v3642 = vsel %vm1859, %v3323, 0
        %v3645 = vsel %vm1859, %v3364, 0
        %v3648 = vsel %vm1859, %v3405, 0
        %3650 = vmatpush.bf16.msra.mxu0 %v3573
        %3651 = vmatpush.bf16.msra.mxu0 %v3572
        %3652 = vmatpush.bf16.msra.mxu0 %v3571
        %3653 = vmatpush.bf16.msra.mxu0 %v3570
        %3654 = vmatpush.bf16.msra.mxu0 %v3569
        %3655 = vmatpush.bf16.msra.mxu0 %v3568
        %3656 = vmatpush.bf16.msra.mxu0 %v3567
        %3657 = vmatpush.bf16.msra.mxu0 %v3566
        %3658 = vmatmul.bf16.gmra.mxu0 %v3220
        %v3659 = vpop.f32.mrf.mxu0
        %v3660 = vadd.f32 %v3204, %v3659
        %v3661 = vpop.f32.mrf.mxu0
        %v3662 = vadd.f32 %v3204, %v3661
        %3663 = vmatmul.bf16.gmra.mxu0 %v3290
        %v3664 = vpop.f32.mrf.mxu0
        %v3665 = vadd.f32 %v3204, %v3664
        %v3666 = vpop.f32.mrf.mxu0
        %v3667 = vadd.f32 %v3204, %v3666
        %3668 = vmatmul.bf16.gmra.mxu0 %v3331
        %v3669 = vpop.f32.mrf.mxu0
        %v3670 = vadd.f32 %v3204, %v3669
        %v3671 = vpop.f32.mrf.mxu0
        %v3672 = vadd.f32 %v3204, %v3671
        %3673 = vmatmul.bf16.gmra.mxu0 %v3372
        %v3674 = vpop.f32.mrf.mxu0
        %v3675 = vadd.f32 %v3204, %v3674
        %v3676 = vpop.f32.mrf.mxu0
        %v3677 = vadd.f32 %v3204, %v3676
        %3678 = vdwg.mxu0
        %3679 = vmatpush.bf16.msra.mxu0 %v3581
        %3680 = vmatpush.bf16.msra.mxu0 %v3580
        %3681 = vmatpush.bf16.msra.mxu0 %v3579
        %3682 = vmatpush.bf16.msra.mxu0 %v3578
        %3683 = vmatpush.bf16.msra.mxu0 %v3577
        %3684 = vmatpush.bf16.msra.mxu0 %v3576
        %3685 = vmatpush.bf16.msra.mxu0 %v3575
        %3686 = vmatpush.bf16.msra.mxu0 %v3574
        %3687 = vmatmul.bf16.gmra.mxu0 %v3235
        %v3688 = vpop.f32.mrf.mxu0
        %v3689 = vadd.f32 %v3660, %v3688
        %v3690 = vpop.f32.mrf.mxu0
        %v3691 = vadd.f32 %v3662, %v3690
        %3692 = vmatmul.bf16.gmra.mxu0 %v3298
        %v3693 = vpop.f32.mrf.mxu0
        %v3694 = vadd.f32 %v3665, %v3693
        %v3695 = vpop.f32.mrf.mxu0
        %v3696 = vadd.f32 %v3667, %v3695
        %3697 = vmatmul.bf16.gmra.mxu0 %v3339
        %v3698 = vpop.f32.mrf.mxu0
        %v3699 = vadd.f32 %v3670, %v3698
        %v3700 = vpop.f32.mrf.mxu0
        %v3701 = vadd.f32 %v3672, %v3700
        %3702 = vmatmul.bf16.gmra.mxu0 %v3380
        %v3703 = vpop.f32.mrf.mxu0
        %v3704 = vadd.f32 %v3675, %v3703
        %v3705 = vpop.f32.mrf.mxu0
        %v3706 = vadd.f32 %v3677, %v3705
        %3707 = vdwg.mxu0
        %3708 = vmatpush.bf16.msra.mxu0 %v3589
        %3709 = vmatpush.bf16.msra.mxu0 %v3588
        %3710 = vmatpush.bf16.msra.mxu0 %v3587
        %3711 = vmatpush.bf16.msra.mxu0 %v3586
        %3712 = vmatpush.bf16.msra.mxu0 %v3585
        %3713 = vmatpush.bf16.msra.mxu0 %v3584
        %3714 = vmatpush.bf16.msra.mxu0 %v3583
        %3715 = vmatpush.bf16.msra.mxu0 %v3582
        %3716 = vmatmul.bf16.gmra.mxu0 %v3250
        %v3717 = vpop.f32.mrf.mxu0
        %v3718 = vadd.f32 %v3689, %v3717
        %v3719 = vpop.f32.mrf.mxu0
        %v3720 = vadd.f32 %v3691, %v3719
        %3721 = vmatmul.bf16.gmra.mxu0 %v3306
        %v3722 = vpop.f32.mrf.mxu0
        %v3723 = vadd.f32 %v3694, %v3722
        %v3724 = vpop.f32.mrf.mxu0
        %v3725 = vadd.f32 %v3696, %v3724
        %3726 = vmatmul.bf16.gmra.mxu0 %v3347
        %v3727 = vpop.f32.mrf.mxu0
        %v3728 = vadd.f32 %v3699, %v3727
        %v3729 = vpop.f32.mrf.mxu0
        %v3730 = vadd.f32 %v3701, %v3729
        %3731 = vmatmul.bf16.gmra.mxu0 %v3388
        %v3732 = vpop.f32.mrf.mxu0
        %v3733 = vadd.f32 %v3704, %v3732
        %v3734 = vpop.f32.mrf.mxu0
        %v3735 = vadd.f32 %v3706, %v3734
        %3736 = vdwg.mxu0
        %3737 = vmatpush.bf16.msra.mxu0 %v3597
        %3738 = vmatpush.bf16.msra.mxu0 %v3596
        %3739 = vmatpush.bf16.msra.mxu0 %v3595
        %3740 = vmatpush.bf16.msra.mxu0 %v3594
        %3741 = vmatpush.bf16.msra.mxu0 %v3593
        %3742 = vmatpush.bf16.msra.mxu0 %v3592
        %3743 = vmatpush.bf16.msra.mxu0 %v3591
        %3744 = vmatpush.bf16.msra.mxu0 %v3590
        %3745 = vmatmul.bf16.gmra.mxu0 %v3265
        %v3746 = vpop.f32.mrf.mxu0
        %v3747 = vadd.f32 %v3718, %v3746
        %v3748 = vpop.f32.mrf.mxu0
        %v3749 = vadd.f32 %v3720, %v3748
        %3750 = vmatmul.bf16.gmra.mxu0 %v3314
        %v3751 = vpop.f32.mrf.mxu0
        %v3752 = vadd.f32 %v3723, %v3751
        %v3753 = vpop.f32.mrf.mxu0
        %v3754 = vadd.f32 %v3725, %v3753
        %3755 = vmatmul.bf16.gmra.mxu0 %v3355
        %v3756 = vpop.f32.mrf.mxu0
        %v3757 = vadd.f32 %v3728, %v3756
        %v3758 = vpop.f32.mrf.mxu0
        %v3759 = vadd.f32 %v3730, %v3758
        %3760 = vmatmul.bf16.gmra.mxu0 %v3396
        %v3761 = vpop.f32.mrf.mxu0
        %v3762 = vadd.f32 %v3733, %v3761
        %v3763 = vpop.f32.mrf.mxu0
        %v3764 = vadd.f32 %v3735, %v3763
        %3765 = vdwg.mxu0
        %3766 = vmatpush.bf16.msra.mxu0 0
        %3767 = vmatpush.bf16.msra.mxu0 0
        %3768 = vmatpush.bf16.msra.mxu0 0
        %3769 = vmatpush.bf16.msra.mxu0 0
        %3770 = vmatpush.bf16.msra.mxu0 %v3601
        %3771 = vmatpush.bf16.msra.mxu0 %v3600
        %3772 = vmatpush.bf16.msra.mxu0 %v3599
        %3773 = vmatpush.bf16.msra.mxu0 %v3598
        %3774 = vmatmul.bf16.gmra.mxu0 %v3639
        %v3775 = vpop.f32.mrf.mxu0
        %v3776 = vadd.f32 %v3747, %v3775
        %v3777 = vpop.f32.mrf.mxu0
        %v3778 = vadd.f32 %v3749, %v3777
        %3779 = vmatmul.bf16.gmra.mxu0 %v3642
        %v3780 = vpop.f32.mrf.mxu0
        %v3781 = vadd.f32 %v3752, %v3780
        %v3782 = vpop.f32.mrf.mxu0
        %v3783 = vadd.f32 %v3754, %v3782
        %3784 = vmatmul.bf16.gmra.mxu0 %v3645
        %v3785 = vpop.f32.mrf.mxu0
        %v3786 = vadd.f32 %v3757, %v3785
        %v3787 = vpop.f32.mrf.mxu0
        %v3788 = vadd.f32 %v3759, %v3787
        %3789 = vmatmul.bf16.gmra.mxu0 %v3648
        %v3790 = vpop.f32.mrf.mxu0
        %v3791 = vadd.f32 %v3762, %v3790
        %v3792 = vpop.f32.mrf.mxu0
        %v3793 = vadd.f32 %v3764, %v3792
        %3794 = vdwg.mxu0
        %v3795 = vadd.f32 %v3776, %v3183
        %v3796 = vadd.f32 %v3778, %v3185
        %v3797 = vadd.f32 %v3781, %v3188
        %v3798 = vadd.f32 %v3783, %v3190
        %v3799 = vadd.f32 %v3786, %v3193
        %v3800 = vadd.f32 %v3788, %v3195
        %v3801 = vadd.f32 %v3791, %v3198
        %v3802 = vadd.f32 %v3793, %v3200
        %v3803 = vmul.f32 %v3795, 0.70710677
        %v3804 = vmul.f32 %v3796, 0.70710677
        %v3805 = vmul.f32 %v3797, 0.70710677
        %v3806 = vmul.f32 %v3798, 0.70710677
        %v3807 = vmul.f32 %v3799, 0.70710677
        %v3808 = vmul.f32 %v3800, 0.70710677
        %v3809 = vmul.f32 %v3801, 0.70710677
        %v3810 = vmul.f32 %v3802, 0.70710677
        %v3811 = vld [vmem:[%s14] sm:$0x1]
        %v3812 = vld [vmem:[%s15] sm:$0x1]
        %v3813 = vld [vmem:[%s9] sm:$0xff]
        %v3814 = vld [vmem:[%s9 + $0x8] sm:$0xff]
        %v3815 = vld [vmem:[%s9 + $0x10] sm:$0xff]
        %v3816 = vld [vmem:[%s9 + $0x18] sm:$0xff]
        %v3817 = vld [vmem:[%s9 + $0x20] sm:$0xff]
        %v3818 = vld [vmem:[%s9 + $0x28] sm:$0xff]
        %v3819 = vld [vmem:[%s9 + $0x30] sm:$0xff]
        %v3820 = vld [vmem:[%s9 + $0x38] sm:$0xff]
        %v3821 = vsel %vm1859, %v3803, 0.0
        %v3822 = vsel %vm1859, %v3804, 0.0
        %v3823 = vadd.f32 %v3821, %v3822
        %v3824 = vsel %vm1859, %v3805, 0.0
        %v3825 = vadd.f32 %v3823, %v3824
        %v3826 = vsel %vm1859, %v3806, 0.0
        %v3827 = vadd.f32 %v3825, %v3826
        %v3828 = vsel %vm1859, %v3807, 0.0
        %v3829 = vadd.f32 %v3827, %v3828
        %v3830 = vsel %vm1859, %v3808, 0.0
        %v3831 = vadd.f32 %v3829, %v3830
        %v3832 = vsel %vm1859, %v3809, 0.0
        %v3833 = vadd.f32 %v3831, %v3832
        %v3834 = vsel %vm1859, %v3810, 0.0
        %v3835 = vadd.f32 %v3833, %v3834
        %v3836 = vrot.slane %v3835, 4
        %v3837 = vadd.f32 %v3835, %v3836
        %v3838 = vrot.slane %v3837, 2
        %v3839 = vadd.f32 %v3837, %v3838
        %v3840 = vrot.slane %v3839, 1
        %v3841 = vadd.f32 %v3839, %v3840
        %v3842 = vmul.f32 %v3803, %v3803
        %v3843 = vmul.f32 %v3804, %v3804
        %v3844 = vmul.f32 %v3805, %v3805
        %v3845 = vmul.f32 %v3806, %v3806
        %v3846 = vmul.f32 %v3807, %v3807
        %v3847 = vmul.f32 %v3808, %v3808
        %v3848 = vmul.f32 %v3809, %v3809
        %v3849 = vmul.f32 %v3810, %v3810
        %v3850 = vsel %vm1859, %v3842, 0.0
        %v3851 = vsel %vm1859, %v3843, 0.0
        %v3852 = vadd.f32 %v3850, %v3851
        %v3853 = vsel %vm1859, %v3844, 0.0
        %v3854 = vadd.f32 %v3852, %v3853
        %v3855 = vsel %vm1859, %v3845, 0.0
        %v3856 = vadd.f32 %v3854, %v3855
        %v3857 = vsel %vm1859, %v3846, 0.0
        %v3858 = vadd.f32 %v3856, %v3857
        %v3859 = vsel %vm1859, %v3847, 0.0
        %v3860 = vadd.f32 %v3858, %v3859
        %v3861 = vsel %vm1859, %v3848, 0.0
        %v3862 = vadd.f32 %v3860, %v3861
        %v3863 = vsel %vm1859, %v3849, 0.0
        %v3864 = vadd.f32 %v3862, %v3863
        %v3865 = vrot.slane %v3864, 4
        %v3866 = vadd.f32 %v3864, %v3865
        %v3867 = vrot.slane %v3866, 2
        %v3868 = vadd.f32 %v3866, %v3867
        %v3869 = vrot.slane %v3868, 1
        %v3870 = vadd.f32 %v3868, %v3869
        %v3871 = vsel %vm710, %v3841, %v3870
        %v3873 = vsel %vm1859, %v3871, 0
        %3875 = vmatpush.msra.mxu0 0.0
        %3876 = vmatpush.msra.mxu0 0.0
        %3877 = vmatpush.msra.mxu0 0.0
        %3878 = vmatpush.msra.mxu0 0.0
        %3879 = vmatpush.msra.mxu0 0.0
        %3880 = vmatpush.msra.mxu0 0.0
        %3881 = vmatpush.msra.mxu0 0.0
        %3882 = vmatpush.msra.mxu0 0.0
        %3883 = vmatpush.msra.mxu0 %v3820
        %3884 = vmatpush.msra.mxu0 %v3819
        %3885 = vmatpush.msra.mxu0 %v3818
        %3886 = vmatpush.msra.mxu0 %v3817
        %3887 = vmatpush.msra.mxu0 %v3816
        %3888 = vmatpush.msra.mxu0 %v3815
        %3889 = vmatpush.msra.mxu0 %v3814
        %3890 = vmatpush.msra.mxu0 %v3813
        %3891 = vmatmul.f32.gmra.mxu0 %v3873
        %v3892 = vpop.f32.mrf.mxu0
        %v3893 = vadd.f32 0.0, %v3892
        %3894 = vdwg.mxu0
        %v3895 = vmul.f32 %v3893, 0.0078125
        %v3896 = vmul.f32 %v3895, %v3895
        %v3898 = vrot.slane %v3896, 7
        %v3900 = vsub.f32 %v3895, %v3898
        %v3901 = vperm.slane %v3895, 0
        %v3902 = vsub.f32 %v3803, %v3901
        %v3903 = vsub.f32 %v3804, %v3901
        %v3904 = vsub.f32 %v3805, %v3901
        %v3905 = vsub.f32 %v3806, %v3901
        %v3906 = vsub.f32 %v3807, %v3901
        %v3907 = vsub.f32 %v3808, %v3901
        %v3908 = vsub.f32 %v3809, %v3901
        %v3909 = vsub.f32 %v3810, %v3901
        %v3910 = vadd.f32 %v3900, 1e-05
        %v3911 = vrsqrt.pop %v3910
        %v3912 = vmul.f32 %v3911, %v3910
        %v3913 = vmul.f32 %v3912, %v3911
        %v3914 = vmul.f32 0.5, %v3913
        %v3915 = vsub.f32 1.5, %v3914
        %v3916 = vmul.f32 %v3911, %v3915
        %vm3917 = vweird.f32 %v3910
        %vm3918 = vweird.f32 %v3911
        %vm3919 = vmor %vm3917, %vm3918
        %v3920 = vsel %vm3919, %v3911, %v3916
        %v3921 = vperm.slane %v3920, 1
        %v3922 = vmul.f32 %v3902, %v3921
        %v3923 = vmul.f32 %v3903, %v3921
        %v3924 = vmul.f32 %v3904, %v3921
        %v3925 = vmul.f32 %v3905, %v3921
        %v3926 = vmul.f32 %v3906, %v3921
        %v3927 = vmul.f32 %v3907, %v3921
        %v3928 = vmul.f32 %v3908, %v3921
        %v3929 = vmul.f32 %v3909, %v3921
        %v3931 = vperm.slane %v3811, 0
        %v3933 = vmul.f32 %v3922, %v3931
        %v3934 = vmul.f32 %v3923, %v3931
        %v3935 = vmul.f32 %v3924, %v3931
        %v3936 = vmul.f32 %v3925, %v3931
        %v3937 = vmul.f32 %v3926, %v3931
        %v3938 = vmul.f32 %v3927, %v3931
        %v3939 = vmul.f32 %v3928, %v3931
        %v3940 = vmul.f32 %v3929, %v3931
        %v3942 = vperm.slane %v3812, 0
        %v3944 = vadd.f32 %v3933, %v3942
        %v3945 = vadd.f32 %v3934, %v3942
        %v3946 = vadd.f32 %v3935, %v3942
        %v3947 = vadd.f32 %v3936, %v3942
        %v3948 = vadd.f32 %v3937, %v3942
        %v3949 = vadd.f32 %v3938, %v3942
        %v3950 = vadd.f32 %v3939, %v3942
        %v3951 = vadd.f32 %v3940, %v3942
        %v3952 = vpack.c.bf16 %v3945, %v3944
        %v3953 = vpack.c.bf16 %v3947, %v3946
        %v3954 = vpack.c.bf16 %v3949, %v3948
        %v3955 = vpack.c.bf16 %v3951, %v3950
        %v3956 = vld [vmem:[%s16] sm:$0xff]
        %v3957 = vld [vmem:[%s16 + $0x8] sm:$0xff]
        %v3958 = vld [vmem:[%s16 + $0x10] sm:$0xff]
        %v3959 = vld [vmem:[%s16 + $0x18] sm:$0xff]
        %v3960 = vld [vmem:[%s16 + $0x20] sm:$0xff]
        %v3961 = vld [vmem:[%s16 + $0x28] sm:$0xff]
        %v3962 = vld [vmem:[%s16 + $0x30] sm:$0xff]
        %v3963 = vld [vmem:[%s16 + $0x38] sm:$0xff]
        %v3964 = vld [vmem:[%s17] sm:$0x3]
        %v3966 = vperm.slane %v3964, 0
        %v3967 = vperm.slane %v3964, 1
        %v3978 = vunpack.c.l.b16 %v3956
        %v3979 = vunpack.c.h.b16 %v3956
        %v3980 = vunpack.c.l.b16 %v3957
        %v3981 = vunpack.c.h.b16 %v3957
        %v3982 = vunpack.c.l.b16 %v3958
        %v3983 = vunpack.c.h.b16 %v3958
        %v3984 = vunpack.c.l.b16 %v3959
        %v3985 = vunpack.c.h.b16 %v3959
        %v3986 = vunpack.c.l.b16 %v3960
        %v3987 = vunpack.c.h.b16 %v3960
        %v3988 = vunpack.c.l.b16 %v3961
        %v3989 = vunpack.c.h.b16 %v3961
        %v3990 = vunpack.c.l.b16 %v3962
        %v3991 = vunpack.c.h.b16 %v3962
        %v3992 = vunpack.c.l.b16 %v3963
        %v3993 = vunpack.c.h.b16 %v3963
        %v3994 = vpack.c.b16 %v3980, %v3978
        %v3995 = vpack.c.b16 %v3981, %v3979
        %v3996 = vpack.c.b16 %v3984, %v3982
        %v3997 = vpack.c.b16 %v3985, %v3983
        %v3998 = vpack.c.b16 %v3988, %v3986
        %v3999 = vpack.c.b16 %v3989, %v3987
        %v4000 = vpack.c.b16 %v3992, %v3990
        %v4001 = vpack.c.b16 %v3993, %v3991
        %v4011 = vsel %vm1859, %v3952, 0
        %v4014 = vsel %vm1859, %v3953, 0
        %v4017 = vsel %vm1859, %v3954, 0
        %v4020 = vsel %vm1859, %v3955, 0
        %4022 = vmatpush.bf16.msra.mxu0 0
        %4023 = vmatpush.bf16.msra.mxu0 0
        %4024 = vmatpush.bf16.msra.mxu0 0
        %4025 = vmatpush.bf16.msra.mxu0 0
        %4026 = vmatpush.bf16.msra.mxu0 %v4000
        %4027 = vmatpush.bf16.msra.mxu0 %v3998
        %4028 = vmatpush.bf16.msra.mxu0 %v3996
        %4029 = vmatpush.bf16.msra.mxu0 %v3994
        %4030 = vmatmul.bf16.gmra.mxu0 %v4011
        %v4031 = vpop.f32.mrf.mxu0
        %v4032 = vadd.f32 %v3966, %v4031
        %v4033 = vpop.f32.mrf.mxu0
        %v4034 = vadd.f32 %v3966, %v4033
        %4035 = vmatmul.bf16.gmra.mxu0 %v4014
        %v4036 = vpop.f32.mrf.mxu0
        %v4037 = vadd.f32 %v3966, %v4036
        %v4038 = vpop.f32.mrf.mxu0
        %v4039 = vadd.f32 %v3966, %v4038
        %4040 = vmatmul.bf16.gmra.mxu0 %v4017
        %v4041 = vpop.f32.mrf.mxu0
        %v4042 = vadd.f32 %v3966, %v4041
        %v4043 = vpop.f32.mrf.mxu0
        %v4044 = vadd.f32 %v3966, %v4043
        %4045 = vmatmul.bf16.gmra.mxu0 %v4020
        %v4046 = vpop.f32.mrf.mxu0
        %v4047 = vadd.f32 %v3966, %v4046
        %v4048 = vpop.f32.mrf.mxu0
        %v4049 = vadd.f32 %v3966, %v4048
        %4050 = vdwg.mxu0
        %4051 = vmatpush.bf16.msra.mxu0 0
        %4052 = vmatpush.bf16.msra.mxu0 0
        %4053 = vmatpush.bf16.msra.mxu0 0
        %4054 = vmatpush.bf16.msra.mxu0 0
        %4055 = vmatpush.bf16.msra.mxu0 %v4001
        %4056 = vmatpush.bf16.msra.mxu0 %v3999
        %4057 = vmatpush.bf16.msra.mxu0 %v3997
        %4058 = vmatpush.bf16.msra.mxu0 %v3995
        %4059 = vmatmul.bf16.gmra.mxu0 %v4011
        %v4060 = vpop.f32.mrf.mxu0
        %v4061 = vadd.f32 %v3967, %v4060
        %v4062 = vpop.f32.mrf.mxu0
        %v4063 = vadd.f32 %v3967, %v4062
        %4064 = vmatmul.bf16.gmra.mxu0 %v4014
        %v4065 = vpop.f32.mrf.mxu0
        %v4066 = vadd.f32 %v3967, %v4065
        %v4067 = vpop.f32.mrf.mxu0
        %v4068 = vadd.f32 %v3967, %v4067
        %4069 = vmatmul.bf16.gmra.mxu0 %v4017
        %v4070 = vpop.f32.mrf.mxu0
        %v4071 = vadd.f32 %v3967, %v4070
        %v4072 = vpop.f32.mrf.mxu0
        %v4073 = vadd.f32 %v3967, %v4072
        %4074 = vmatmul.bf16.gmra.mxu0 %v4020
        %v4075 = vpop.f32.mrf.mxu0
        %v4076 = vadd.f32 %v3967, %v4075
        %v4077 = vpop.f32.mrf.mxu0
        %v4078 = vadd.f32 %v3967, %v4077
        %4079 = vdwg.mxu0
        %v4080 = vmul.f32 %v4032, 0.125
        %v4081 = vmul.f32 %v4034, 0.125
        %v4082 = vmul.f32 %v4037, 0.125
        %v4083 = vmul.f32 %v4039, 0.125
        %v4084 = vmul.f32 %v4042, 0.125
        %v4085 = vmul.f32 %v4044, 0.125
        %v4086 = vmul.f32 %v4047, 0.125
        %v4087 = vmul.f32 %v4049, 0.125
        %v4088 = vpack.c.bf16 %v4081, %v4080
        %v4089 = vpack.c.bf16 %v4083, %v4082
        %v4090 = vpack.c.bf16 %v4085, %v4084
        %v4091 = vpack.c.bf16 %v4087, %v4086
        %v4092 = vpack.c.bf16 %v4034, %v4032
        %v4093 = vpack.c.bf16 %v4039, %v4037
        %v4094 = vpack.c.bf16 %v4044, %v4042
        %v4095 = vpack.c.bf16 %v4049, %v4047
        %4100 = vrot.lane.b32.xlu0 %v4092, 96
        %v4101 = vpop.permute.xlu0 %4100
        %4102 = vrot.lane.b32.xlu0 %v4093, 96
        %v4103 = vpop.permute.xlu0 %4102
        %4104 = vrot.lane.b32.xlu0 %v4094, 96
        %v4105 = vpop.permute.xlu0 %4104
        %4106 = vrot.lane.b32.xlu0 %v4095, 96
        %v4107 = vpop.permute.xlu0 %4106
        %v4109 = vsel %vm659, %v4088, 0
        %v4112 = vsel %vm659, %v4089, 0
        %v4115 = vsel %vm659, %v4090, 0
        %v4118 = vsel %vm659, %v4091, 0
        %v4121 = vsel %vm659, %v4101, 0
        %v4124 = vsel %vm659, %v4103, 0
        %v4127 = vsel %vm659, %v4105, 0
        %v4130 = vsel %vm659, %v4107, 0
        %4132 = vmatpush.bf16.xpose.msra.mxu0 0
        %4133 = vmatpush.bf16.xpose.msra.mxu0 0
        %4134 = vmatpush.bf16.xpose.msra.mxu0 0
        %4135 = vmatpush.bf16.xpose.msra.mxu0 0
        %4136 = vmatpush.bf16.xpose.msra.mxu0 %v4130
        %4137 = vmatpush.bf16.xpose.msra.mxu0 %v4127
        %4138 = vmatpush.bf16.xpose.msra.mxu0 %v4124
        %4139 = vmatpush.bf16.xpose.msra.mxu0 %v4121
        %4140 = vmatmul.bf16.gmra.mxu0 %v4109
        %v4141 = vpop.f32.mrf.mxu0
        %v4142 = vadd.f32 0.0, %v4141
        %v4143 = vpop.f32.mrf.mxu0
        %v4144 = vadd.f32 0.0, %v4143
        %4145 = vmatmul.bf16.gmra.mxu0 %v4112
        %v4146 = vpop.f32.mrf.mxu0
        %v4147 = vadd.f32 0.0, %v4146
        %v4148 = vpop.f32.mrf.mxu0
        %v4149 = vadd.f32 0.0, %v4148
        %4150 = vmatmul.bf16.gmra.mxu0 %v4115
        %v4151 = vpop.f32.mrf.mxu0
        %v4152 = vadd.f32 0.0, %v4151
        %v4153 = vpop.f32.mrf.mxu0
        %v4154 = vadd.f32 0.0, %v4153
        %4155 = vmatmul.bf16.gmra.mxu0 %v4118
        %v4156 = vpop.f32.mrf.mxu0
        %v4157 = vadd.f32 0.0, %v4156
        %v4158 = vpop.f32.mrf.mxu0
        %v4159 = vadd.f32 0.0, %v4158
        %4160 = vdwg.mxu0
        %v4161 = vsel %vm1859, %v4142, -inf
        %4162 = vmax.xlane.f32.xlu0 %v4161
        %v4163 = vpop.xlane.xlu0 %4162
        %v4164 = vsel %vm1859, %v4144, -inf
        %4165 = vmax.xlane.f32.xlu0 %v4164
        %v4166 = vpop.xlane.xlu0 %4165
        %v4167 = vsel %vm1859, %v4147, -inf
        %4168 = vmax.xlane.f32.xlu0 %v4167
        %v4169 = vpop.xlane.xlu0 %4168
        %v4170 = vsel %vm1859, %v4149, -inf
        %4171 = vmax.xlane.f32.xlu0 %v4170
        %v4172 = vpop.xlane.xlu0 %4171
        %v4173 = vsel %vm1859, %v4152, -inf
        %4174 = vmax.xlane.f32.xlu0 %v4173
        %v4175 = vpop.xlane.xlu0 %4174
        %v4176 = vsel %vm1859, %v4154, -inf
        %4177 = vmax.xlane.f32.xlu0 %v4176
        %v4178 = vpop.xlane.xlu0 %4177
        %v4179 = vsel %vm1859, %v4157, -inf
        %4180 = vmax.xlane.f32.xlu0 %v4179
        %v4181 = vpop.xlane.xlu0 %4180
        %v4182 = vsel %vm1859, %v4159, -inf
        %4183 = vmax.xlane.f32.xlu0 %v4182
        %v4184 = vpop.xlane.xlu0 %4183
        %v4185 = vsub.f32 %v4142, %v4163
        %v4186 = vsub.f32 %v4144, %v4166
        %v4187 = vsub.f32 %v4147, %v4169
        %v4188 = vsub.f32 %v4149, %v4172
        %v4189 = vsub.f32 %v4152, %v4175
        %v4190 = vsub.f32 %v4154, %v4178
        %v4191 = vsub.f32 %v4157, %v4181
        %v4192 = vsub.f32 %v4159, %v4184
        %v4193 = vmul.f32 %v4185, 1.442695
        %v4194 = vpow.pop %v4193
        %v4195 = vmul.f32 %v4186, 1.442695
        %v4196 = vpow.pop %v4195
        %v4197 = vmul.f32 %v4187, 1.442695
        %v4198 = vpow.pop %v4197
        %v4199 = vmul.f32 %v4188, 1.442695
        %v4200 = vpow.pop %v4199
        %v4201 = vmul.f32 %v4189, 1.442695
        %v4202 = vpow.pop %v4201
        %v4203 = vmul.f32 %v4190, 1.442695
        %v4204 = vpow.pop %v4203
        %v4205 = vmul.f32 %v4191, 1.442695
        %v4206 = vpow.pop %v4205
        %v4207 = vmul.f32 %v4192, 1.442695
        %v4208 = vpow.pop %v4207
        %v4209 = vsel %vm1859, %v4194, 0.0
        %4210 = vadd.xlane.f32.xlu0 %v4209
        %v4211 = vpop.xlane.xlu0 %4210
        %v4212 = vsel %vm1859, %v4196, 0.0
        %4213 = vadd.xlane.f32.xlu0 %v4212
        %v4214 = vpop.xlane.xlu0 %4213
        %v4215 = vsel %vm1859, %v4198, 0.0
        %4216 = vadd.xlane.f32.xlu0 %v4215
        %v4217 = vpop.xlane.xlu0 %4216
        %v4218 = vsel %vm1859, %v4200, 0.0
        %4219 = vadd.xlane.f32.xlu0 %v4218
        %v4220 = vpop.xlane.xlu0 %4219
        %v4221 = vsel %vm1859, %v4202, 0.0
        %4222 = vadd.xlane.f32.xlu0 %v4221
        %v4223 = vpop.xlane.xlu0 %4222
        %v4224 = vsel %vm1859, %v4204, 0.0
        %4225 = vadd.xlane.f32.xlu0 %v4224
        %v4226 = vpop.xlane.xlu0 %4225
        %v4227 = vsel %vm1859, %v4206, 0.0
        %4228 = vadd.xlane.f32.xlu0 %v4227
        %v4229 = vpop.xlane.xlu0 %4228
        %v4230 = vsel %vm1859, %v4208, 0.0
        %4231 = vadd.xlane.f32.xlu0 %v4230
        %v4232 = vpop.xlane.xlu0 %4231
        %v4233 = vrcp.pop %v4211
        %v4234 = vrcp.pop %v4214
        %v4235 = vrcp.pop %v4217
        %v4236 = vrcp.pop %v4220
        %v4237 = vrcp.pop %v4223
        %v4238 = vrcp.pop %v4226
        %v4239 = vrcp.pop %v4229
        %v4240 = vrcp.pop %v4232
        %v4241 = vmul.f32 %v4194, %v4233
        %v4242 = vmul.f32 %v4196, %v4234
        %v4243 = vmul.f32 %v4198, %v4235
        %v4244 = vmul.f32 %v4200, %v4236
        %v4245 = vmul.f32 %v4202, %v4237
        %v4246 = vmul.f32 %v4204, %v4238
        %v4247 = vmul.f32 %v4206, %v4239
        %v4248 = vmul.f32 %v4208, %v4240
        %v4249 = vpack.c.bf16 %v4242, %v4241
        %v4250 = vpack.c.bf16 %v4244, %v4243
        %v4251 = vpack.c.bf16 %v4246, %v4245
        %v4252 = vpack.c.bf16 %v4248, %v4247
        %4253 = vrot.lane.b32.xlu0 %v4092, 64
        %v4254 = vpop.permute.xlu0 %4253
        %4255 = vrot.lane.b32.xlu0 %v4093, 64
        %v4256 = vpop.permute.xlu0 %4255
        %4257 = vrot.lane.b32.xlu0 %v4094, 64
        %v4258 = vpop.permute.xlu0 %4257
        %4259 = vrot.lane.b32.xlu0 %v4095, 64
        %v4260 = vpop.permute.xlu0 %4259
        %v4266 = vsel %vm1859, %v4249, 0
        %v4269 = vsel %vm1859, %v4250, 0
        %v4272 = vsel %vm1859, %v4251, 0
        %v4275 = vsel %vm1859, %v4252, 0
        %4277 = vmatpush.bf16.msra.mxu0 0
        %4278 = vmatpush.bf16.msra.mxu0 0
        %4279 = vmatpush.bf16.msra.mxu0 0
        %4280 = vmatpush.bf16.msra.mxu0 0
        %4281 = vmatpush.bf16.msra.mxu0 %v4260
        %4282 = vmatpush.bf16.msra.mxu0 %v4258
        %4283 = vmatpush.bf16.msra.mxu0 %v4256
        %4284 = vmatpush.bf16.msra.mxu0 %v4254
        %4285 = vmatmul.bf16.gmra.mxu0 %v4266
        %v4286 = vpop.f32.mrf.mxu0
        %v4287 = vadd.f32 0.0, %v4286
        %v4288 = vpop.f32.mrf.mxu0
        %v4289 = vadd.f32 0.0, %v4288
        %4290 = vmatmul.bf16.gmra.mxu0 %v4269
        %v4291 = vpop.f32.mrf.mxu0
        %v4292 = vadd.f32 0.0, %v4291
        %v4293 = vpop.f32.mrf.mxu0
        %v4294 = vadd.f32 0.0, %v4293
        %4295 = vmatmul.bf16.gmra.mxu0 %v4272
        %v4296 = vpop.f32.mrf.mxu0
        %v4297 = vadd.f32 0.0, %v4296
        %v4298 = vpop.f32.mrf.mxu0
        %v4299 = vadd.f32 0.0, %v4298
        %4300 = vmatmul.bf16.gmra.mxu0 %v4275
        %v4301 = vpop.f32.mrf.mxu0
        %v4302 = vadd.f32 0.0, %v4301
        %v4303 = vpop.f32.mrf.mxu0
        %v4304 = vadd.f32 0.0, %v4303
        %4305 = vdwg.mxu0
        %v4306 = vpack.c.bf16 %v4063, %v4061
        %v4307 = vpack.c.bf16 %v4068, %v4066
        %v4308 = vpack.c.bf16 %v4073, %v4071
        %v4309 = vpack.c.bf16 %v4078, %v4076
        %4314 = vrot.lane.b32.xlu0 %v4088, 32
        %v4315 = vpop.permute.xlu0 %4314
        %4316 = vrot.lane.b32.xlu0 %v4089, 32
        %v4317 = vpop.permute.xlu0 %4316
        %4318 = vrot.lane.b32.xlu0 %v4090, 32
        %v4319 = vpop.permute.xlu0 %4318
        %4320 = vrot.lane.b32.xlu0 %v4091, 32
        %v4321 = vpop.permute.xlu0 %4320
        %v4323 = vsel %vm659, %v4315, 0
        %v4326 = vsel %vm659, %v4317, 0
        %v4329 = vsel %vm659, %v4319, 0
        %v4332 = vsel %vm659, %v4321, 0
        %v4335 = vsel %vm659, %v4306, 0
        %v4338 = vsel %vm659, %v4307, 0
        %v4341 = vsel %vm659, %v4308, 0
        %v4344 = vsel %vm659, %v4309, 0
        %4346 = vmatpush.bf16.xpose.msra.mxu0 0
        %4347 = vmatpush.bf16.xpose.msra.mxu0 0
        %4348 = vmatpush.bf16.xpose.msra.mxu0 0
        %4349 = vmatpush.bf16.xpose.msra.mxu0 0
        %4350 = vmatpush.bf16.xpose.msra.mxu0 %v4344
        %4351 = vmatpush.bf16.xpose.msra.mxu0 %v4341
        %4352 = vmatpush.bf16.xpose.msra.mxu0 %v4338
        %4353 = vmatpush.bf16.xpose.msra.mxu0 %v4335
        %4354 = vmatmul.bf16.gmra.mxu0 %v4323
        %v4355 = vpop.f32.mrf.mxu0
        %v4356 = vadd.f32 0.0, %v4355
        %v4357 = vpop.f32.mrf.mxu0
        %v4358 = vadd.f32 0.0, %v4357
        %4359 = vmatmul.bf16.gmra.mxu0 %v4326
        %v4360 = vpop.f32.mrf.mxu0
        %v4361 = vadd.f32 0.0, %v4360
        %v4362 = vpop.f32.mrf.mxu0
        %v4363 = vadd.f32 0.0, %v4362
        %4364 = vmatmul.bf16.gmra.mxu0 %v4329
        %v4365 = vpop.f32.mrf.mxu0
        %v4366 = vadd.f32 0.0, %v4365
        %v4367 = vpop.f32.mrf.mxu0
        %v4368 = vadd.f32 0.0, %v4367
        %4369 = vmatmul.bf16.gmra.mxu0 %v4332
        %v4370 = vpop.f32.mrf.mxu0
        %v4371 = vadd.f32 0.0, %v4370
        %v4372 = vpop.f32.mrf.mxu0
        %v4373 = vadd.f32 0.0, %v4372
        %4374 = vdwg.mxu0
        %v4375 = vsel %vm1859, %v4356, -inf
        %4376 = vmax.xlane.f32.xlu0 %v4375
        %v4377 = vpop.xlane.xlu0 %4376
        %v4378 = vsel %vm1859, %v4358, -inf
        %4379 = vmax.xlane.f32.xlu0 %v4378
        %v4380 = vpop.xlane.xlu0 %4379
        %v4381 = vsel %vm1859, %v4361, -inf
        %4382 = vmax.xlane.f32.xlu0 %v4381
        %v4383 = vpop.xlane.xlu0 %4382
        %v4384 = vsel %vm1859, %v4363, -inf
        %4385 = vmax.xlane.f32.xlu0 %v4384
        %v4386 = vpop.xlane.xlu0 %4385
        %v4387 = vsel %vm1859, %v4366, -inf
        %4388 = vmax.xlane.f32.xlu0 %v4387
        %v4389 = vpop.xlane.xlu0 %4388
        %v4390 = vsel %vm1859, %v4368, -inf
        %4391 = vmax.xlane.f32.xlu0 %v4390
        %v4392 = vpop.xlane.xlu0 %4391
        %v4393 = vsel %vm1859, %v4371, -inf
        %4394 = vmax.xlane.f32.xlu0 %v4393
        %v4395 = vpop.xlane.xlu0 %4394
        %v4396 = vsel %vm1859, %v4373, -inf
        %4397 = vmax.xlane.f32.xlu0 %v4396
        %v4398 = vpop.xlane.xlu0 %4397
        %v4399 = vsub.f32 %v4356, %v4377
        %v4400 = vsub.f32 %v4358, %v4380
        %v4401 = vsub.f32 %v4361, %v4383
        %v4402 = vsub.f32 %v4363, %v4386
        %v4403 = vsub.f32 %v4366, %v4389
        %v4404 = vsub.f32 %v4368, %v4392
        %v4405 = vsub.f32 %v4371, %v4395
        %v4406 = vsub.f32 %v4373, %v4398
        %v4407 = vmul.f32 %v4399, 1.442695
        %v4408 = vpow.pop %v4407
        %v4409 = vmul.f32 %v4400, 1.442695
        %v4410 = vpow.pop %v4409
        %v4411 = vmul.f32 %v4401, 1.442695
        %v4412 = vpow.pop %v4411
        %v4413 = vmul.f32 %v4402, 1.442695
        %v4414 = vpow.pop %v4413
        %v4415 = vmul.f32 %v4403, 1.442695
        %v4416 = vpow.pop %v4415
        %v4417 = vmul.f32 %v4404, 1.442695
        %v4418 = vpow.pop %v4417
        %v4419 = vmul.f32 %v4405, 1.442695
        %v4420 = vpow.pop %v4419
        %v4421 = vmul.f32 %v4406, 1.442695
        %v4422 = vpow.pop %v4421
        %v4423 = vsel %vm1859, %v4408, 0.0
        %4424 = vadd.xlane.f32.xlu0 %v4423
        %v4425 = vpop.xlane.xlu0 %4424
        %v4426 = vsel %vm1859, %v4410, 0.0
        %4427 = vadd.xlane.f32.xlu0 %v4426
        %v4428 = vpop.xlane.xlu0 %4427
        %v4429 = vsel %vm1859, %v4412, 0.0
        %4430 = vadd.xlane.f32.xlu0 %v4429
        %v4431 = vpop.xlane.xlu0 %4430
        %v4432 = vsel %vm1859, %v4414, 0.0
        %4433 = vadd.xlane.f32.xlu0 %v4432
        %v4434 = vpop.xlane.xlu0 %4433
        %v4435 = vsel %vm1859, %v4416, 0.0
        %4436 = vadd.xlane.f32.xlu0 %v4435
        %v4437 = vpop.xlane.xlu0 %4436
        %v4438 = vsel %vm1859, %v4418, 0.0
        %4439 = vadd.xlane.f32.xlu0 %v4438
        %v4440 = vpop.xlane.xlu0 %4439
        %v4441 = vsel %vm1859, %v4420, 0.0
        %4442 = vadd.xlane.f32.xlu0 %v4441
        %v4443 = vpop.xlane.xlu0 %4442
        %v4444 = vsel %vm1859, %v4422, 0.0
        %4445 = vadd.xlane.f32.xlu0 %v4444
        %v4446 = vpop.xlane.xlu0 %4445
        %v4447 = vrcp.pop %v4425
        %v4448 = vrcp.pop %v4428
        %v4449 = vrcp.pop %v4431
        %v4450 = vrcp.pop %v4434
        %v4451 = vrcp.pop %v4437
        %v4452 = vrcp.pop %v4440
        %v4453 = vrcp.pop %v4443
        %v4454 = vrcp.pop %v4446
        %v4455 = vmul.f32 %v4408, %v4447
        %v4456 = vmul.f32 %v4410, %v4448
        %v4457 = vmul.f32 %v4412, %v4449
        %v4458 = vmul.f32 %v4414, %v4450
        %v4459 = vmul.f32 %v4416, %v4451
        %v4460 = vmul.f32 %v4418, %v4452
        %v4461 = vmul.f32 %v4420, %v4453
        %v4462 = vmul.f32 %v4422, %v4454
        %v4463 = vpack.c.bf16 %v4456, %v4455
        %v4464 = vpack.c.bf16 %v4458, %v4457
        %v4465 = vpack.c.bf16 %v4460, %v4459
        %v4466 = vpack.c.bf16 %v4462, %v4461
        %4471 = vrot.lane.b32.xlu0 %v4306, 96
        %v4472 = vpop.permute.xlu0 %4471
        %4473 = vrot.lane.b32.xlu0 %v4307, 96
        %v4474 = vpop.permute.xlu0 %4473
        %4475 = vrot.lane.b32.xlu0 %v4308, 96
        %v4476 = vpop.permute.xlu0 %4475
        %4477 = vrot.lane.b32.xlu0 %v4309, 96
        %v4478 = vpop.permute.xlu0 %4477
        %v4484 = vsel %vm1859, %v4463, 0
        %v4487 = vsel %vm1859, %v4464, 0
        %v4490 = vsel %vm1859, %v4465, 0
        %v4493 = vsel %vm1859, %v4466, 0
        %4495 = vmatpush.bf16.msra.mxu0 0
        %4496 = vmatpush.bf16.msra.mxu0 0
        %4497 = vmatpush.bf16.msra.mxu0 0
        %4498 = vmatpush.bf16.msra.mxu0 0
        %4499 = vmatpush.bf16.msra.mxu0 %v4478
        %4500 = vmatpush.bf16.msra.mxu0 %v4476
        %4501 = vmatpush.bf16.msra.mxu0 %v4474
        %4502 = vmatpush.bf16.msra.mxu0 %v4472
        %4503 = vmatmul.bf16.gmra.mxu0 %v4484
        %v4504 = vpop.f32.mrf.mxu0
        %v4505 = vadd.f32 0.0, %v4504
        %v4506 = vpop.f32.mrf.mxu0
        %v4507 = vadd.f32 0.0, %v4506
        %4508 = vmatmul.bf16.gmra.mxu0 %v4487
        %v4509 = vpop.f32.mrf.mxu0
        %v4510 = vadd.f32 0.0, %v4509
        %v4511 = vpop.f32.mrf.mxu0
        %v4512 = vadd.f32 0.0, %v4511
        %4513 = vmatmul.bf16.gmra.mxu0 %v4490
        %v4514 = vpop.f32.mrf.mxu0
        %v4515 = vadd.f32 0.0, %v4514
        %v4516 = vpop.f32.mrf.mxu0
        %v4517 = vadd.f32 0.0, %v4516
        %4518 = vmatmul.bf16.gmra.mxu0 %v4493
        %v4519 = vpop.f32.mrf.mxu0
        %v4520 = vadd.f32 0.0, %v4519
        %v4521 = vpop.f32.mrf.mxu0
        %v4522 = vadd.f32 0.0, %v4521
        %4523 = vdwg.mxu0
        %4532 = vrot.lane.b32.xlu0 %v4505, 32
        %v4533 = vpop.permute.xlu0 %4532
        %4534 = vrot.lane.b32.xlu0 %v4507, 32
        %v4535 = vpop.permute.xlu0 %4534
        %4536 = vrot.lane.b32.xlu0 %v4510, 32
        %v4537 = vpop.permute.xlu0 %4536
        %4538 = vrot.lane.b32.xlu0 %v4512, 32
        %v4539 = vpop.permute.xlu0 %4538
        %4540 = vrot.lane.b32.xlu0 %v4515, 32
        %v4541 = vpop.permute.xlu0 %4540
        %4542 = vrot.lane.b32.xlu0 %v4517, 32
        %v4543 = vpop.permute.xlu0 %4542
        %4544 = vrot.lane.b32.xlu0 %v4520, 32
        %v4545 = vpop.permute.xlu0 %4544
        %4546 = vrot.lane.b32.xlu0 %v4522, 32
        %v4547 = vpop.permute.xlu0 %4546
        %v4556 = vsel %vm659, %v4287, %v4533
        %v4557 = vsel %vm659, %v4289, %v4535
        %v4558 = vsel %vm659, %v4292, %v4537
        %v4559 = vsel %vm659, %v4294, %v4539
        %v4560 = vsel %vm659, %v4297, %v4541
        %v4561 = vsel %vm659, %v4299, %v4543
        %v4562 = vsel %vm659, %v4302, %v4545
        %v4563 = vsel %vm659, %v4304, %v4547
        %v4564 = vpack.c.bf16 %v4557, %v4556
        %v4565 = vpack.c.bf16 %v4559, %v4558
        %v4566 = vpack.c.bf16 %v4561, %v4560
        %v4567 = vpack.c.bf16 %v4563, %v4562
        %v4568 = vld [vmem:[%s18] sm:$0xf]
        %v4569 = vld [vmem:[%s18 + $0x4] sm:$0xf]
        %v4570 = vld [vmem:[%s18 + $0x8] sm:$0xf]
        %v4571 = vld [vmem:[%s18 + $0xc] sm:$0xf]
        %v4572 = vld [vmem:[%s18 + $0x10] sm:$0xf]
        %v4573 = vld [vmem:[%s18 + $0x14] sm:$0xf]
        %v4574 = vld [vmem:[%s18 + $0x18] sm:$0xf]
        %v4575 = vld [vmem:[%s18 + $0x1c] sm:$0xf]
        %v4576 = vld [vmem:[%s19] sm:$0x1]
        %v4578 = vperm.slane %v4576, 0
        %v4588 = vunpack.c.l.b16 %v4568
        %v4589 = vunpack.c.l.b16 %v4569
        %v4590 = vunpack.c.l.b16 %v4570
        %v4591 = vunpack.c.l.b16 %v4571
        %v4592 = vunpack.c.l.b16 %v4572
        %v4593 = vunpack.c.l.b16 %v4573
        %v4594 = vunpack.c.l.b16 %v4574
        %v4595 = vunpack.c.l.b16 %v4575
        %v4596 = vpack.c.b16 %v4589, %v4588
        %v4597 = vpack.c.b16 %v4591, %v4590
        %v4598 = vpack.c.b16 %v4593, %v4592
        %v4599 = vpack.c.b16 %v4595, %v4594
        %v4605 = vsel %vm1859, %v4564, 0
        %v4608 = vsel %vm1859, %v4565, 0
        %v4611 = vsel %vm1859, %v4566, 0
        %v4614 = vsel %vm1859, %v4567, 0
        %4616 = vmatpush.bf16.msra.mxu0 0
        %4617 = vmatpush.bf16.msra.mxu0 0
        %4618 = vmatpush.bf16.msra.mxu0 0
        %4619 = vmatpush.bf16.msra.mxu0 0
        %4620 = vmatpush.bf16.msra.mxu0 %v4599
        %4621 = vmatpush.bf16.msra.mxu0 %v4598
        %4622 = vmatpush.bf16.msra.mxu0 %v4597
        %4623 = vmatpush.bf16.msra.mxu0 %v4596
        %4624 = vmatmul.bf16.gmra.mxu0 %v4605
        %v4625 = vpop.f32.mrf.mxu0
        %v4626 = vadd.f32 %v4578, %v4625
        %v4627 = vpop.f32.mrf.mxu0
        %v4628 = vadd.f32 %v4578, %v4627
        %4629 = vmatmul.bf16.gmra.mxu0 %v4608
        %v4630 = vpop.f32.mrf.mxu0
        %v4631 = vadd.f32 %v4578, %v4630
        %v4632 = vpop.f32.mrf.mxu0
        %v4633 = vadd.f32 %v4578, %v4632
        %4634 = vmatmul.bf16.gmra.mxu0 %v4611
        %v4635 = vpop.f32.mrf.mxu0
        %v4636 = vadd.f32 %v4578, %v4635
        %v4637 = vpop.f32.mrf.mxu0
        %v4638 = vadd.f32 %v4578, %v4637
        %4639 = vmatmul.bf16.gmra.mxu0 %v4614
        %v4640 = vpop.f32.mrf.mxu0
        %v4641 = vadd.f32 %v4578, %v4640
        %v4642 = vpop.f32.mrf.mxu0
        %v4643 = vadd.f32 %v4578, %v4642
        %4644 = vdwg.mxu0
        %v4645 = vadd.f32 %v4626, %v3803
        %v4646 = vadd.f32 %v4628, %v3804
        %v4647 = vadd.f32 %v4631, %v3805
        %v4648 = vadd.f32 %v4633, %v3806
        %v4649 = vadd.f32 %v4636, %v3807
        %v4650 = vadd.f32 %v4638, %v3808
        %v4651 = vadd.f32 %v4641, %v3809
        %v4652 = vadd.f32 %v4643, %v3810
        %v4653 = vmul.f32 %v4645, 0.70710677
        %v4654 = vmul.f32 %v4646, 0.70710677
        %v4655 = vmul.f32 %v4647, 0.70710677
        %v4656 = vmul.f32 %v4648, 0.70710677
        %v4657 = vmul.f32 %v4649, 0.70710677
        %v4658 = vmul.f32 %v4650, 0.70710677
        %v4659 = vmul.f32 %v4651, 0.70710677
        %v4660 = vmul.f32 %v4652, 0.70710677
        %4661 = vst.msk [vmem:[%s633] sm:$0xff] %vm1859, %v4653
        %4662 = vst.msk [vmem:[%s633 + $0x8] sm:$0xff] %vm1859, %v4654
        %4663 = vst.msk [vmem:[%s633 + $0x10] sm:$0xff] %vm1859, %v4655
        %4664 = vst.msk [vmem:[%s633 + $0x18] sm:$0xff] %vm1859, %v4656
        %4665 = vst.msk [vmem:[%s633 + $0x20] sm:$0xff] %vm1859, %v4657
        %4666 = vst.msk [vmem:[%s633 + $0x28] sm:$0xff] %vm1859, %v4658
        %4667 = vst.msk [vmem:[%s633 + $0x30] sm:$0xff] %vm1859, %v4659
        %4668 = vst.msk [vmem:[%s633 + $0x38] sm:$0xff] %vm1859, %v4660
        %s4669 = sand.u32 %s472, 1
        %s4670 = scalar_lea.sflag [#allocation5], %s4669
        %s4671 = sand.u32 %s472, 1
        %s4672 = smul.addr %s4671, 64
        %s4673 = scalar_lea.vmem [#allocation4], %s4672
        // Predicated region
        $region101: #{res_block_with_attention.1} parent=99 // pred_check
          %p4674 = pneg %p482
        $region102: #{res_block_with_attention.1} parent=99 // pred_check_branch
          %4676 = sbr.rel (%p4674) target = $region104
        $region103: #{res_block_with_attention.1} parent=99 // pred_region
          %4678 = vsyncadd %s4670, 0
          %s4679 = smul.addr %s34, 8
          %s4680 = smul.addr %s4679, 8
          %s4681 = scalar_lea.hbm %s20, %s4680
          %s4682 = sshll.u32 %s4673, 4
          %s4683 = int_to_ptr.vmem [resolvable:$true] %s4682
          %s4684 = sshll.u32 %s4681, 4
          %s4685 = int_to_ptr.hbm [resolvable:$true] %s4684
          %4690 = dma.vmem_to_hbm [thread:$0]  %s4683, 1024, %s4685, %s4670, 128, 128, 8
        $region104: #{res_block_with_attention.1} parent=99 // pred_fallthru
          _
      $region100: #{res_block_with_attention.1} parent=5 // pred_fallthru
        _
      %p4691 = scmp.le.s32.totalorder 2, %s29
      // Predicated region
      $region105: #{res_block_with_attention.1} parent=5 // pred_check
        %p4692 = pneg %p4691
      $region106: #{res_block_with_attention.1} parent=5 // pred_check_branch
        %4694 = sbr.rel (%p4692) target = $region108
      $region107: #{res_block_with_attention.1} parent=5 // pred_region
        %s4695 = ssub.s32 %s29, 2
        // Predicated region
        $region109: #{res_block_with_attention.1} parent=107 // pred_check
          %p4696 = pneg %p488
        $region110: #{res_block_with_attention.1} parent=107 // pred_check_branch
          %4698 = sbr.rel (%p4696) target = $region112
        $region111: #{res_block_with_attention.1} parent=107 // pred_region
          %s4699 = sand.u32 %s473, 1
          %s4700 = scalar_lea.sflag [#allocation5], %s4699
          %s4701 = sand.u32 %s473, 1
          %s4702 = smul.addr %s4701, 64
          %s4703 = scalar_lea.vmem [#allocation4], %s4702
          %4705 = dma.done %s4700, 1024
        $region112: #{res_block_with_attention.1} parent=107 // pred_fallthru
          _
      $region108: #{res_block_with_attention.1} parent=5 // pred_fallthru
        _
    $region6: #{res_block_with_attention.1} parent=1 // loop_footer
      %s33 = sadd.s32 1, %s29
    $region7: #{res_block_with_attention.1} parent=1 // loop_footer_branch
      %28 = sbr.rel target = $region3
    $region8: #{res_block_with_attention.1} parent=1 // loop_exit
      _
    %4706 = vsyncpa [#allocation5], 1
    %s4707 = scalar_lea.sflag [#allocation5], 1
    %4708 = vsyncpa %s4707, 1

</llo_original>
